<compile_context>
chip_gen: v5e
topology: v5e:2x2
jax: 0.10.0
libtpu: 0.0.40
codegen_flags: <defaults>
</compile_context>

<pallas_src>
import jax
import jax.numpy as jnp
from jax.experimental import pallas as pl
from jax.experimental.pallas import tpu as pltpu  # noqa: F401  (no TPU-specific params needed at this size)

BN_EPS = 1e-5  # PyTorch BatchNorm2d default


# --------------------------------------------------------------------------
# Pallas kernels
# --------------------------------------------------------------------------
def _matmul_kernel(x_ref, w_ref, o_ref):
    """o = x @ w  (bf16 inputs, f32 accumulation)."""
    o_ref[...] = jnp.dot(x_ref[...], w_ref[...], preferred_element_type=jnp.float32)


def _bn_relu_matmul_kernel(a_ref, g_ref, b_ref, w_ref, o_ref):
    """o = relu(BN_train(a) * gamma + beta) @ w.

    a: (M, Cin) raw (pre-BN) activation rows of the previous layer, all rows
    resident in VMEM so batch statistics are exact in a single pass.
    w: (Cin, k*k*Cout) bf16 scatter-form ConvTranspose weight (lane-dense).
    """
    a = a_ref[...]                                       # f32 (M, Cin)
    mean = jnp.mean(a, axis=0, keepdims=True)
    xc = a - mean
    var = jnp.mean(xc * xc, axis=0, keepdims=True)       # biased variance
    h = jnp.maximum(xc * jax.lax.rsqrt(var + BN_EPS) * g_ref[...] + b_ref[...], 0.0)
    o_ref[...] = jnp.dot(h.astype(jnp.bfloat16), w_ref[...],
                         preferred_element_type=jnp.float32)


def _tanh_kernel(x_ref, o_ref):
    o_ref[...] = jnp.tanh(x_ref[...])


# --------------------------------------------------------------------------
# Thin wrappers (single grid step: whole operands in VMEM, no tiling)
# --------------------------------------------------------------------------
def matmul(x_bf16, w_bf16):
    M, K = x_bf16.shape
    _, C = w_bf16.shape
    return pl.pallas_call(
        _matmul_kernel,
        out_shape=jax.ShapeDtypeStruct((M, C), jnp.float32),
        cost_estimate=pl.CostEstimate(flops=2 * M * K * C, transcendentals=0,
                                      bytes_accessed=2 * (M * K + K * C) + 4 * M * C),
    )(x_bf16, w_bf16)


def bn_relu_matmul(a_f32, gamma, beta, w_bf16):
    M, Cin = a_f32.shape
    _, C = w_bf16.shape
    return pl.pallas_call(
        _bn_relu_matmul_kernel,
        out_shape=jax.ShapeDtypeStruct((M, C), jnp.float32),
        cost_estimate=pl.CostEstimate(flops=2 * M * Cin * C + 8 * M * Cin,
                                      transcendentals=Cin,
                                      bytes_accessed=4 * M * Cin + 2 * Cin * C + 4 * M * C),
    )(a_f32, gamma.reshape(1, Cin), beta.reshape(1, Cin), w_bf16)


def tanh_pallas(x2d):
    return pl.pallas_call(
        _tanh_kernel,
        out_shape=jax.ShapeDtypeStruct(x2d.shape, jnp.float32),
        cost_estimate=pl.CostEstimate(flops=0, transcendentals=x2d.size,
                                      bytes_accessed=8 * x2d.size),
    )(x2d)


# --------------------------------------------------------------------------
# ConvTranspose2d scatter-form glue (pure layout + tiny overlap-add in XLA)
# --------------------------------------------------------------------------
def convt_weight_to_matrix(w):
    """PyTorch ConvTranspose2d weight (Cin, Cout, k, k) -> bf16 (Cin, k*k*Cout).

    Column order is (kh, kw, cout); no spatial flip is needed in the scatter
    formulation out[.., ih*s - p + kh, iw*s - p + kw, c] += x[.., ih, iw, :] @ W[:, c, kh, kw].
    """
    Cin, Cout, k, _ = w.shape
    return jnp.transpose(w, (0, 2, 3, 1)).reshape(Cin, k * k * Cout).astype(jnp.bfloat16)


def col2im_s2k4p1(y, N, H, W, C):
    """Overlap-add for ConvTranspose2d(kernel=4, stride=2, padding=1).

    y: (N*H*W, 16*C) with rows in (n, h, w) order and columns (kh, kw, c).
    Returns raw conv output (N, 2H, 2W, C).
    """
    y6 = y.reshape(N, H, W, 4, 4, C)
    # Rows: even output row 2m <- (i=m, kh=1) + (i=m-1, kh=3);
    #       odd  output row 2m+1 <- (i=m, kh=2) + (i=m+1, kh=0).
    ev = y6[:, :, :, 1] + jnp.pad(y6[:, :-1, :, 3], ((0, 0), (1, 0), (0, 0), (0, 0), (0, 0)))
    od = y6[:, :, :, 2] + jnp.pad(y6[:, 1:, :, 0], ((0, 0), (0, 1), (0, 0), (0, 0), (0, 0)))
    r = jnp.stack([ev, od], axis=2).reshape(N, 2 * H, W, 4, C)
    # Columns: same pattern along the width / kw axis.
    ev = r[:, :, :, 1] + jnp.pad(r[:, :, :-1, 3], ((0, 0), (0, 0), (1, 0), (0, 0)))
    od = r[:, :, :, 2] + jnp.pad(r[:, :, 1:, 0], ((0, 0), (0, 0), (0, 1), (0, 0)))
    return jnp.stack([ev, od], axis=3).reshape(N, 2 * H, 2 * W, C)


# --------------------------------------------------------------------------
# Generator forward (image_size=64, conditional=False, bias=False)
# --------------------------------------------------------------------------
def init_generator_params(key, nz, ngf, nc):
    """Synthetic parameters matching the module's layer shapes (bias=False)."""
    cins = [nz * nc, ngf * 8, ngf * 4, ngf * 2, ngf]
    # NOTE: the PyTorch module hardcodes out_channels=1 on the last layer.
    couts = [ngf * 8, ngf * 4, ngf * 2, ngf, 1]
    weights, gammas, betas = [], [], []
    for i, (ci, co) in enumerate(zip(cins, couts)):
        key, sub = jax.random.split(key)
        weights.append(0.02 * jax.random.normal(sub, (ci, co, 4, 4), jnp.float32))
        if i < 4:  # BatchNorm2d default init
            gammas.append(jnp.ones((co,), jnp.float32))
            betas.append(jnp.zeros((co,), jnp.float32))
    return {"w": weights, "gamma": gammas, "beta": betas}


def generator_forward(params, x_nchw):
    """x: (N, nz*nc, 1, 1) NCHW -> (N, 1, 64, 64) NCHW."""
    N = x_nchw.shape[0]
    wmats = [convt_weight_to_matrix(w) for w in params["w"]]
    couts = [w.shape[1] for w in params["w"]]

    # Layer 1: ConvTranspose2d(nz*nc, ngf*8, 4, 1, 0) on a 1x1 input -> 4x4.
    # For a 1x1 input the scatter matmul output IS the (kh, kw, cout) image.
    x0 = x_nchw.reshape(N, -1).astype(jnp.bfloat16)
    raw = matmul(x0, wmats[0])                         # (N, 16*C1), pre-BN conv1 output
    H = W = 4
    a = raw.reshape(N * H * W, couts[0])               # NHWC rows (pure reshape)

    # Layers 2..5: fused BN(prev layer, batch stats) + ReLU + ConvT matmul,
    # then the cheap col2im overlap-add in XLA.
    for li in range(1, 5):
        y = bn_relu_matmul(a, params["gamma"][li - 1], params["beta"][li - 1], wmats[li])
        img = col2im_s2k4p1(y, N, H, W, couts[li])     # raw conv output (N, 2H, 2W, Cout)
        H, W = 2 * H, 2 * W
        a = img.reshape(N * H * W, couts[li])

    # Final Tanh on lane-dense (., 128) blocks (64*64 is a multiple of 128).
    out = tanh_pallas(a.reshape(-1, 128)).reshape(N, H, W, couts[-1])
    return jnp.transpose(out, (0, 3, 1, 2))            # back to NCHW

    # TODO(synk): conditional / embed_nn branch (conditional=False here) and the
    # image_size=128 first_layers variant are not implemented.


# --------------------------------------------------------------------------
# Pure-XLA reference (independent gather/dilate lowering) for validation.
# --------------------------------------------------------------------------
def _reference_forward(params, x_nchw):
    rd = lambda t: t.astype(jnp.bfloat16).astype(jnp.float32)  # match kernel bf16 rounding
    x = jnp.transpose(x_nchw, (0, 2, 3, 1)).astype(jnp.float32)  # NHWC
    cfg = [(1, 0), (2, 1), (2, 1), (2, 1), (2, 1)]               # (stride, pad)
    for li, (s, p) in enumerate(cfg):
        w = params["w"][li]                                       # (Cin, Cout, 4, 4)
        wf = jnp.transpose(w[:, :, ::-1, ::-1], (2, 3, 0, 1))     # flipped, HWIO
        x = jax.lax.conv_general_dilated(
            rd(x), rd(wf), window_strides=(1, 1),
            padding=[(3 - p, 3 - p), (3 - p, 3 - p)],
            lhs_dilation=(s, s),
            dimension_numbers=("NHWC", "HWIO", "NHWC"))
        if li < 4:
            mean = jnp.mean(x, axis=(0, 1, 2), keepdims=True)
            var = jnp.mean((x - mean) ** 2, axis=(0, 1, 2), keepdims=True)
            x = (x - mean) * jax.lax.rsqrt(var + BN_EPS)
            x = x * params["gamma"][li].reshape(1, 1, 1, -1) + params["beta"][li].reshape(1, 1, 1, -1)
            x = jnp.maximum(x, 0.0)
        else:
            x = jnp.tanh(x)
    return jnp.transpose(x, (0, 3, 1, 2))


# --------------------------------------------------------------------------
if __name__ == "__main__":
    # Module hyperparameters (small, consistent with the image_size=64 path).
    nz, ngf, nc, batch, image_size = 16, 8, 1, 2, 64
    # conditional=False -> forward(x) == main(x); embed_nn unused.

    key = jax.random.PRNGKey(0)
    pkey, xkey = jax.random.split(key)
    params = init_generator_params(pkey, nz, ngf, nc)
    x = jax.random.normal(xkey, (batch, nz * nc, 1, 1), jnp.float32)

    fwd = jax.jit(generator_forward)
    out = jax.block_until_ready(fwd(params, x))

    assert out.shape == (batch, 1, image_size, image_size), out.shape
    assert out.dtype == jnp.float32
    assert bool(jnp.all(jnp.isfinite(out)))
    assert bool(jnp.all(jnp.abs(out) <= 1.0 + 1e-6))  # tanh range

    ref = jax.block_until_ready(jax.jit(_reference_forward)(params, x))
    max_err = float(jnp.max(jnp.abs(out - ref)))
    assert max_err < 2e-2, f"max |pallas - reference| = {max_err}"

    print("KERNEL_OK")
</pallas_src>

<mosaic_0001>
module attributes {stable_mosaic.version = 11 : i64} {
  func.func @_matmul_kernel(%arg0: memref<2x16xbf16, #tpu.memory_space<vmem>>, %arg1: memref<16x1024xbf16, #tpu.memory_space<vmem>>, %arg2: memref<2x1024xf32, #tpu.memory_space<vmem>>) attributes {dimension_semantics = [], scalar_prefetch = 0 : i64, scratch_operands = 0 : i64, tpu.core_type = #tpu.core_type<tc>} {
    %c0 = arith.constant 0 : index
    %c0_0 = arith.constant 0 : index
    %0 = vector.load %arg0[%c0, %c0_0] : memref<2x16xbf16, #tpu.memory_space<vmem>>, vector<2x16xbf16>
    %c0_1 = arith.constant 0 : index
    %c0_2 = arith.constant 0 : index
    %1 = vector.load %arg1[%c0_1, %c0_2] : memref<16x1024xbf16, #tpu.memory_space<vmem>>, vector<16x1024xbf16>
    %cst = arith.constant dense<0.000000e+00> : vector<2x1024xf32>
    %2 = tpu.matmul %0, %1, %cst {dimension_numbers = #tpu.dot_dimension_numbers<[1], [0], [0], [1], [0, 0, 1, 1], [], []>} : vector<2x16xbf16>, vector<16x1024xbf16>, vector<2x1024xf32> -> vector<2x1024xf32>
    %c0_3 = arith.constant 0 : index
    %c0_4 = arith.constant 0 : index
    %3 = vector.load %arg2[%c0_3, %c0_4] : memref<2x1024xf32, #tpu.memory_space<vmem>>, vector<2x1024xf32>
    tpu.vector_store %arg2[%c0_3, %c0_4], %2 {strides = array<i32>} : memref<2x1024xf32, #tpu.memory_space<vmem>>, vector<2x1024xf32>,
    return
  }
}

module attributes {stable_mosaic.version = 11 : i64} {
  func.func @_bn_relu_matmul_kernel(%arg0: memref<32x64xf32, #tpu.memory_space<vmem>>, %arg1: memref<1x64xf32, #tpu.memory_space<vmem>>, %arg2: memref<1x64xf32, #tpu.memory_space<vmem>>, %arg3: memref<64x512xbf16, #tpu.memory_space<vmem>>, %arg4: memref<32x512xf32, #tpu.memory_space<vmem>>) attributes {dimension_semantics = [], scalar_prefetch = 0 : i64, scratch_operands = 0 : i64, tpu.core_type = #tpu.core_type<tc>} {
    %c0 = arith.constant 0 : index
    %c0_0 = arith.constant 0 : index
    %0 = vector.load %arg0[%c0, %c0_0] : memref<32x64xf32, #tpu.memory_space<vmem>>, vector<32x64xf32>
    %cst = arith.constant dense<0.000000e+00> : vector<64xf32>
    %1 = vector.multi_reduction <add>, %0, %cst [0] : vector<32x64xf32> to vector<64xf32>
    %2 = vector.shape_cast %1 : vector<64xf32> to vector<1x64xf32>
    %cst_1 = arith.constant 3.200000e+01 : f32
    %3 = vector.broadcast %cst_1 : f32 to vector<1x64xf32>
    %4 = arith.divf %2, %3 : vector<1x64xf32>
    %5 = vector.broadcast %4 : vector<1x64xf32> to vector<32x64xf32>
    %6 = arith.subf %0, %5 : vector<32x64xf32>
    %7 = arith.mulf %6, %6 : vector<32x64xf32>
    %cst_2 = arith.constant dense<0.000000e+00> : vector<64xf32>
    %8 = vector.multi_reduction <add>, %7, %cst_2 [0] : vector<32x64xf32> to vector<64xf32>
    %9 = vector.shape_cast %8 : vector<64xf32> to vector<1x64xf32>
    %cst_3 = arith.constant 3.200000e+01 : f32
    %10 = vector.broadcast %cst_3 : f32 to vector<1x64xf32>
    %11 = arith.divf %9, %10 : vector<1x64xf32>
    %cst_4 = arith.constant 9.99999974E-6 : f32
    %12 = vector.broadcast %cst_4 : f32 to vector<1x64xf32>
    %13 = arith.addf %11, %12 : vector<1x64xf32>
    %14 = math.rsqrt %13 : vector<1x64xf32>
    %15 = vector.broadcast %14 : vector<1x64xf32> to vector<32x64xf32>
    %16 = arith.mulf %6, %15 : vector<32x64xf32>
    %c0_5 = arith.constant 0 : index
    %c0_6 = arith.constant 0 : index
    %17 = vector.load %arg1[%c0_5, %c0_6] : memref<1x64xf32, #tpu.memory_space<vmem>>, vector<1x64xf32>
    %18 = vector.broadcast %17 : vector<1x64xf32> to vector<32x64xf32>
    %19 = arith.mulf %16, %18 : vector<32x64xf32>
    %c0_7 = arith.constant 0 : index
    %c0_8 = arith.constant 0 : index
    %20 = vector.load %arg2[%c0_7, %c0_8] : memref<1x64xf32, #tpu.memory_space<vmem>>, vector<1x64xf32>
    %21 = vector.broadcast %20 : vector<1x64xf32> to vector<32x64xf32>
    %22 = arith.addf %19, %21 : vector<32x64xf32>
    %cst_9 = arith.constant 0.000000e+00 : f32
    %23 = vector.broadcast %cst_9 : f32 to vector<32x64xf32>
    %24 = arith.maximumf %22, %23 : vector<32x64xf32>
    %25 = arith.truncf %24 : vector<32x64xf32> to vector<32x64xbf16>
    %c0_10 = arith.constant 0 : index
    %c0_11 = arith.constant 0 : index
    %26 = vector.load %arg3[%c0_10, %c0_11] : memref<64x512xbf16, #tpu.memory_space<vmem>>, vector<64x512xbf16>
    %cst_12 = arith.constant dense<0.000000e+00> : vector<32x512xf32>
    %27 = tpu.matmul %25, %26, %cst_12 {dimension_numbers = #tpu.dot_dimension_numbers<[1], [0], [0], [1], [0, 0, 1, 1], [], []>} : vector<32x64xbf16>, vector<64x512xbf16>, vector<32x512xf32> -> vector<32x512xf32>
    %c0_13 = arith.constant 0 : index
    %c0_14 = arith.constant 0 : index
    %28 = vector.load %arg4[%c0_13, %c0_14] : memref<32x512xf32, #tpu.memory_space<vmem>>, vector<32x512xf32>
    tpu.vector_store %arg4[%c0_13, %c0_14], %27 {strides = array<i32>} : memref<32x512xf32, #tpu.memory_space<vmem>>, vector<32x512xf32>,
    return
  }
}

module attributes {stable_mosaic.version = 11 : i64} {
  func.func @_bn_relu_matmul_kernel(%arg0: memref<128x32xf32, #tpu.memory_space<vmem>>, %arg1: memref<1x32xf32, #tpu.memory_space<vmem>>, %arg2: memref<1x32xf32, #tpu.memory_space<vmem>>, %arg3: memref<32x256xbf16, #tpu.memory_space<vmem>>, %arg4: memref<128x256xf32, #tpu.memory_space<vmem>>) attributes {dimension_semantics = [], scalar_prefetch = 0 : i64, scratch_operands = 0 : i64, tpu.core_type = #tpu.core_type<tc>} {
    %c0 = arith.constant 0 : index
    %c0_0 = arith.constant 0 : index
    %0 = vector.load %arg0[%c0, %c0_0] : memref<128x32xf32, #tpu.memory_space<vmem>>, vector<128x32xf32>
    %cst = arith.constant dense<0.000000e+00> : vector<32xf32>
    %1 = vector.multi_reduction <add>, %0, %cst [0] : vector<128x32xf32> to vector<32xf32>
    %2 = vector.shape_cast %1 : vector<32xf32> to vector<1x32xf32>
    %cst_1 = arith.constant 1.280000e+02 : f32
    %3 = vector.broadcast %cst_1 : f32 to vector<1x32xf32>
    %4 = arith.divf %2, %3 : vector<1x32xf32>
    %5 = vector.broadcast %4 : vector<1x32xf32> to vector<128x32xf32>
    %6 = arith.subf %0, %5 : vector<128x32xf32>
    %7 = arith.mulf %6, %6 : vector<128x32xf32>
    %cst_2 = arith.constant dense<0.000000e+00> : vector<32xf32>
    %8 = vector.multi_reduction <add>, %7, %cst_2 [0] : vector<128x32xf32> to vector<32xf32>
    %9 = vector.shape_cast %8 : vector<32xf32> to vector<1x32xf32>
    %cst_3 = arith.constant 1.280000e+02 : f32
    %10 = vector.broadcast %cst_3 : f32 to vector<1x32xf32>
    %11 = arith.divf %9, %10 : vector<1x32xf32>
    %cst_4 = arith.constant 9.99999974E-6 : f32
    %12 = vector.broadcast %cst_4 : f32 to vector<1x32xf32>
    %13 = arith.addf %11, %12 : vector<1x32xf32>
    %14 = math.rsqrt %13 : vector<1x32xf32>
    %15 = vector.broadcast %14 : vector<1x32xf32> to vector<128x32xf32>
    %16 = arith.mulf %6, %15 : vector<128x32xf32>
    %c0_5 = arith.constant 0 : index
    %c0_6 = arith.constant 0 : index
    %17 = vector.load %arg1[%c0_5, %c0_6] : memref<1x32xf32, #tpu.memory_space<vmem>>, vector<1x32xf32>
    %18 = vector.broadcast %17 : vector<1x32xf32> to vector<128x32xf32>
    %19 = arith.mulf %16, %18 : vector<128x32xf32>
    %c0_7 = arith.constant 0 : index
    %c0_8 = arith.constant 0 : index
    %20 = vector.load %arg2[%c0_7, %c0_8] : memref<1x32xf32, #tpu.memory_space<vmem>>, vector<1x32xf32>
    %21 = vector.broadcast %20 : vector<1x32xf32> to vector<128x32xf32>
    %22 = arith.addf %19, %21 : vector<128x32xf32>
    %cst_9 = arith.constant 0.000000e+00 : f32
    %23 = vector.broadcast %cst_9 : f32 to vector<128x32xf32>
    %24 = arith.maximumf %22, %23 : vector<128x32xf32>
    %25 = arith.truncf %24 : vector<128x32xf32> to vector<128x32xbf16>
    %c0_10 = arith.constant 0 : index
    %c0_11 = arith.constant 0 : index
    %26 = vector.load %arg3[%c0_10, %c0_11] : memref<32x256xbf16, #tpu.memory_space<vmem>>, vector<32x256xbf16>
    %cst_12 = arith.constant dense<0.000000e+00> : vector<128x256xf32>
    %27 = tpu.matmul %25, %26, %cst_12 {dimension_numbers = #tpu.dot_dimension_numbers<[1], [0], [0], [1], [0, 0, 1, 1], [], []>} : vector<128x32xbf16>, vector<32x256xbf16>, vector<128x256xf32> -> vector<128x256xf32>
    %c0_13 = arith.constant 0 : index
    %c0_14 = arith.constant 0 : index
    %28 = vector.load %arg4[%c0_13, %c0_14] : memref<128x256xf32, #tpu.memory_space<vmem>>, vector<128x256xf32>
    tpu.vector_store %arg4[%c0_13, %c0_14], %27 {strides = array<i32>} : memref<128x256xf32, #tpu.memory_space<vmem>>, vector<128x256xf32>,
    return
  }
}

module attributes {stable_mosaic.version = 11 : i64} {
  func.func @_bn_relu_matmul_kernel(%arg0: memref<512x16xf32, #tpu.memory_space<vmem>>, %arg1: memref<1x16xf32, #tpu.memory_space<vmem>>, %arg2: memref<1x16xf32, #tpu.memory_space<vmem>>, %arg3: memref<16x128xbf16, #tpu.memory_space<vmem>>, %arg4: memref<512x128xf32, #tpu.memory_space<vmem>>) attributes {dimension_semantics = [], scalar_prefetch = 0 : i64, scratch_operands = 0 : i64, tpu.core_type = #tpu.core_type<tc>} {
    %c0 = arith.constant 0 : index
    %c0_0 = arith.constant 0 : index
    %0 = vector.load %arg0[%c0, %c0_0] : memref<512x16xf32, #tpu.memory_space<vmem>>, vector<512x16xf32>
    %cst = arith.constant dense<0.000000e+00> : vector<16xf32>
    %1 = vector.multi_reduction <add>, %0, %cst [0] : vector<512x16xf32> to vector<16xf32>
    %2 = vector.shape_cast %1 : vector<16xf32> to vector<1x16xf32>
    %cst_1 = arith.constant 5.120000e+02 : f32
    %3 = vector.broadcast %cst_1 : f32 to vector<1x16xf32>
    %4 = arith.divf %2, %3 : vector<1x16xf32>
    %5 = vector.broadcast %4 : vector<1x16xf32> to vector<512x16xf32>
    %6 = arith.subf %0, %5 : vector<512x16xf32>
    %7 = arith.mulf %6, %6 : vector<512x16xf32>
    %cst_2 = arith.constant dense<0.000000e+00> : vector<16xf32>
    %8 = vector.multi_reduction <add>, %7, %cst_2 [0] : vector<512x16xf32> to vector<16xf32>
    %9 = vector.shape_cast %8 : vector<16xf32> to vector<1x16xf32>
    %cst_3 = arith.constant 5.120000e+02 : f32
    %10 = vector.broadcast %cst_3 : f32 to vector<1x16xf32>
    %11 = arith.divf %9, %10 : vector<1x16xf32>
    %cst_4 = arith.constant 9.99999974E-6 : f32
    %12 = vector.broadcast %cst_4 : f32 to vector<1x16xf32>
    %13 = arith.addf %11, %12 : vector<1x16xf32>
    %14 = math.rsqrt %13 : vector<1x16xf32>
    %15 = vector.broadcast %14 : vector<1x16xf32> to vector<512x16xf32>
    %16 = arith.mulf %6, %15 : vector<512x16xf32>
    %c0_5 = arith.constant 0 : index
    %c0_6 = arith.constant 0 : index
    %17 = vector.load %arg1[%c0_5, %c0_6] : memref<1x16xf32, #tpu.memory_space<vmem>>, vector<1x16xf32>
    %18 = vector.broadcast %17 : vector<1x16xf32> to vector<512x16xf32>
    %19 = arith.mulf %16, %18 : vector<512x16xf32>
    %c0_7 = arith.constant 0 : index
    %c0_8 = arith.constant 0 : index
    %20 = vector.load %arg2[%c0_7, %c0_8] : memref<1x16xf32, #tpu.memory_space<vmem>>, vector<1x16xf32>
    %21 = vector.broadcast %20 : vector<1x16xf32> to vector<512x16xf32>
    %22 = arith.addf %19, %21 : vector<512x16xf32>
    %cst_9 = arith.constant 0.000000e+00 : f32
    %23 = vector.broadcast %cst_9 : f32 to vector<512x16xf32>
    %24 = arith.maximumf %22, %23 : vector<512x16xf32>
    %25 = arith.truncf %24 : vector<512x16xf32> to vector<512x16xbf16>
    %c0_10 = arith.constant 0 : index
    %c0_11 = arith.constant 0 : index
    %26 = vector.load %arg3[%c0_10, %c0_11] : memref<16x128xbf16, #tpu.memory_space<vmem>>, vector<16x128xbf16>
    %cst_12 = arith.constant dense<0.000000e+00> : vector<512x128xf32>
    %27 = tpu.matmul %25, %26, %cst_12 {dimension_numbers = #tpu.dot_dimension_numbers<[1], [0], [0], [1], [0, 0, 1, 1], [], []>} : vector<512x16xbf16>, vector<16x128xbf16>, vector<512x128xf32> -> vector<512x128xf32>
    %c0_13 = arith.constant 0 : index
    %c0_14 = arith.constant 0 : index
    %28 = vector.load %arg4[%c0_13, %c0_14] : memref<512x128xf32, #tpu.memory_space<vmem>>, vector<512x128xf32>
    tpu.vector_store %arg4[%c0_13, %c0_14], %27 {strides = array<i32>} : memref<512x128xf32, #tpu.memory_space<vmem>>, vector<512x128xf32>,
    return
  }
}

module attributes {stable_mosaic.version = 11 : i64} {
  func.func @_bn_relu_matmul_kernel(%arg0: memref<2048x8xf32, #tpu.memory_space<vmem>>, %arg1: memref<1x8xf32, #tpu.memory_space<vmem>>, %arg2: memref<1x8xf32, #tpu.memory_space<vmem>>, %arg3: memref<8x16xbf16, #tpu.memory_space<vmem>>, %arg4: memref<2048x16xf32, #tpu.memory_space<vmem>>) attributes {dimension_semantics = [], scalar_prefetch = 0 : i64, scratch_operands = 0 : i64, tpu.core_type = #tpu.core_type<tc>} {
    %c0 = arith.constant 0 : index
    %c0_0 = arith.constant 0 : index
    %0 = vector.load %arg0[%c0, %c0_0] : memref<2048x8xf32, #tpu.memory_space<vmem>>, vector<2048x8xf32>
    %cst = arith.constant dense<0.000000e+00> : vector<8xf32>
    %1 = vector.multi_reduction <add>, %0, %cst [0] : vector<2048x8xf32> to vector<8xf32>
    %2 = vector.shape_cast %1 : vector<8xf32> to vector<1x8xf32>
    %cst_1 = arith.constant 2.048000e+03 : f32
    %3 = vector.broadcast %cst_1 : f32 to vector<1x8xf32>
    %4 = arith.divf %2, %3 : vector<1x8xf32>
    %5 = vector.broadcast %4 : vector<1x8xf32> to vector<2048x8xf32>
    %6 = arith.subf %0, %5 : vector<2048x8xf32>
    %7 = arith.mulf %6, %6 : vector<2048x8xf32>
    %cst_2 = arith.constant dense<0.000000e+00> : vector<8xf32>
    %8 = vector.multi_reduction <add>, %7, %cst_2 [0] : vector<2048x8xf32> to vector<8xf32>
    %9 = vector.shape_cast %8 : vector<8xf32> to vector<1x8xf32>
    %cst_3 = arith.constant 2.048000e+03 : f32
    %10 = vector.broadcast %cst_3 : f32 to vector<1x8xf32>
    %11 = arith.divf %9, %10 : vector<1x8xf32>
    %cst_4 = arith.constant 9.99999974E-6 : f32
    %12 = vector.broadcast %cst_4 : f32 to vector<1x8xf32>
    %13 = arith.addf %11, %12 : vector<1x8xf32>
    %14 = math.rsqrt %13 : vector<1x8xf32>
    %15 = vector.broadcast %14 : vector<1x8xf32> to vector<2048x8xf32>
    %16 = arith.mulf %6, %15 : vector<2048x8xf32>
    %c0_5 = arith.constant 0 : index
    %c0_6 = arith.constant 0 : index
    %17 = vector.load %arg1[%c0_5, %c0_6] : memref<1x8xf32, #tpu.memory_space<vmem>>, vector<1x8xf32>
    %18 = vector.broadcast %17 : vector<1x8xf32> to vector<2048x8xf32>
    %19 = arith.mulf %16, %18 : vector<2048x8xf32>
    %c0_7 = arith.constant 0 : index
    %c0_8 = arith.constant 0 : index
    %20 = vector.load %arg2[%c0_7, %c0_8] : memref<1x8xf32, #tpu.memory_space<vmem>>, vector<1x8xf32>
    %21 = vector.broadcast %20 : vector<1x8xf32> to vector<2048x8xf32>
    %22 = arith.addf %19, %21 : vector<2048x8xf32>
    %cst_9 = arith.constant 0.000000e+00 : f32
    %23 = vector.broadcast %cst_9 : f32 to vector<2048x8xf32>
    %24 = arith.maximumf %22, %23 : vector<2048x8xf32>
    %25 = arith.truncf %24 : vector<2048x8xf32> to vector<2048x8xbf16>
    %c0_10 = arith.constant 0 : index
    %c0_11 = arith.constant 0 : index
    %26 = vector.load %arg3[%c0_10, %c0_11] : memref<8x16xbf16, #tpu.memory_space<vmem>>, vector<8x16xbf16>
    %cst_12 = arith.constant dense<0.000000e+00> : vector<2048x16xf32>
    %27 = tpu.matmul %25, %26, %cst_12 {dimension_numbers = #tpu.dot_dimension_numbers<[1], [0], [0], [1], [0, 0, 1, 1], [], []>} : vector<2048x8xbf16>, vector<8x16xbf16>, vector<2048x16xf32> -> vector<2048x16xf32>
    %c0_13 = arith.constant 0 : index
    %c0_14 = arith.constant 0 : index
    %28 = vector.load %arg4[%c0_13, %c0_14] : memref<2048x16xf32, #tpu.memory_space<vmem>>, vector<2048x16xf32>
    tpu.vector_store %arg4[%c0_13, %c0_14], %27 {strides = array<i32>} : memref<2048x16xf32, #tpu.memory_space<vmem>>, vector<2048x16xf32>,
    return
  }
}

module attributes {stable_mosaic.version = 11 : i64} {
  func.func @_tanh_kernel(%arg0: memref<64x128xf32, #tpu.memory_space<vmem>>, %arg1: memref<64x128xf32, #tpu.memory_space<vmem>>) attributes {dimension_semantics = [], scalar_prefetch = 0 : i64, scratch_operands = 0 : i64, tpu.core_type = #tpu.core_type<tc>} {
    %c0 = arith.constant 0 : index
    %c0_0 = arith.constant 0 : index
    %0 = vector.load %arg0[%c0, %c0_0] : memref<64x128xf32, #tpu.memory_space<vmem>>, vector<64x128xf32>
    %1 = math.tanh %0 : vector<64x128xf32>
    %c0_1 = arith.constant 0 : index
    %c0_2 = arith.constant 0 : index
    %2 = vector.load %arg1[%c0_1, %c0_2] : memref<64x128xf32, #tpu.memory_space<vmem>>, vector<64x128xf32>
    tpu.vector_store %arg1[%c0_1, %c0_2], %1 {strides = array<i32>} : memref<64x128xf32, #tpu.memory_space<vmem>>, vector<64x128xf32>,
    return
  }
}

</mosaic_0001>

<llo_original>
// kernel: generator_forward.6
$region0: #{generator_forward.6}
  #allocation0 [shape = 'u32[]', space=smem, size = 0x4, offset = 0x4, fixed_abs, tag = 'smem constant byte address 0x4 - core index']
  #allocation1 [shape = 'u32[72,128]{1,0:T(1,128)}', space=vmem, size = 0x9000, scoped, tag = 'internal scratch']
  %s0 = inlined_call_operand.vmem [shape: bf16[2,16], index: 0, kind: input, shape index: {}]
  %s1 = inlined_call_operand.vmem [shape: bf16[16,1024], index: 1, kind: input, shape index: {}]
  %s2 = inlined_call_operand.vmem [shape: f32[2,1024], index: 2, kind: output, shape index: {}]
  %s3 = sld [smem:[#allocation0]]
  $region18: #{generator_forward.6} parent=0
    _
  %s5 = ssub.s32 1, %s3
  %s6 = scalar_select 0, %s5, %s3
  // Predicated region
  $region2: #{generator_forward.6} parent=0 // pred_check
    _
  $region3: #{generator_forward.6} parent=0 // pred_check_branch
    %8 = sbr.rel (0) target = $region5
  $region4: #{generator_forward.6} parent=0 // pred_region
    _
  $region5: #{generator_forward.6} parent=0 // pred_fallthru
    _
  // Predicated region
  $region6: #{generator_forward.6} parent=0 // pred_check
    _
  $region7: #{generator_forward.6} parent=0 // pred_check_branch
    %10 = sbr.rel (0) target = $region9
  $region8: #{generator_forward.6} parent=0 // pred_region
    _
  $region9: #{generator_forward.6} parent=0 // pred_fallthru
    _
  %v12 = vld [vmem:[%s0] sm:$0x1]
  %v13 = vld [vmem:[%s1] sm:$0xff]
  %v14 = vld [vmem:[%s1 + $0x8] sm:$0xff]
  %v15 = vld [vmem:[%s1 + $0x10] sm:$0xff]
  %v16 = vld [vmem:[%s1 + $0x18] sm:$0xff]
  %v17 = vld [vmem:[%s1 + $0x20] sm:$0xff]
  %v18 = vld [vmem:[%s1 + $0x28] sm:$0xff]
  %v19 = vld [vmem:[%s1 + $0x30] sm:$0xff]
  %v20 = vld [vmem:[%s1 + $0x38] sm:$0xff]
  %v29 = vunpack.c.l.b16 %v13
  %v30 = vunpack.c.h.b16 %v13
  %v31 = vunpack.c.l.b16 %v14
  %v32 = vunpack.c.h.b16 %v14
  %v33 = vunpack.c.l.b16 %v15
  %v34 = vunpack.c.h.b16 %v15
  %v35 = vunpack.c.l.b16 %v16
  %v36 = vunpack.c.h.b16 %v16
  %v37 = vunpack.c.l.b16 %v17
  %v38 = vunpack.c.h.b16 %v17
  %v39 = vunpack.c.l.b16 %v18
  %v40 = vunpack.c.h.b16 %v18
  %v41 = vunpack.c.l.b16 %v19
  %v42 = vunpack.c.h.b16 %v19
  %v43 = vunpack.c.l.b16 %v20
  %v44 = vunpack.c.h.b16 %v20
  %v45 = vpack.c.b16 %v37, %v29
  %v46 = vpack.c.b16 %v38, %v30
  %v47 = vpack.c.b16 %v39, %v31
  %v48 = vpack.c.b16 %v40, %v32
  %v49 = vpack.c.b16 %v41, %v33
  %v50 = vpack.c.b16 %v42, %v34
  %v51 = vpack.c.b16 %v43, %v35
  %v52 = vpack.c.b16 %v44, %v36
  %vm61 = vcmask 130048
  %v63 = vsel %vm61, %v12, 0
  %65 = vmatpush.bf16.msra.mxu0 0
  %66 = vmatpush.bf16.msra.mxu0 0
  %67 = vmatpush.bf16.msra.mxu0 0
  %68 = vmatpush.bf16.msra.mxu0 0
  %69 = vmatpush.bf16.msra.mxu0 0
  %70 = vmatpush.bf16.msra.mxu0 0
  %71 = vmatpush.bf16.msra.mxu0 0
  %72 = vmatpush.bf16.msra.mxu0 %v45
  %73 = vmatmul.bf16.gmra.mxu0 %v63
  %v74 = vpop.f32.mrf.mxu0
  %v75 = vadd.f32 0.0, %v74
  %v76 = vpop.f32.mrf.mxu0
  %77 = vdwg.mxu0
  %78 = vmatpush.bf16.msra.mxu0 0
  %79 = vmatpush.bf16.msra.mxu0 0
  %80 = vmatpush.bf16.msra.mxu0 0
  %81 = vmatpush.bf16.msra.mxu0 0
  %82 = vmatpush.bf16.msra.mxu0 0
  %83 = vmatpush.bf16.msra.mxu0 0
  %84 = vmatpush.bf16.msra.mxu0 0
  %85 = vmatpush.bf16.msra.mxu0 %v46
  %86 = vmatmul.bf16.gmra.mxu0 %v63
  %v87 = vpop.f32.mrf.mxu0
  %v88 = vadd.f32 0.0, %v87
  %v89 = vpop.f32.mrf.mxu0
  %90 = vdwg.mxu0
  %91 = vmatpush.bf16.msra.mxu0 0
  %92 = vmatpush.bf16.msra.mxu0 0
  %93 = vmatpush.bf16.msra.mxu0 0
  %94 = vmatpush.bf16.msra.mxu0 0
  %95 = vmatpush.bf16.msra.mxu0 0
  %96 = vmatpush.bf16.msra.mxu0 0
  %97 = vmatpush.bf16.msra.mxu0 0
  %98 = vmatpush.bf16.msra.mxu0 %v47
  %99 = vmatmul.bf16.gmra.mxu0 %v63
  %v100 = vpop.f32.mrf.mxu0
  %v101 = vadd.f32 0.0, %v100
  %v102 = vpop.f32.mrf.mxu0
  %103 = vdwg.mxu0
  %104 = vmatpush.bf16.msra.mxu0 0
  %105 = vmatpush.bf16.msra.mxu0 0
  %106 = vmatpush.bf16.msra.mxu0 0
  %107 = vmatpush.bf16.msra.mxu0 0
  %108 = vmatpush.bf16.msra.mxu0 0
  %109 = vmatpush.bf16.msra.mxu0 0
  %110 = vmatpush.bf16.msra.mxu0 0
  %111 = vmatpush.bf16.msra.mxu0 %v48
  %112 = vmatmul.bf16.gmra.mxu0 %v63
  %v113 = vpop.f32.mrf.mxu0
  %v114 = vadd.f32 0.0, %v113
  %v115 = vpop.f32.mrf.mxu0
  %116 = vdwg.mxu0
  %117 = vmatpush.bf16.msra.mxu0 0
  %118 = vmatpush.bf16.msra.mxu0 0
  %119 = vmatpush.bf16.msra.mxu0 0
  %120 = vmatpush.bf16.msra.mxu0 0
  %121 = vmatpush.bf16.msra.mxu0 0
  %122 = vmatpush.bf16.msra.mxu0 0
  %123 = vmatpush.bf16.msra.mxu0 0
  %124 = vmatpush.bf16.msra.mxu0 %v49
  %125 = vmatmul.bf16.gmra.mxu0 %v63
  %v126 = vpop.f32.mrf.mxu0
  %v127 = vadd.f32 0.0, %v126
  %v128 = vpop.f32.mrf.mxu0
  %129 = vdwg.mxu0
  %130 = vmatpush.bf16.msra.mxu0 0
  %131 = vmatpush.bf16.msra.mxu0 0
  %132 = vmatpush.bf16.msra.mxu0 0
  %133 = vmatpush.bf16.msra.mxu0 0
  %134 = vmatpush.bf16.msra.mxu0 0
  %135 = vmatpush.bf16.msra.mxu0 0
  %136 = vmatpush.bf16.msra.mxu0 0
  %137 = vmatpush.bf16.msra.mxu0 %v50
  %138 = vmatmul.bf16.gmra.mxu0 %v63
  %v139 = vpop.f32.mrf.mxu0
  %v140 = vadd.f32 0.0, %v139
  %v141 = vpop.f32.mrf.mxu0
  %142 = vdwg.mxu0
  %143 = vmatpush.bf16.msra.mxu0 0
  %144 = vmatpush.bf16.msra.mxu0 0
  %145 = vmatpush.bf16.msra.mxu0 0
  %146 = vmatpush.bf16.msra.mxu0 0
  %147 = vmatpush.bf16.msra.mxu0 0
  %148 = vmatpush.bf16.msra.mxu0 0
  %149 = vmatpush.bf16.msra.mxu0 0
  %150 = vmatpush.bf16.msra.mxu0 %v51
  %151 = vmatmul.bf16.gmra.mxu0 %v63
  %v152 = vpop.f32.mrf.mxu0
  %v153 = vadd.f32 0.0, %v152
  %v154 = vpop.f32.mrf.mxu0
  %155 = vdwg.mxu0
  %156 = vmatpush.bf16.msra.mxu0 0
  %157 = vmatpush.bf16.msra.mxu0 0
  %158 = vmatpush.bf16.msra.mxu0 0
  %159 = vmatpush.bf16.msra.mxu0 0
  %160 = vmatpush.bf16.msra.mxu0 0
  %161 = vmatpush.bf16.msra.mxu0 0
  %162 = vmatpush.bf16.msra.mxu0 0
  %163 = vmatpush.bf16.msra.mxu0 %v52
  %164 = vmatmul.bf16.gmra.mxu0 %v63
  %v165 = vpop.f32.mrf.mxu0
  %v166 = vadd.f32 0.0, %v165
  %v167 = vpop.f32.mrf.mxu0
  %168 = vdwg.mxu0
  %v177 = vrot.slane %v88, 6
  %v178 = vrot.slane %v101, 4
  %v179 = vrot.slane %v114, 2
  %v180 = vrot.slane %v140, 6
  %v181 = vrot.slane %v153, 4
  %v182 = vrot.slane %v166, 2
  %vm183 = vcmask 1041408
  %v184 = vsel %vm183, %v75, %v177
  %vm185 = vcmask 1045508
  %v186 = vsel %vm185, %v178, %v179
  %vm187 = vcmask 1043456
  %v188 = vsel %vm187, %v184, %v186
  %v189 = vsel %vm183, %v127, %v180
  %v190 = vsel %vm185, %v181, %v182
  %v191 = vsel %vm187, %v189, %v190
  %194 = vst [vmem:[%s2] sm:$0xff] %v188
  %195 = vst [vmem:[%s2 + $0x8] sm:$0xff] %v191
  // Predicated region
  $region10: #{generator_forward.6} parent=0 // pred_check
    _
  $region11: #{generator_forward.6} parent=0 // pred_check_branch
    %197 = sbr.rel (0) target = $region13
  $region12: #{generator_forward.6} parent=0 // pred_region
    _
  $region13: #{generator_forward.6} parent=0 // pred_fallthru
    _
  // Predicated region
  $region14: #{generator_forward.6} parent=0 // pred_check
    _
  $region15: #{generator_forward.6} parent=0 // pred_check_branch
    %199 = sbr.rel (0) target = $region17
  $region16: #{generator_forward.6} parent=0 // pred_region
    _
  $region17: #{generator_forward.6} parent=0 // pred_fallthru
    _

// kernel: generator_forward.7
$region0: #{generator_forward.7}
  #allocation0 [shape = 'u32[]', space=smem, size = 0x4, offset = 0x4, fixed_abs, tag = 'smem constant byte address 0x4 - core index']
  #allocation1 [shape = 'u32[72,128]{1,0:T(1,128)}', space=vmem, size = 0x9000, scoped, tag = 'internal scratch']
  %s0 = inlined_call_operand.vmem [shape: f32[32,64], index: 0, kind: input, shape index: {}]
  %s1 = inlined_call_operand.hbm [shape: f32[1,64], index: 1, kind: input, shape index: {}]
  %s2 = inlined_call_operand.hbm [shape: f32[1,64], index: 2, kind: input, shape index: {}]
  %s3 = inlined_call_operand.vmem [shape: bf16[64,512], index: 3, kind: input, shape index: {}]
  %s4 = inlined_call_operand.vmem [shape: f32[32,512], index: 4, kind: output, shape index: {}]
  %s5 = sld [smem:[#allocation0]]
  $region34: #{generator_forward.7} parent=0
    _
  %s7 = ssub.s32 1, %s5
  %s8 = scalar_select 0, %s7, %s5
  $region1: #{generator_forward.7} parent=0
    #allocation2 [shape = 'u8[512]{0}', space=vmem, size = 0x400, scoped, tag = 'input window, operand 1, single buffered']
    #allocation3 [shape = 's32[1]{0}', space=sflag, size = 0x4, scoped, tag = 'scoped memory for generator_forward.7']
    #allocation4 [shape = 'u8[512]{0}', space=vmem, size = 0x400, scoped, tag = 'input window, operand 2, single buffered']
    #allocation5 [shape = 's32[1]{0}', space=sflag, size = 0x4, scoped, tag = 'scoped memory for generator_forward.7']
    %9 = vsyncpa [#allocation3], 0
    %10 = vsyncpa [#allocation5], 0
    // Predicated region
    $region2: #{generator_forward.7} parent=1 // pred_check
      _
    $region3: #{generator_forward.7} parent=1 // pred_check_branch
      %12 = sbr.rel (0) target = $region5
    $region4: #{generator_forward.7} parent=1 // pred_region
      _
    $region5: #{generator_forward.7} parent=1 // pred_fallthru
      _
    // Predicated region
    $region6: #{generator_forward.7} parent=1 // pred_check
      _
    $region7: #{generator_forward.7} parent=1 // pred_check_branch
      %14 = sbr.rel (0) target = $region9
    $region8: #{generator_forward.7} parent=1 // pred_region
      %16 = vsyncadd [#allocation3], 0
      %s18 = sshll.u32 %s1, 4
      %s19 = int_to_ptr.hbm [resolvable:$true] %s18
      %s20 = sshll.u32 [#allocation2], 4
      %s21 = int_to_ptr.vmem [resolvable:$true] %s20
      %23 = dma.hbm_to_vmem [thread:$0]  %s19, 16, %s21, [#allocation3]
    $region9: #{generator_forward.7} parent=1 // pred_fallthru
      _
    // Predicated region
    $region10: #{generator_forward.7} parent=1 // pred_check
      _
    $region11: #{generator_forward.7} parent=1 // pred_check_branch
      %25 = sbr.rel (0) target = $region13
    $region12: #{generator_forward.7} parent=1 // pred_region
      %27 = vsyncadd [#allocation5], 0
      %s29 = sshll.u32 %s2, 4
      %s30 = int_to_ptr.hbm [resolvable:$true] %s29
      %s31 = sshll.u32 [#allocation4], 4
      %s32 = int_to_ptr.vmem [resolvable:$true] %s31
      %34 = dma.hbm_to_vmem [thread:$0]  %s30, 16, %s32, [#allocation5]
    $region13: #{generator_forward.7} parent=1 // pred_fallthru
      _
    // Predicated region
    $region14: #{generator_forward.7} parent=1 // pred_check
      _
    $region15: #{generator_forward.7} parent=1 // pred_check_branch
      %36 = sbr.rel (0) target = $region17
    $region16: #{generator_forward.7} parent=1 // pred_region
      _
    $region17: #{generator_forward.7} parent=1 // pred_fallthru
      _
    // Predicated region
    $region18: #{generator_forward.7} parent=1 // pred_check
      _
    $region19: #{generator_forward.7} parent=1 // pred_check_branch
      %38 = sbr.rel (0) target = $region21
    $region20: #{generator_forward.7} parent=1 // pred_region
      %40 = dma.done [#allocation3], 16
    $region21: #{generator_forward.7} parent=1 // pred_fallthru
      _
    // Predicated region
    $region22: #{generator_forward.7} parent=1 // pred_check
      _
    $region23: #{generator_forward.7} parent=1 // pred_check_branch
      %42 = sbr.rel (0) target = $region25
    $region24: #{generator_forward.7} parent=1 // pred_region
      %44 = dma.done [#allocation5], 16
    $region25: #{generator_forward.7} parent=1 // pred_fallthru
      _
    %v46 = vld [vmem:[%s0] sm:$0xff]
    %v47 = vld [vmem:[%s0 + $0x8] sm:$0xff]
    %v48 = vld [vmem:[%s0 + $0x10] sm:$0xff]
    %v49 = vld [vmem:[%s0 + $0x18] sm:$0xff]
    %vm50 = vcmask 523264
    %v51 = vsel %vm50, %v46, 0.0
    %v52 = vsel %vm50, %v47, 0.0
    %v53 = vadd.f32 %v51, %v52
    %v54 = vsel %vm50, %v48, 0.0
    %v55 = vadd.f32 %v53, %v54
    %v56 = vsel %vm50, %v49, 0.0
    %v57 = vadd.f32 %v55, %v56
    %v58 = vrot.slane %v57, 4
    %v59 = vadd.f32 %v57, %v58
    %v60 = vrot.slane %v59, 2
    %v61 = vadd.f32 %v59, %v60
    %v62 = vrot.slane %v61, 1
    %v63 = vadd.f32 %v61, %v62
    %v64 = vrcp.pop 32.0
    %v65 = vmul.f32 32.0, %v64
    %v66 = vsub.f32 1.0, %v65
    %v67 = vmul.f32 %v64, %v66
    %v68 = vadd.f32 %v64, %v67
    %vm69 = vweird.f32 %v64
    %v70 = vsel %vm69, %v64, %v68
    %v71 = vmul.f32 %v63, %v70
    %v72 = vsub.f32 %v46, %v71
    %v73 = vsub.f32 %v47, %v71
    %v74 = vsub.f32 %v48, %v71
    %v75 = vsub.f32 %v49, %v71
    %v76 = vmul.f32 %v72, %v72
    %v77 = vmul.f32 %v73, %v73
    %v78 = vmul.f32 %v74, %v74
    %v79 = vmul.f32 %v75, %v75
    %v80 = vsel %vm50, %v76, 0.0
    %v81 = vsel %vm50, %v77, 0.0
    %v82 = vadd.f32 %v80, %v81
    %v83 = vsel %vm50, %v78, 0.0
    %v84 = vadd.f32 %v82, %v83
    %v85 = vsel %vm50, %v79, 0.0
    %v86 = vadd.f32 %v84, %v85
    %v87 = vrot.slane %v86, 4
    %v88 = vadd.f32 %v86, %v87
    %v89 = vrot.slane %v88, 2
    %v90 = vadd.f32 %v88, %v89
    %v91 = vrot.slane %v90, 1
    %v92 = vadd.f32 %v90, %v91
    %v93 = vmul.f32 %v92, %v70
    %v94 = vadd.f32 %v93, 1e-05
    %v95 = vrsqrt.pop %v94
    %v96 = vmul.f32 %v95, %v94
    %v97 = vmul.f32 %v96, %v95
    %v98 = vmul.f32 0.5, %v97
    %v99 = vsub.f32 1.5, %v98
    %v100 = vmul.f32 %v95, %v99
    %vm101 = vweird.f32 %v94
    %vm102 = vweird.f32 %v95
    %vm103 = vmor %vm101, %vm102
    %v104 = vsel %vm103, %v95, %v100
    %v105 = vmul.f32 %v72, %v104
    %v106 = vmul.f32 %v73, %v104
    %v107 = vmul.f32 %v74, %v104
    %v108 = vmul.f32 %v75, %v104
    %v109 = vld [vmem:[#allocation2] sm:$0x1]
    %v111 = vperm.slane %v109, 0
    %v113 = vmul.f32 %v105, %v111
    %v114 = vmul.f32 %v106, %v111
    %v115 = vmul.f32 %v107, %v111
    %v116 = vmul.f32 %v108, %v111
    %v117 = vld [vmem:[#allocation4] sm:$0x1]
    %v119 = vperm.slane %v117, 0
    %v121 = vadd.f32 %v113, %v119
    %v122 = vadd.f32 %v114, %v119
    %v123 = vadd.f32 %v115, %v119
    %v124 = vadd.f32 %v116, %v119
    %v125 = vmax.f32 %v121, 0.0
    %v126 = vmax.f32 %v122, 0.0
    %v127 = vmax.f32 %v123, 0.0
    %v128 = vmax.f32 %v124, 0.0
    %v129 = vpack.c.bf16 %v126, %v125
    %v130 = vpack.c.bf16 %v128, %v127
    %v131 = vld [vmem:[%s3] sm:$0xff]
    %v132 = vld [vmem:[%s3 + $0x8] sm:$0xff]
    %v133 = vld [vmem:[%s3 + $0x10] sm:$0xff]
    %v134 = vld [vmem:[%s3 + $0x18] sm:$0xff]
    %v135 = vld [vmem:[%s3 + $0x20] sm:$0xff]
    %v136 = vld [vmem:[%s3 + $0x28] sm:$0xff]
    %v137 = vld [vmem:[%s3 + $0x30] sm:$0xff]
    %v138 = vld [vmem:[%s3 + $0x38] sm:$0xff]
    %v139 = vld [vmem:[%s3 + $0x40] sm:$0xff]
    %v140 = vld [vmem:[%s3 + $0x48] sm:$0xff]
    %v141 = vld [vmem:[%s3 + $0x50] sm:$0xff]
    %v142 = vld [vmem:[%s3 + $0x58] sm:$0xff]
    %v143 = vld [vmem:[%s3 + $0x60] sm:$0xff]
    %v144 = vld [vmem:[%s3 + $0x68] sm:$0xff]
    %v145 = vld [vmem:[%s3 + $0x70] sm:$0xff]
    %v146 = vld [vmem:[%s3 + $0x78] sm:$0xff]
    %v163 = vunpack.c.l.b16 %v131
    %v164 = vunpack.c.h.b16 %v131
    %v165 = vunpack.c.l.b16 %v132
    %v166 = vunpack.c.h.b16 %v132
    %v167 = vunpack.c.l.b16 %v133
    %v168 = vunpack.c.h.b16 %v133
    %v169 = vunpack.c.l.b16 %v134
    %v170 = vunpack.c.h.b16 %v134
    %v171 = vunpack.c.l.b16 %v135
    %v172 = vunpack.c.h.b16 %v135
    %v173 = vunpack.c.l.b16 %v136
    %v174 = vunpack.c.h.b16 %v136
    %v175 = vunpack.c.l.b16 %v137
    %v176 = vunpack.c.h.b16 %v137
    %v177 = vunpack.c.l.b16 %v138
    %v178 = vunpack.c.h.b16 %v138
    %v179 = vunpack.c.l.b16 %v139
    %v180 = vunpack.c.h.b16 %v139
    %v181 = vunpack.c.l.b16 %v140
    %v182 = vunpack.c.h.b16 %v140
    %v183 = vunpack.c.l.b16 %v141
    %v184 = vunpack.c.h.b16 %v141
    %v185 = vunpack.c.l.b16 %v142
    %v186 = vunpack.c.h.b16 %v142
    %v187 = vunpack.c.l.b16 %v143
    %v188 = vunpack.c.h.b16 %v143
    %v189 = vunpack.c.l.b16 %v144
    %v190 = vunpack.c.h.b16 %v144
    %v191 = vunpack.c.l.b16 %v145
    %v192 = vunpack.c.h.b16 %v145
    %v193 = vunpack.c.l.b16 %v146
    %v194 = vunpack.c.h.b16 %v146
    %v195 = vpack.c.b16 %v167, %v163
    %v196 = vpack.c.b16 %v168, %v164
    %v197 = vpack.c.b16 %v169, %v165
    %v198 = vpack.c.b16 %v170, %v166
    %v199 = vpack.c.b16 %v175, %v171
    %v200 = vpack.c.b16 %v176, %v172
    %v201 = vpack.c.b16 %v177, %v173
    %v202 = vpack.c.b16 %v178, %v174
    %v203 = vpack.c.b16 %v183, %v179
    %v204 = vpack.c.b16 %v184, %v180
    %v205 = vpack.c.b16 %v185, %v181
    %v206 = vpack.c.b16 %v186, %v182
    %v207 = vpack.c.b16 %v191, %v187
    %v208 = vpack.c.b16 %v192, %v188
    %v209 = vpack.c.b16 %v193, %v189
    %v210 = vpack.c.b16 %v194, %v190
    %v228 = vsel %vm50, %v129, 0
    %v231 = vsel %vm50, %v130, 0
    %233 = vmatpush.bf16.msra.mxu0 0
    %234 = vmatpush.bf16.msra.mxu0 0
    %235 = vmatpush.bf16.msra.mxu0 0
    %236 = vmatpush.bf16.msra.mxu0 0
    %237 = vmatpush.bf16.msra.mxu0 %v207
    %238 = vmatpush.bf16.msra.mxu0 %v203
    %239 = vmatpush.bf16.msra.mxu0 %v199
    %240 = vmatpush.bf16.msra.mxu0 %v195
    %241 = vmatmul.bf16.gmra.mxu0 %v228
    %v242 = vpop.f32.mrf.mxu0
    %v243 = vadd.f32 0.0, %v242
    %v244 = vpop.f32.mrf.mxu0
    %v245 = vadd.f32 0.0, %v244
    %246 = vmatmul.bf16.gmra.mxu0 %v231
    %v247 = vpop.f32.mrf.mxu0
    %v248 = vadd.f32 0.0, %v247
    %v249 = vpop.f32.mrf.mxu0
    %v250 = vadd.f32 0.0, %v249
    %251 = vdwg.mxu0
    %252 = vmatpush.bf16.msra.mxu0 0
    %253 = vmatpush.bf16.msra.mxu0 0
    %254 = vmatpush.bf16.msra.mxu0 0
    %255 = vmatpush.bf16.msra.mxu0 0
    %256 = vmatpush.bf16.msra.mxu0 %v208
    %257 = vmatpush.bf16.msra.mxu0 %v204
    %258 = vmatpush.bf16.msra.mxu0 %v200
    %259 = vmatpush.bf16.msra.mxu0 %v196
    %260 = vmatmul.bf16.gmra.mxu0 %v228
    %v261 = vpop.f32.mrf.mxu0
    %v262 = vadd.f32 0.0, %v261
    %v263 = vpop.f32.mrf.mxu0
    %v264 = vadd.f32 0.0, %v263
    %265 = vmatmul.bf16.gmra.mxu0 %v231
    %v266 = vpop.f32.mrf.mxu0
    %v267 = vadd.f32 0.0, %v266
    %v268 = vpop.f32.mrf.mxu0
    %v269 = vadd.f32 0.0, %v268
    %270 = vdwg.mxu0
    %271 = vmatpush.bf16.msra.mxu0 0
    %272 = vmatpush.bf16.msra.mxu0 0
    %273 = vmatpush.bf16.msra.mxu0 0
    %274 = vmatpush.bf16.msra.mxu0 0
    %275 = vmatpush.bf16.msra.mxu0 %v209
    %276 = vmatpush.bf16.msra.mxu0 %v205
    %277 = vmatpush.bf16.msra.mxu0 %v201
    %278 = vmatpush.bf16.msra.mxu0 %v197
    %279 = vmatmul.bf16.gmra.mxu0 %v228
    %v280 = vpop.f32.mrf.mxu0
    %v281 = vadd.f32 0.0, %v280
    %v282 = vpop.f32.mrf.mxu0
    %v283 = vadd.f32 0.0, %v282
    %284 = vmatmul.bf16.gmra.mxu0 %v231
    %v285 = vpop.f32.mrf.mxu0
    %v286 = vadd.f32 0.0, %v285
    %v287 = vpop.f32.mrf.mxu0
    %v288 = vadd.f32 0.0, %v287
    %289 = vdwg.mxu0
    %290 = vmatpush.bf16.msra.mxu0 0
    %291 = vmatpush.bf16.msra.mxu0 0
    %292 = vmatpush.bf16.msra.mxu0 0
    %293 = vmatpush.bf16.msra.mxu0 0
    %294 = vmatpush.bf16.msra.mxu0 %v210
    %295 = vmatpush.bf16.msra.mxu0 %v206
    %296 = vmatpush.bf16.msra.mxu0 %v202
    %297 = vmatpush.bf16.msra.mxu0 %v198
    %298 = vmatmul.bf16.gmra.mxu0 %v228
    %v299 = vpop.f32.mrf.mxu0
    %v300 = vadd.f32 0.0, %v299
    %v301 = vpop.f32.mrf.mxu0
    %v302 = vadd.f32 0.0, %v301
    %303 = vmatmul.bf16.gmra.mxu0 %v231
    %v304 = vpop.f32.mrf.mxu0
    %v305 = vadd.f32 0.0, %v304
    %v306 = vpop.f32.mrf.mxu0
    %v307 = vadd.f32 0.0, %v306
    %308 = vdwg.mxu0
    %309 = vst [vmem:[%s4] sm:$0xff] %v243
    %310 = vst [vmem:[%s4 + $0x8] sm:$0xff] %v262
    %311 = vst [vmem:[%s4 + $0x10] sm:$0xff] %v281
    %312 = vst [vmem:[%s4 + $0x18] sm:$0xff] %v300
    %313 = vst [vmem:[%s4 + $0x20] sm:$0xff] %v245
    %314 = vst [vmem:[%s4 + $0x28] sm:$0xff] %v264
    %315 = vst [vmem:[%s4 + $0x30] sm:$0xff] %v283
    %316 = vst [vmem:[%s4 + $0x38] sm:$0xff] %v302
    %317 = vst [vmem:[%s4 + $0x40] sm:$0xff] %v248
    %318 = vst [vmem:[%s4 + $0x48] sm:$0xff] %v267
    %319 = vst [vmem:[%s4 + $0x50] sm:$0xff] %v286
    %320 = vst [vmem:[%s4 + $0x58] sm:$0xff] %v305
    %321 = vst [vmem:[%s4 + $0x60] sm:$0xff] %v250
    %322 = vst [vmem:[%s4 + $0x68] sm:$0xff] %v269
    %323 = vst [vmem:[%s4 + $0x70] sm:$0xff] %v288
    %324 = vst [vmem:[%s4 + $0x78] sm:$0xff] %v307
    // Predicated region
    $region26: #{generator_forward.7} parent=1 // pred_check
      _
    $region27: #{generator_forward.7} parent=1 // pred_check_branch
      %326 = sbr.rel (0) target = $region29
    $region28: #{generator_forward.7} parent=1 // pred_region
      _
    $region29: #{generator_forward.7} parent=1 // pred_fallthru
      _
    // Predicated region
    $region30: #{generator_forward.7} parent=1 // pred_check
      _
    $region31: #{generator_forward.7} parent=1 // pred_check_branch
      %328 = sbr.rel (0) target = $region33
    $region32: #{generator_forward.7} parent=1 // pred_region
      _
    $region33: #{generator_forward.7} parent=1 // pred_fallthru
      _
    %329 = vsyncpa [#allocation3], 1
    %330 = vsyncpa [#allocation5], 1

// kernel: generator_forward.8
$region0: #{generator_forward.8}
  #allocation0 [shape = 'u32[]', space=smem, size = 0x4, offset = 0x4, fixed_abs, tag = 'smem constant byte address 0x4 - core index']
  #allocation1 [shape = 'u32[72,128]{1,0:T(1,128)}', space=vmem, size = 0x9000, scoped, tag = 'internal scratch']
  %s0 = inlined_call_operand.vmem [shape: f32[128,32], index: 0, kind: input, shape index: {}]
  %s1 = inlined_call_operand.vmem [shape: f32[1,32], index: 1, kind: input, shape index: {}]
  %s2 = inlined_call_operand.vmem [shape: f32[1,32], index: 2, kind: input, shape index: {}]
  %s3 = inlined_call_operand.vmem [shape: bf16[32,256], index: 3, kind: input, shape index: {}]
  %s4 = inlined_call_operand.vmem [shape: f32[128,256], index: 4, kind: output, shape index: {}]
  %s5 = sld [smem:[#allocation0]]
  $region26: #{generator_forward.8} parent=0
    _
  %s7 = ssub.s32 1, %s5
  %s8 = scalar_select 0, %s7, %s5
  // Predicated region
  $region2: #{generator_forward.8} parent=0 // pred_check
    _
  $region3: #{generator_forward.8} parent=0 // pred_check_branch
    %10 = sbr.rel (0) target = $region5
  $region4: #{generator_forward.8} parent=0 // pred_region
    _
  $region5: #{generator_forward.8} parent=0 // pred_fallthru
    _
  // Predicated region
  $region6: #{generator_forward.8} parent=0 // pred_check
    _
  $region7: #{generator_forward.8} parent=0 // pred_check_branch
    %12 = sbr.rel (0) target = $region9
  $region8: #{generator_forward.8} parent=0 // pred_region
    _
  $region9: #{generator_forward.8} parent=0 // pred_fallthru
    _
  // Predicated region
  $region10: #{generator_forward.8} parent=0 // pred_check
    _
  $region11: #{generator_forward.8} parent=0 // pred_check_branch
    %14 = sbr.rel (0) target = $region13
  $region12: #{generator_forward.8} parent=0 // pred_region
    _
  $region13: #{generator_forward.8} parent=0 // pred_fallthru
    _
  // Predicated region
  $region14: #{generator_forward.8} parent=0 // pred_check
    _
  $region15: #{generator_forward.8} parent=0 // pred_check_branch
    %16 = sbr.rel (0) target = $region17
  $region16: #{generator_forward.8} parent=0 // pred_region
    _
  $region17: #{generator_forward.8} parent=0 // pred_fallthru
    _
  %v18 = vld [vmem:[%s0] sm:$0xff]
  %v19 = vld [vmem:[%s0 + $0x8] sm:$0xff]
  %v20 = vld [vmem:[%s0 + $0x10] sm:$0xff]
  %v21 = vld [vmem:[%s0 + $0x18] sm:$0xff]
  %v22 = vld [vmem:[%s0 + $0x20] sm:$0xff]
  %v23 = vld [vmem:[%s0 + $0x28] sm:$0xff]
  %v24 = vld [vmem:[%s0 + $0x30] sm:$0xff]
  %v25 = vld [vmem:[%s0 + $0x38] sm:$0xff]
  %v26 = vld [vmem:[%s0 + $0x40] sm:$0xff]
  %v27 = vld [vmem:[%s0 + $0x48] sm:$0xff]
  %v28 = vld [vmem:[%s0 + $0x50] sm:$0xff]
  %v29 = vld [vmem:[%s0 + $0x58] sm:$0xff]
  %v30 = vld [vmem:[%s0 + $0x60] sm:$0xff]
  %v31 = vld [vmem:[%s0 + $0x68] sm:$0xff]
  %v32 = vld [vmem:[%s0 + $0x70] sm:$0xff]
  %v33 = vld [vmem:[%s0 + $0x78] sm:$0xff]
  %vm34 = vcmask 261120
  %v35 = vsel %vm34, %v18, 0.0
  %v36 = vsel %vm34, %v19, 0.0
  %v37 = vadd.f32 %v35, %v36
  %v38 = vsel %vm34, %v20, 0.0
  %v39 = vadd.f32 %v37, %v38
  %v40 = vsel %vm34, %v21, 0.0
  %v41 = vadd.f32 %v39, %v40
  %v42 = vsel %vm34, %v22, 0.0
  %v43 = vadd.f32 %v41, %v42
  %v44 = vsel %vm34, %v23, 0.0
  %v45 = vadd.f32 %v43, %v44
  %v46 = vsel %vm34, %v24, 0.0
  %v47 = vadd.f32 %v45, %v46
  %v48 = vsel %vm34, %v25, 0.0
  %v49 = vadd.f32 %v47, %v48
  %v50 = vsel %vm34, %v26, 0.0
  %v51 = vadd.f32 %v49, %v50
  %v52 = vsel %vm34, %v27, 0.0
  %v53 = vadd.f32 %v51, %v52
  %v54 = vsel %vm34, %v28, 0.0
  %v55 = vadd.f32 %v53, %v54
  %v56 = vsel %vm34, %v29, 0.0
  %v57 = vadd.f32 %v55, %v56
  %v58 = vsel %vm34, %v30, 0.0
  %v59 = vadd.f32 %v57, %v58
  %v60 = vsel %vm34, %v31, 0.0
  %v61 = vadd.f32 %v59, %v60
  %v62 = vsel %vm34, %v32, 0.0
  %v63 = vadd.f32 %v61, %v62
  %v64 = vsel %vm34, %v33, 0.0
  %v65 = vadd.f32 %v63, %v64
  %v66 = vrot.slane %v65, 4
  %v67 = vadd.f32 %v65, %v66
  %v68 = vrot.slane %v67, 2
  %v69 = vadd.f32 %v67, %v68
  %v70 = vrot.slane %v69, 1
  %v71 = vadd.f32 %v69, %v70
  %v72 = vrcp.pop 128.0
  %v73 = vmul.f32 128.0, %v72
  %v74 = vsub.f32 1.0, %v73
  %v75 = vmul.f32 %v72, %v74
  %v76 = vadd.f32 %v72, %v75
  %vm77 = vweird.f32 %v72
  %v78 = vsel %vm77, %v72, %v76
  %v79 = vmul.f32 %v71, %v78
  %v80 = vsub.f32 %v18, %v79
  %v81 = vsub.f32 %v19, %v79
  %v82 = vsub.f32 %v20, %v79
  %v83 = vsub.f32 %v21, %v79
  %v84 = vsub.f32 %v22, %v79
  %v85 = vsub.f32 %v23, %v79
  %v86 = vsub.f32 %v24, %v79
  %v87 = vsub.f32 %v25, %v79
  %v88 = vsub.f32 %v26, %v79
  %v89 = vsub.f32 %v27, %v79
  %v90 = vsub.f32 %v28, %v79
  %v91 = vsub.f32 %v29, %v79
  %v92 = vsub.f32 %v30, %v79
  %v93 = vsub.f32 %v31, %v79
  %v94 = vsub.f32 %v32, %v79
  %v95 = vsub.f32 %v33, %v79
  %v96 = vmul.f32 %v80, %v80
  %v97 = vmul.f32 %v81, %v81
  %v98 = vmul.f32 %v82, %v82
  %v99 = vmul.f32 %v83, %v83
  %v100 = vmul.f32 %v84, %v84
  %v101 = vmul.f32 %v85, %v85
  %v102 = vmul.f32 %v86, %v86
  %v103 = vmul.f32 %v87, %v87
  %v104 = vmul.f32 %v88, %v88
  %v105 = vmul.f32 %v89, %v89
  %v106 = vmul.f32 %v90, %v90
  %v107 = vmul.f32 %v91, %v91
  %v108 = vmul.f32 %v92, %v92
  %v109 = vmul.f32 %v93, %v93
  %v110 = vmul.f32 %v94, %v94
  %v111 = vmul.f32 %v95, %v95
  %v112 = vsel %vm34, %v96, 0.0
  %v113 = vsel %vm34, %v97, 0.0
  %v114 = vadd.f32 %v112, %v113
  %v115 = vsel %vm34, %v98, 0.0
  %v116 = vadd.f32 %v114, %v115
  %v117 = vsel %vm34, %v99, 0.0
  %v118 = vadd.f32 %v116, %v117
  %v119 = vsel %vm34, %v100, 0.0
  %v120 = vadd.f32 %v118, %v119
  %v121 = vsel %vm34, %v101, 0.0
  %v122 = vadd.f32 %v120, %v121
  %v123 = vsel %vm34, %v102, 0.0
  %v124 = vadd.f32 %v122, %v123
  %v125 = vsel %vm34, %v103, 0.0
  %v126 = vadd.f32 %v124, %v125
  %v127 = vsel %vm34, %v104, 0.0
  %v128 = vadd.f32 %v126, %v127
  %v129 = vsel %vm34, %v105, 0.0
  %v130 = vadd.f32 %v128, %v129
  %v131 = vsel %vm34, %v106, 0.0
  %v132 = vadd.f32 %v130, %v131
  %v133 = vsel %vm34, %v107, 0.0
  %v134 = vadd.f32 %v132, %v133
  %v135 = vsel %vm34, %v108, 0.0
  %v136 = vadd.f32 %v134, %v135
  %v137 = vsel %vm34, %v109, 0.0
  %v138 = vadd.f32 %v136, %v137
  %v139 = vsel %vm34, %v110, 0.0
  %v140 = vadd.f32 %v138, %v139
  %v141 = vsel %vm34, %v111, 0.0
  %v142 = vadd.f32 %v140, %v141
  %v143 = vrot.slane %v142, 4
  %v144 = vadd.f32 %v142, %v143
  %v145 = vrot.slane %v144, 2
  %v146 = vadd.f32 %v144, %v145
  %v147 = vrot.slane %v146, 1
  %v148 = vadd.f32 %v146, %v147
  %v149 = vmul.f32 %v148, %v78
  %v150 = vadd.f32 %v149, 1e-05
  %v151 = vrsqrt.pop %v150
  %v152 = vmul.f32 %v151, %v150
  %v153 = vmul.f32 %v152, %v151
  %v154 = vmul.f32 0.5, %v153
  %v155 = vsub.f32 1.5, %v154
  %v156 = vmul.f32 %v151, %v155
  %vm157 = vweird.f32 %v150
  %vm158 = vweird.f32 %v151
  %vm159 = vmor %vm157, %vm158
  %v160 = vsel %vm159, %v151, %v156
  %v161 = vmul.f32 %v80, %v160
  %v162 = vmul.f32 %v81, %v160
  %v163 = vmul.f32 %v82, %v160
  %v164 = vmul.f32 %v83, %v160
  %v165 = vmul.f32 %v84, %v160
  %v166 = vmul.f32 %v85, %v160
  %v167 = vmul.f32 %v86, %v160
  %v168 = vmul.f32 %v87, %v160
  %v169 = vmul.f32 %v88, %v160
  %v170 = vmul.f32 %v89, %v160
  %v171 = vmul.f32 %v90, %v160
  %v172 = vmul.f32 %v91, %v160
  %v173 = vmul.f32 %v92, %v160
  %v174 = vmul.f32 %v93, %v160
  %v175 = vmul.f32 %v94, %v160
  %v176 = vmul.f32 %v95, %v160
  %v177 = vld [vmem:[%s1] sm:$0x1]
  %v179 = vperm.slane %v177, 0
  %v181 = vmul.f32 %v161, %v179
  %v182 = vmul.f32 %v162, %v179
  %v183 = vmul.f32 %v163, %v179
  %v184 = vmul.f32 %v164, %v179
  %v185 = vmul.f32 %v165, %v179
  %v186 = vmul.f32 %v166, %v179
  %v187 = vmul.f32 %v167, %v179
  %v188 = vmul.f32 %v168, %v179
  %v189 = vmul.f32 %v169, %v179
  %v190 = vmul.f32 %v170, %v179
  %v191 = vmul.f32 %v171, %v179
  %v192 = vmul.f32 %v172, %v179
  %v193 = vmul.f32 %v173, %v179
  %v194 = vmul.f32 %v174, %v179
  %v195 = vmul.f32 %v175, %v179
  %v196 = vmul.f32 %v176, %v179
  %v197 = vld [vmem:[%s2] sm:$0x1]
  %v199 = vperm.slane %v197, 0
  %v201 = vadd.f32 %v181, %v199
  %v202 = vadd.f32 %v182, %v199
  %v203 = vadd.f32 %v183, %v199
  %v204 = vadd.f32 %v184, %v199
  %v205 = vadd.f32 %v185, %v199
  %v206 = vadd.f32 %v186, %v199
  %v207 = vadd.f32 %v187, %v199
  %v208 = vadd.f32 %v188, %v199
  %v209 = vadd.f32 %v189, %v199
  %v210 = vadd.f32 %v190, %v199
  %v211 = vadd.f32 %v191, %v199
  %v212 = vadd.f32 %v192, %v199
  %v213 = vadd.f32 %v193, %v199
  %v214 = vadd.f32 %v194, %v199
  %v215 = vadd.f32 %v195, %v199
  %v216 = vadd.f32 %v196, %v199
  %v217 = vmax.f32 %v201, 0.0
  %v218 = vmax.f32 %v202, 0.0
  %v219 = vmax.f32 %v203, 0.0
  %v220 = vmax.f32 %v204, 0.0
  %v221 = vmax.f32 %v205, 0.0
  %v222 = vmax.f32 %v206, 0.0
  %v223 = vmax.f32 %v207, 0.0
  %v224 = vmax.f32 %v208, 0.0
  %v225 = vmax.f32 %v209, 0.0
  %v226 = vmax.f32 %v210, 0.0
  %v227 = vmax.f32 %v211, 0.0
  %v228 = vmax.f32 %v212, 0.0
  %v229 = vmax.f32 %v213, 0.0
  %v230 = vmax.f32 %v214, 0.0
  %v231 = vmax.f32 %v215, 0.0
  %v232 = vmax.f32 %v216, 0.0
  %v233 = vpack.c.bf16 %v218, %v217
  %v234 = vpack.c.bf16 %v220, %v219
  %v235 = vpack.c.bf16 %v222, %v221
  %v236 = vpack.c.bf16 %v224, %v223
  %v237 = vpack.c.bf16 %v226, %v225
  %v238 = vpack.c.bf16 %v228, %v227
  %v239 = vpack.c.bf16 %v230, %v229
  %v240 = vpack.c.bf16 %v232, %v231
  %v241 = vld [vmem:[%s3] sm:$0xff]
  %v242 = vld [vmem:[%s3 + $0x8] sm:$0xff]
  %v243 = vld [vmem:[%s3 + $0x10] sm:$0xff]
  %v244 = vld [vmem:[%s3 + $0x18] sm:$0xff]
  %v249 = vunpack.c.l.b16 %v241
  %v250 = vunpack.c.h.b16 %v241
  %v251 = vunpack.c.l.b16 %v242
  %v252 = vunpack.c.h.b16 %v242
  %v253 = vunpack.c.l.b16 %v243
  %v254 = vunpack.c.h.b16 %v243
  %v255 = vunpack.c.l.b16 %v244
  %v256 = vunpack.c.h.b16 %v244
  %v257 = vpack.c.b16 %v251, %v249
  %v258 = vpack.c.b16 %v252, %v250
  %v259 = vpack.c.b16 %v255, %v253
  %v260 = vpack.c.b16 %v256, %v254
  %v266 = vsel %vm34, %v233, 0
  %v269 = vsel %vm34, %v234, 0
  %v272 = vsel %vm34, %v235, 0
  %v275 = vsel %vm34, %v236, 0
  %v278 = vsel %vm34, %v237, 0
  %v281 = vsel %vm34, %v238, 0
  %v284 = vsel %vm34, %v239, 0
  %v287 = vsel %vm34, %v240, 0
  %289 = vmatpush.bf16.msra.mxu0 0
  %290 = vmatpush.bf16.msra.mxu0 0
  %291 = vmatpush.bf16.msra.mxu0 0
  %292 = vmatpush.bf16.msra.mxu0 0
  %293 = vmatpush.bf16.msra.mxu0 0
  %294 = vmatpush.bf16.msra.mxu0 0
  %295 = vmatpush.bf16.msra.mxu0 %v259
  %296 = vmatpush.bf16.msra.mxu0 %v257
  %297 = vmatmul.bf16.gmra.mxu0 %v266
  %v298 = vpop.f32.mrf.mxu0
  %v299 = vadd.f32 0.0, %v298
  %v300 = vpop.f32.mrf.mxu0
  %v301 = vadd.f32 0.0, %v300
  %302 = vmatmul.bf16.gmra.mxu0 %v269
  %v303 = vpop.f32.mrf.mxu0
  %v304 = vadd.f32 0.0, %v303
  %v305 = vpop.f32.mrf.mxu0
  %v306 = vadd.f32 0.0, %v305
  %307 = vmatmul.bf16.gmra.mxu0 %v272
  %v308 = vpop.f32.mrf.mxu0
  %v309 = vadd.f32 0.0, %v308
  %v310 = vpop.f32.mrf.mxu0
  %v311 = vadd.f32 0.0, %v310
  %312 = vmatmul.bf16.gmra.mxu0 %v275
  %v313 = vpop.f32.mrf.mxu0
  %v314 = vadd.f32 0.0, %v313
  %v315 = vpop.f32.mrf.mxu0
  %v316 = vadd.f32 0.0, %v315
  %317 = vmatmul.bf16.gmra.mxu0 %v278
  %v318 = vpop.f32.mrf.mxu0
  %v319 = vadd.f32 0.0, %v318
  %v320 = vpop.f32.mrf.mxu0
  %v321 = vadd.f32 0.0, %v320
  %322 = vmatmul.bf16.gmra.mxu0 %v281
  %v323 = vpop.f32.mrf.mxu0
  %v324 = vadd.f32 0.0, %v323
  %v325 = vpop.f32.mrf.mxu0
  %v326 = vadd.f32 0.0, %v325
  %327 = vmatmul.bf16.gmra.mxu0 %v284
  %v328 = vpop.f32.mrf.mxu0
  %v329 = vadd.f32 0.0, %v328
  %v330 = vpop.f32.mrf.mxu0
  %v331 = vadd.f32 0.0, %v330
  %332 = vmatmul.bf16.gmra.mxu0 %v287
  %v333 = vpop.f32.mrf.mxu0
  %v334 = vadd.f32 0.0, %v333
  %v335 = vpop.f32.mrf.mxu0
  %v336 = vadd.f32 0.0, %v335
  %337 = vdwg.mxu0
  %338 = vmatpush.bf16.msra.mxu0 0
  %339 = vmatpush.bf16.msra.mxu0 0
  %340 = vmatpush.bf16.msra.mxu0 0
  %341 = vmatpush.bf16.msra.mxu0 0
  %342 = vmatpush.bf16.msra.mxu0 0
  %343 = vmatpush.bf16.msra.mxu0 0
  %344 = vmatpush.bf16.msra.mxu0 %v260
  %345 = vmatpush.bf16.msra.mxu0 %v258
  %346 = vmatmul.bf16.gmra.mxu0 %v266
  %v347 = vpop.f32.mrf.mxu0
  %v348 = vadd.f32 0.0, %v347
  %v349 = vpop.f32.mrf.mxu0
  %v350 = vadd.f32 0.0, %v349
  %351 = vmatmul.bf16.gmra.mxu0 %v269
  %v352 = vpop.f32.mrf.mxu0
  %v353 = vadd.f32 0.0, %v352
  %v354 = vpop.f32.mrf.mxu0
  %v355 = vadd.f32 0.0, %v354
  %356 = vmatmul.bf16.gmra.mxu0 %v272
  %v357 = vpop.f32.mrf.mxu0
  %v358 = vadd.f32 0.0, %v357
  %v359 = vpop.f32.mrf.mxu0
  %v360 = vadd.f32 0.0, %v359
  %361 = vmatmul.bf16.gmra.mxu0 %v275
  %v362 = vpop.f32.mrf.mxu0
  %v363 = vadd.f32 0.0, %v362
  %v364 = vpop.f32.mrf.mxu0
  %v365 = vadd.f32 0.0, %v364
  %366 = vmatmul.bf16.gmra.mxu0 %v278
  %v367 = vpop.f32.mrf.mxu0
  %v368 = vadd.f32 0.0, %v367
  %v369 = vpop.f32.mrf.mxu0
  %v370 = vadd.f32 0.0, %v369
  %371 = vmatmul.bf16.gmra.mxu0 %v281
  %v372 = vpop.f32.mrf.mxu0
  %v373 = vadd.f32 0.0, %v372
  %v374 = vpop.f32.mrf.mxu0
  %v375 = vadd.f32 0.0, %v374
  %376 = vmatmul.bf16.gmra.mxu0 %v284
  %v377 = vpop.f32.mrf.mxu0
  %v378 = vadd.f32 0.0, %v377
  %v379 = vpop.f32.mrf.mxu0
  %v380 = vadd.f32 0.0, %v379
  %381 = vmatmul.bf16.gmra.mxu0 %v287
  %v382 = vpop.f32.mrf.mxu0
  %v383 = vadd.f32 0.0, %v382
  %v384 = vpop.f32.mrf.mxu0
  %v385 = vadd.f32 0.0, %v384
  %386 = vdwg.mxu0
  %387 = vst [vmem:[%s4] sm:$0xff] %v299
  %388 = vst [vmem:[%s4 + $0x8] sm:$0xff] %v348
  %389 = vst [vmem:[%s4 + $0x10] sm:$0xff] %v301
  %390 = vst [vmem:[%s4 + $0x18] sm:$0xff] %v350
  %391 = vst [vmem:[%s4 + $0x20] sm:$0xff] %v304
  %392 = vst [vmem:[%s4 + $0x28] sm:$0xff] %v353
  %393 = vst [vmem:[%s4 + $0x30] sm:$0xff] %v306
  %394 = vst [vmem:[%s4 + $0x38] sm:$0xff] %v355
  %395 = vst [vmem:[%s4 + $0x40] sm:$0xff] %v309
  %396 = vst [vmem:[%s4 + $0x48] sm:$0xff] %v358
  %397 = vst [vmem:[%s4 + $0x50] sm:$0xff] %v311
  %398 = vst [vmem:[%s4 + $0x58] sm:$0xff] %v360
  %399 = vst [vmem:[%s4 + $0x60] sm:$0xff] %v314
  %400 = vst [vmem:[%s4 + $0x68] sm:$0xff] %v363
  %401 = vst [vmem:[%s4 + $0x70] sm:$0xff] %v316
  %402 = vst [vmem:[%s4 + $0x78] sm:$0xff] %v365
  %403 = vst [vmem:[%s4 + $0x80] sm:$0xff] %v319
  %404 = vst [vmem:[%s4 + $0x88] sm:$0xff] %v368
  %405 = vst [vmem:[%s4 + $0x90] sm:$0xff] %v321
  %406 = vst [vmem:[%s4 + $0x98] sm:$0xff] %v370
  %407 = vst [vmem:[%s4 + $0xa0] sm:$0xff] %v324
  %408 = vst [vmem:[%s4 + $0xa8] sm:$0xff] %v373
  %409 = vst [vmem:[%s4 + $0xb0] sm:$0xff] %v326
  %410 = vst [vmem:[%s4 + $0xb8] sm:$0xff] %v375
  %411 = vst [vmem:[%s4 + $0xc0] sm:$0xff] %v329
  %412 = vst [vmem:[%s4 + $0xc8] sm:$0xff] %v378
  %413 = vst [vmem:[%s4 + $0xd0] sm:$0xff] %v331
  %414 = vst [vmem:[%s4 + $0xd8] sm:$0xff] %v380
  %415 = vst [vmem:[%s4 + $0xe0] sm:$0xff] %v334
  %416 = vst [vmem:[%s4 + $0xe8] sm:$0xff] %v383
  %417 = vst [vmem:[%s4 + $0xf0] sm:$0xff] %v336
  %418 = vst [vmem:[%s4 + $0xf8] sm:$0xff] %v385
  // Predicated region
  $region18: #{generator_forward.8} parent=0 // pred_check
    _
  $region19: #{generator_forward.8} parent=0 // pred_check_branch
    %420 = sbr.rel (0) target = $region21
  $region20: #{generator_forward.8} parent=0 // pred_region
    _
  $region21: #{generator_forward.8} parent=0 // pred_fallthru
    _
  // Predicated region
  $region22: #{generator_forward.8} parent=0 // pred_check
    _
  $region23: #{generator_forward.8} parent=0 // pred_check_branch
    %422 = sbr.rel (0) target = $region25
  $region24: #{generator_forward.8} parent=0 // pred_region
    _
  $region25: #{generator_forward.8} parent=0 // pred_fallthru
    _

// kernel: generator_forward.9
$region0: #{generator_forward.9}
  #allocation0 [shape = 'u32[]', space=smem, size = 0x4, offset = 0x4, fixed_abs, tag = 'smem constant byte address 0x4 - core index']
  #allocation1 [shape = 'u32[72,128]{1,0:T(1,128)}', space=vmem, size = 0x9000, scoped, tag = 'internal scratch']
  %s0 = inlined_call_operand.vmem [shape: f32[512,16], index: 0, kind: input, shape index: {}]
  %s1 = inlined_call_operand.vmem [shape: f32[1,16], index: 1, kind: input, shape index: {}]
  %s2 = inlined_call_operand.vmem [shape: f32[1,16], index: 2, kind: input, shape index: {}]
  %s3 = inlined_call_operand.vmem [shape: bf16[16,128], index: 3, kind: input, shape index: {}]
  %s4 = inlined_call_operand.vmem [shape: f32[512,128], index: 4, kind: output, shape index: {}]
  %s5 = sld [smem:[#allocation0]]
  $region26: #{generator_forward.9} parent=0
    _
  %s7 = ssub.s32 1, %s5
  %s8 = scalar_select 0, %s7, %s5
  // Predicated region
  $region2: #{generator_forward.9} parent=0 // pred_check
    _
  $region3: #{generator_forward.9} parent=0 // pred_check_branch
    %10 = sbr.rel (0) target = $region5
  $region4: #{generator_forward.9} parent=0 // pred_region
    _
  $region5: #{generator_forward.9} parent=0 // pred_fallthru
    _
  // Predicated region
  $region6: #{generator_forward.9} parent=0 // pred_check
    _
  $region7: #{generator_forward.9} parent=0 // pred_check_branch
    %12 = sbr.rel (0) target = $region9
  $region8: #{generator_forward.9} parent=0 // pred_region
    _
  $region9: #{generator_forward.9} parent=0 // pred_fallthru
    _
  // Predicated region
  $region10: #{generator_forward.9} parent=0 // pred_check
    _
  $region11: #{generator_forward.9} parent=0 // pred_check_branch
    %14 = sbr.rel (0) target = $region13
  $region12: #{generator_forward.9} parent=0 // pred_region
    _
  $region13: #{generator_forward.9} parent=0 // pred_fallthru
    _
  // Predicated region
  $region14: #{generator_forward.9} parent=0 // pred_check
    _
  $region15: #{generator_forward.9} parent=0 // pred_check_branch
    %16 = sbr.rel (0) target = $region17
  $region16: #{generator_forward.9} parent=0 // pred_region
    _
  $region17: #{generator_forward.9} parent=0 // pred_fallthru
    _
  %v18 = vld [vmem:[%s0] sm:$0xff]
  %v19 = vld [vmem:[%s0 + $0x8] sm:$0xff]
  %v20 = vld [vmem:[%s0 + $0x10] sm:$0xff]
  %v21 = vld [vmem:[%s0 + $0x18] sm:$0xff]
  %v22 = vld [vmem:[%s0 + $0x20] sm:$0xff]
  %v23 = vld [vmem:[%s0 + $0x28] sm:$0xff]
  %v24 = vld [vmem:[%s0 + $0x30] sm:$0xff]
  %v25 = vld [vmem:[%s0 + $0x38] sm:$0xff]
  %v26 = vld [vmem:[%s0 + $0x40] sm:$0xff]
  %v27 = vld [vmem:[%s0 + $0x48] sm:$0xff]
  %v28 = vld [vmem:[%s0 + $0x50] sm:$0xff]
  %v29 = vld [vmem:[%s0 + $0x58] sm:$0xff]
  %v30 = vld [vmem:[%s0 + $0x60] sm:$0xff]
  %v31 = vld [vmem:[%s0 + $0x68] sm:$0xff]
  %v32 = vld [vmem:[%s0 + $0x70] sm:$0xff]
  %v33 = vld [vmem:[%s0 + $0x78] sm:$0xff]
  %v34 = vld [vmem:[%s0 + $0x80] sm:$0xff]
  %v35 = vld [vmem:[%s0 + $0x88] sm:$0xff]
  %v36 = vld [vmem:[%s0 + $0x90] sm:$0xff]
  %v37 = vld [vmem:[%s0 + $0x98] sm:$0xff]
  %v38 = vld [vmem:[%s0 + $0xa0] sm:$0xff]
  %v39 = vld [vmem:[%s0 + $0xa8] sm:$0xff]
  %v40 = vld [vmem:[%s0 + $0xb0] sm:$0xff]
  %v41 = vld [vmem:[%s0 + $0xb8] sm:$0xff]
  %v42 = vld [vmem:[%s0 + $0xc0] sm:$0xff]
  %v43 = vld [vmem:[%s0 + $0xc8] sm:$0xff]
  %v44 = vld [vmem:[%s0 + $0xd0] sm:$0xff]
  %v45 = vld [vmem:[%s0 + $0xd8] sm:$0xff]
  %v46 = vld [vmem:[%s0 + $0xe0] sm:$0xff]
  %v47 = vld [vmem:[%s0 + $0xe8] sm:$0xff]
  %v48 = vld [vmem:[%s0 + $0xf0] sm:$0xff]
  %v49 = vld [vmem:[%s0 + $0xf8] sm:$0xff]
  %v50 = vld [vmem:[%s0 + $0x100] sm:$0xff]
  %v51 = vld [vmem:[%s0 + $0x108] sm:$0xff]
  %v52 = vld [vmem:[%s0 + $0x110] sm:$0xff]
  %v53 = vld [vmem:[%s0 + $0x118] sm:$0xff]
  %v54 = vld [vmem:[%s0 + $0x120] sm:$0xff]
  %v55 = vld [vmem:[%s0 + $0x128] sm:$0xff]
  %v56 = vld [vmem:[%s0 + $0x130] sm:$0xff]
  %v57 = vld [vmem:[%s0 + $0x138] sm:$0xff]
  %v58 = vld [vmem:[%s0 + $0x140] sm:$0xff]
  %v59 = vld [vmem:[%s0 + $0x148] sm:$0xff]
  %v60 = vld [vmem:[%s0 + $0x150] sm:$0xff]
  %v61 = vld [vmem:[%s0 + $0x158] sm:$0xff]
  %v62 = vld [vmem:[%s0 + $0x160] sm:$0xff]
  %v63 = vld [vmem:[%s0 + $0x168] sm:$0xff]
  %v64 = vld [vmem:[%s0 + $0x170] sm:$0xff]
  %v65 = vld [vmem:[%s0 + $0x178] sm:$0xff]
  %v66 = vld [vmem:[%s0 + $0x180] sm:$0xff]
  %v67 = vld [vmem:[%s0 + $0x188] sm:$0xff]
  %v68 = vld [vmem:[%s0 + $0x190] sm:$0xff]
  %v69 = vld [vmem:[%s0 + $0x198] sm:$0xff]
  %v70 = vld [vmem:[%s0 + $0x1a0] sm:$0xff]
  %v71 = vld [vmem:[%s0 + $0x1a8] sm:$0xff]
  %v72 = vld [vmem:[%s0 + $0x1b0] sm:$0xff]
  %v73 = vld [vmem:[%s0 + $0x1b8] sm:$0xff]
  %v74 = vld [vmem:[%s0 + $0x1c0] sm:$0xff]
  %v75 = vld [vmem:[%s0 + $0x1c8] sm:$0xff]
  %v76 = vld [vmem:[%s0 + $0x1d0] sm:$0xff]
  %v77 = vld [vmem:[%s0 + $0x1d8] sm:$0xff]
  %v78 = vld [vmem:[%s0 + $0x1e0] sm:$0xff]
  %v79 = vld [vmem:[%s0 + $0x1e8] sm:$0xff]
  %v80 = vld [vmem:[%s0 + $0x1f0] sm:$0xff]
  %v81 = vld [vmem:[%s0 + $0x1f8] sm:$0xff]
  %vm82 = vcmask 130048
  %v83 = vsel %vm82, %v18, 0.0
  %v84 = vsel %vm82, %v19, 0.0
  %v85 = vadd.f32 %v83, %v84
  %v86 = vsel %vm82, %v20, 0.0
  %v87 = vadd.f32 %v85, %v86
  %v88 = vsel %vm82, %v21, 0.0
  %v89 = vadd.f32 %v87, %v88
  %v90 = vsel %vm82, %v22, 0.0
  %v91 = vadd.f32 %v89, %v90
  %v92 = vsel %vm82, %v23, 0.0
  %v93 = vadd.f32 %v91, %v92
  %v94 = vsel %vm82, %v24, 0.0
  %v95 = vadd.f32 %v93, %v94
  %v96 = vsel %vm82, %v25, 0.0
  %v97 = vadd.f32 %v95, %v96
  %v98 = vsel %vm82, %v26, 0.0
  %v99 = vadd.f32 %v97, %v98
  %v100 = vsel %vm82, %v27, 0.0
  %v101 = vadd.f32 %v99, %v100
  %v102 = vsel %vm82, %v28, 0.0
  %v103 = vadd.f32 %v101, %v102
  %v104 = vsel %vm82, %v29, 0.0
  %v105 = vadd.f32 %v103, %v104
  %v106 = vsel %vm82, %v30, 0.0
  %v107 = vadd.f32 %v105, %v106
  %v108 = vsel %vm82, %v31, 0.0
  %v109 = vadd.f32 %v107, %v108
  %v110 = vsel %vm82, %v32, 0.0
  %v111 = vadd.f32 %v109, %v110
  %v112 = vsel %vm82, %v33, 0.0
  %v113 = vadd.f32 %v111, %v112
  %v114 = vsel %vm82, %v34, 0.0
  %v115 = vadd.f32 %v113, %v114
  %v116 = vsel %vm82, %v35, 0.0
  %v117 = vadd.f32 %v115, %v116
  %v118 = vsel %vm82, %v36, 0.0
  %v119 = vadd.f32 %v117, %v118
  %v120 = vsel %vm82, %v37, 0.0
  %v121 = vadd.f32 %v119, %v120
  %v122 = vsel %vm82, %v38, 0.0
  %v123 = vadd.f32 %v121, %v122
  %v124 = vsel %vm82, %v39, 0.0
  %v125 = vadd.f32 %v123, %v124
  %v126 = vsel %vm82, %v40, 0.0
  %v127 = vadd.f32 %v125, %v126
  %v128 = vsel %vm82, %v41, 0.0
  %v129 = vadd.f32 %v127, %v128
  %v130 = vsel %vm82, %v42, 0.0
  %v131 = vadd.f32 %v129, %v130
  %v132 = vsel %vm82, %v43, 0.0
  %v133 = vadd.f32 %v131, %v132
  %v134 = vsel %vm82, %v44, 0.0
  %v135 = vadd.f32 %v133, %v134
  %v136 = vsel %vm82, %v45, 0.0
  %v137 = vadd.f32 %v135, %v136
  %v138 = vsel %vm82, %v46, 0.0
  %v139 = vadd.f32 %v137, %v138
  %v140 = vsel %vm82, %v47, 0.0
  %v141 = vadd.f32 %v139, %v140
  %v142 = vsel %vm82, %v48, 0.0
  %v143 = vadd.f32 %v141, %v142
  %v144 = vsel %vm82, %v49, 0.0
  %v145 = vadd.f32 %v143, %v144
  %v146 = vsel %vm82, %v50, 0.0
  %v147 = vadd.f32 %v145, %v146
  %v148 = vsel %vm82, %v51, 0.0
  %v149 = vadd.f32 %v147, %v148
  %v150 = vsel %vm82, %v52, 0.0
  %v151 = vadd.f32 %v149, %v150
  %v152 = vsel %vm82, %v53, 0.0
  %v153 = vadd.f32 %v151, %v152
  %v154 = vsel %vm82, %v54, 0.0
  %v155 = vadd.f32 %v153, %v154
  %v156 = vsel %vm82, %v55, 0.0
  %v157 = vadd.f32 %v155, %v156
  %v158 = vsel %vm82, %v56, 0.0
  %v159 = vadd.f32 %v157, %v158
  %v160 = vsel %vm82, %v57, 0.0
  %v161 = vadd.f32 %v159, %v160
  %v162 = vsel %vm82, %v58, 0.0
  %v163 = vadd.f32 %v161, %v162
  %v164 = vsel %vm82, %v59, 0.0
  %v165 = vadd.f32 %v163, %v164
  %v166 = vsel %vm82, %v60, 0.0
  %v167 = vadd.f32 %v165, %v166
  %v168 = vsel %vm82, %v61, 0.0
  %v169 = vadd.f32 %v167, %v168
  %v170 = vsel %vm82, %v62, 0.0
  %v171 = vadd.f32 %v169, %v170
  %v172 = vsel %vm82, %v63, 0.0
  %v173 = vadd.f32 %v171, %v172
  %v174 = vsel %vm82, %v64, 0.0
  %v175 = vadd.f32 %v173, %v174
  %v176 = vsel %vm82, %v65, 0.0
  %v177 = vadd.f32 %v175, %v176
  %v178 = vsel %vm82, %v66, 0.0
  %v179 = vadd.f32 %v177, %v178
  %v180 = vsel %vm82, %v67, 0.0
  %v181 = vadd.f32 %v179, %v180
  %v182 = vsel %vm82, %v68, 0.0
  %v183 = vadd.f32 %v181, %v182
  %v184 = vsel %vm82, %v69, 0.0
  %v185 = vadd.f32 %v183, %v184
  %v186 = vsel %vm82, %v70, 0.0
  %v187 = vadd.f32 %v185, %v186
  %v188 = vsel %vm82, %v71, 0.0
  %v189 = vadd.f32 %v187, %v188
  %v190 = vsel %vm82, %v72, 0.0
  %v191 = vadd.f32 %v189, %v190
  %v192 = vsel %vm82, %v73, 0.0
  %v193 = vadd.f32 %v191, %v192
  %v194 = vsel %vm82, %v74, 0.0
  %v195 = vadd.f32 %v193, %v194
  %v196 = vsel %vm82, %v75, 0.0
  %v197 = vadd.f32 %v195, %v196
  %v198 = vsel %vm82, %v76, 0.0
  %v199 = vadd.f32 %v197, %v198
  %v200 = vsel %vm82, %v77, 0.0
  %v201 = vadd.f32 %v199, %v200
  %v202 = vsel %vm82, %v78, 0.0
  %v203 = vadd.f32 %v201, %v202
  %v204 = vsel %vm82, %v79, 0.0
  %v205 = vadd.f32 %v203, %v204
  %v206 = vsel %vm82, %v80, 0.0
  %v207 = vadd.f32 %v205, %v206
  %v208 = vsel %vm82, %v81, 0.0
  %v209 = vadd.f32 %v207, %v208
  %v210 = vrot.slane %v209, 4
  %v211 = vadd.f32 %v209, %v210
  %v212 = vrot.slane %v211, 2
  %v213 = vadd.f32 %v211, %v212
  %v214 = vrot.slane %v213, 1
  %v215 = vadd.f32 %v213, %v214
  %v216 = vrcp.pop 512.0
  %v217 = vmul.f32 512.0, %v216
  %v218 = vsub.f32 1.0, %v217
  %v219 = vmul.f32 %v216, %v218
  %v220 = vadd.f32 %v216, %v219
  %vm221 = vweird.f32 %v216
  %v222 = vsel %vm221, %v216, %v220
  %v223 = vmul.f32 %v215, %v222
  %v224 = vsub.f32 %v18, %v223
  %v225 = vsub.f32 %v19, %v223
  %v226 = vsub.f32 %v20, %v223
  %v227 = vsub.f32 %v21, %v223
  %v228 = vsub.f32 %v22, %v223
  %v229 = vsub.f32 %v23, %v223
  %v230 = vsub.f32 %v24, %v223
  %v231 = vsub.f32 %v25, %v223
  %v232 = vsub.f32 %v26, %v223
  %v233 = vsub.f32 %v27, %v223
  %v234 = vsub.f32 %v28, %v223
  %v235 = vsub.f32 %v29, %v223
  %v236 = vsub.f32 %v30, %v223
  %v237 = vsub.f32 %v31, %v223
  %v238 = vsub.f32 %v32, %v223
  %v239 = vsub.f32 %v33, %v223
  %v240 = vsub.f32 %v34, %v223
  %v241 = vsub.f32 %v35, %v223
  %v242 = vsub.f32 %v36, %v223
  %v243 = vsub.f32 %v37, %v223
  %v244 = vsub.f32 %v38, %v223
  %v245 = vsub.f32 %v39, %v223
  %v246 = vsub.f32 %v40, %v223
  %v247 = vsub.f32 %v41, %v223
  %v248 = vsub.f32 %v42, %v223
  %v249 = vsub.f32 %v43, %v223
  %v250 = vsub.f32 %v44, %v223
  %v251 = vsub.f32 %v45, %v223
  %v252 = vsub.f32 %v46, %v223
  %v253 = vsub.f32 %v47, %v223
  %v254 = vsub.f32 %v48, %v223
  %v255 = vsub.f32 %v49, %v223
  %v256 = vsub.f32 %v50, %v223
  %v257 = vsub.f32 %v51, %v223
  %v258 = vsub.f32 %v52, %v223
  %v259 = vsub.f32 %v53, %v223
  %v260 = vsub.f32 %v54, %v223
  %v261 = vsub.f32 %v55, %v223
  %v262 = vsub.f32 %v56, %v223
  %v263 = vsub.f32 %v57, %v223
  %v264 = vsub.f32 %v58, %v223
  %v265 = vsub.f32 %v59, %v223
  %v266 = vsub.f32 %v60, %v223
  %v267 = vsub.f32 %v61, %v223
  %v268 = vsub.f32 %v62, %v223
  %v269 = vsub.f32 %v63, %v223
  %v270 = vsub.f32 %v64, %v223
  %v271 = vsub.f32 %v65, %v223
  %v272 = vsub.f32 %v66, %v223
  %v273 = vsub.f32 %v67, %v223
  %v274 = vsub.f32 %v68, %v223
  %v275 = vsub.f32 %v69, %v223
  %v276 = vsub.f32 %v70, %v223
  %v277 = vsub.f32 %v71, %v223
  %v278 = vsub.f32 %v72, %v223
  %v279 = vsub.f32 %v73, %v223
  %v280 = vsub.f32 %v74, %v223
  %v281 = vsub.f32 %v75, %v223
  %v282 = vsub.f32 %v76, %v223
  %v283 = vsub.f32 %v77, %v223
  %v284 = vsub.f32 %v78, %v223
  %v285 = vsub.f32 %v79, %v223
  %v286 = vsub.f32 %v80, %v223
  %v287 = vsub.f32 %v81, %v223
  %v288 = vmul.f32 %v224, %v224
  %v289 = vmul.f32 %v225, %v225
  %v290 = vmul.f32 %v226, %v226
  %v291 = vmul.f32 %v227, %v227
  %v292 = vmul.f32 %v228, %v228
  %v293 = vmul.f32 %v229, %v229
  %v294 = vmul.f32 %v230, %v230
  %v295 = vmul.f32 %v231, %v231
  %v296 = vmul.f32 %v232, %v232
  %v297 = vmul.f32 %v233, %v233
  %v298 = vmul.f32 %v234, %v234
  %v299 = vmul.f32 %v235, %v235
  %v300 = vmul.f32 %v236, %v236
  %v301 = vmul.f32 %v237, %v237
  %v302 = vmul.f32 %v238, %v238
  %v303 = vmul.f32 %v239, %v239
  %v304 = vmul.f32 %v240, %v240
  %v305 = vmul.f32 %v241, %v241
  %v306 = vmul.f32 %v242, %v242
  %v307 = vmul.f32 %v243, %v243
  %v308 = vmul.f32 %v244, %v244
  %v309 = vmul.f32 %v245, %v245
  %v310 = vmul.f32 %v246, %v246
  %v311 = vmul.f32 %v247, %v247
  %v312 = vmul.f32 %v248, %v248
  %v313 = vmul.f32 %v249, %v249
  %v314 = vmul.f32 %v250, %v250
  %v315 = vmul.f32 %v251, %v251
  %v316 = vmul.f32 %v252, %v252
  %v317 = vmul.f32 %v253, %v253
  %v318 = vmul.f32 %v254, %v254
  %v319 = vmul.f32 %v255, %v255
  %v320 = vmul.f32 %v256, %v256
  %v321 = vmul.f32 %v257, %v257
  %v322 = vmul.f32 %v258, %v258
  %v323 = vmul.f32 %v259, %v259
  %v324 = vmul.f32 %v260, %v260
  %v325 = vmul.f32 %v261, %v261
  %v326 = vmul.f32 %v262, %v262
  %v327 = vmul.f32 %v263, %v263
  %v328 = vmul.f32 %v264, %v264
  %v329 = vmul.f32 %v265, %v265
  %v330 = vmul.f32 %v266, %v266
  %v331 = vmul.f32 %v267, %v267
  %v332 = vmul.f32 %v268, %v268
  %v333 = vmul.f32 %v269, %v269
  %v334 = vmul.f32 %v270, %v270
  %v335 = vmul.f32 %v271, %v271
  %v336 = vmul.f32 %v272, %v272
  %v337 = vmul.f32 %v273, %v273
  %v338 = vmul.f32 %v274, %v274
  %v339 = vmul.f32 %v275, %v275
  %v340 = vmul.f32 %v276, %v276
  %v341 = vmul.f32 %v277, %v277
  %v342 = vmul.f32 %v278, %v278
  %v343 = vmul.f32 %v279, %v279
  %v344 = vmul.f32 %v280, %v280
  %v345 = vmul.f32 %v281, %v281
  %v346 = vmul.f32 %v282, %v282
  %v347 = vmul.f32 %v283, %v283
  %v348 = vmul.f32 %v284, %v284
  %v349 = vmul.f32 %v285, %v285
  %v350 = vmul.f32 %v286, %v286
  %v351 = vmul.f32 %v287, %v287
  %v352 = vsel %vm82, %v288, 0.0
  %v353 = vsel %vm82, %v289, 0.0
  %v354 = vadd.f32 %v352, %v353
  %v355 = vsel %vm82, %v290, 0.0
  %v356 = vadd.f32 %v354, %v355
  %v357 = vsel %vm82, %v291, 0.0
  %v358 = vadd.f32 %v356, %v357
  %v359 = vsel %vm82, %v292, 0.0
  %v360 = vadd.f32 %v358, %v359
  %v361 = vsel %vm82, %v293, 0.0
  %v362 = vadd.f32 %v360, %v361
  %v363 = vsel %vm82, %v294, 0.0
  %v364 = vadd.f32 %v362, %v363
  %v365 = vsel %vm82, %v295, 0.0
  %v366 = vadd.f32 %v364, %v365
  %v367 = vsel %vm82, %v296, 0.0
  %v368 = vadd.f32 %v366, %v367
  %v369 = vsel %vm82, %v297, 0.0
  %v370 = vadd.f32 %v368, %v369
  %v371 = vsel %vm82, %v298, 0.0
  %v372 = vadd.f32 %v370, %v371
  %v373 = vsel %vm82, %v299, 0.0
  %v374 = vadd.f32 %v372, %v373
  %v375 = vsel %vm82, %v300, 0.0
  %v376 = vadd.f32 %v374, %v375
  %v377 = vsel %vm82, %v301, 0.0
  %v378 = vadd.f32 %v376, %v377
  %v379 = vsel %vm82, %v302, 0.0
  %v380 = vadd.f32 %v378, %v379
  %v381 = vsel %vm82, %v303, 0.0
  %v382 = vadd.f32 %v380, %v381
  %v383 = vsel %vm82, %v304, 0.0
  %v384 = vadd.f32 %v382, %v383
  %v385 = vsel %vm82, %v305, 0.0
  %v386 = vadd.f32 %v384, %v385
  %v387 = vsel %vm82, %v306, 0.0
  %v388 = vadd.f32 %v386, %v387
  %v389 = vsel %vm82, %v307, 0.0
  %v390 = vadd.f32 %v388, %v389
  %v391 = vsel %vm82, %v308, 0.0
  %v392 = vadd.f32 %v390, %v391
  %v393 = vsel %vm82, %v309, 0.0
  %v394 = vadd.f32 %v392, %v393
  %v395 = vsel %vm82, %v310, 0.0
  %v396 = vadd.f32 %v394, %v395
  %v397 = vsel %vm82, %v311, 0.0
  %v398 = vadd.f32 %v396, %v397
  %v399 = vsel %vm82, %v312, 0.0
  %v400 = vadd.f32 %v398, %v399
  %v401 = vsel %vm82, %v313, 0.0
  %v402 = vadd.f32 %v400, %v401
  %v403 = vsel %vm82, %v314, 0.0
  %v404 = vadd.f32 %v402, %v403
  %v405 = vsel %vm82, %v315, 0.0
  %v406 = vadd.f32 %v404, %v405
  %v407 = vsel %vm82, %v316, 0.0
  %v408 = vadd.f32 %v406, %v407
  %v409 = vsel %vm82, %v317, 0.0
  %v410 = vadd.f32 %v408, %v409
  %v411 = vsel %vm82, %v318, 0.0
  %v412 = vadd.f32 %v410, %v411
  %v413 = vsel %vm82, %v319, 0.0
  %v414 = vadd.f32 %v412, %v413
  %v415 = vsel %vm82, %v320, 0.0
  %v416 = vadd.f32 %v414, %v415
  %v417 = vsel %vm82, %v321, 0.0
  %v418 = vadd.f32 %v416, %v417
  %v419 = vsel %vm82, %v322, 0.0
  %v420 = vadd.f32 %v418, %v419
  %v421 = vsel %vm82, %v323, 0.0
  %v422 = vadd.f32 %v420, %v421
  %v423 = vsel %vm82, %v324, 0.0
  %v424 = vadd.f32 %v422, %v423
  %v425 = vsel %vm82, %v325, 0.0
  %v426 = vadd.f32 %v424, %v425
  %v427 = vsel %vm82, %v326, 0.0
  %v428 = vadd.f32 %v426, %v427
  %v429 = vsel %vm82, %v327, 0.0
  %v430 = vadd.f32 %v428, %v429
  %v431 = vsel %vm82, %v328, 0.0
  %v432 = vadd.f32 %v430, %v431
  %v433 = vsel %vm82, %v329, 0.0
  %v434 = vadd.f32 %v432, %v433
  %v435 = vsel %vm82, %v330, 0.0
  %v436 = vadd.f32 %v434, %v435
  %v437 = vsel %vm82, %v331, 0.0
  %v438 = vadd.f32 %v436, %v437
  %v439 = vsel %vm82, %v332, 0.0
  %v440 = vadd.f32 %v438, %v439
  %v441 = vsel %vm82, %v333, 0.0
  %v442 = vadd.f32 %v440, %v441
  %v443 = vsel %vm82, %v334, 0.0
  %v444 = vadd.f32 %v442, %v443
  %v445 = vsel %vm82, %v335, 0.0
  %v446 = vadd.f32 %v444, %v445
  %v447 = vsel %vm82, %v336, 0.0
  %v448 = vadd.f32 %v446, %v447
  %v449 = vsel %vm82, %v337, 0.0
  %v450 = vadd.f32 %v448, %v449
  %v451 = vsel %vm82, %v338, 0.0
  %v452 = vadd.f32 %v450, %v451
  %v453 = vsel %vm82, %v339, 0.0
  %v454 = vadd.f32 %v452, %v453
  %v455 = vsel %vm82, %v340, 0.0
  %v456 = vadd.f32 %v454, %v455
  %v457 = vsel %vm82, %v341, 0.0
  %v458 = vadd.f32 %v456, %v457
  %v459 = vsel %vm82, %v342, 0.0
  %v460 = vadd.f32 %v458, %v459
  %v461 = vsel %vm82, %v343, 0.0
  %v462 = vadd.f32 %v460, %v461
  %v463 = vsel %vm82, %v344, 0.0
  %v464 = vadd.f32 %v462, %v463
  %v465 = vsel %vm82, %v345, 0.0
  %v466 = vadd.f32 %v464, %v465
  %v467 = vsel %vm82, %v346, 0.0
  %v468 = vadd.f32 %v466, %v467
  %v469 = vsel %vm82, %v347, 0.0
  %v470 = vadd.f32 %v468, %v469
  %v471 = vsel %vm82, %v348, 0.0
  %v472 = vadd.f32 %v470, %v471
  %v473 = vsel %vm82, %v349, 0.0
  %v474 = vadd.f32 %v472, %v473
  %v475 = vsel %vm82, %v350, 0.0
  %v476 = vadd.f32 %v474, %v475
  %v477 = vsel %vm82, %v351, 0.0
  %v478 = vadd.f32 %v476, %v477
  %v479 = vrot.slane %v478, 4
  %v480 = vadd.f32 %v478, %v479
  %v481 = vrot.slane %v480, 2
  %v482 = vadd.f32 %v480, %v481
  %v483 = vrot.slane %v482, 1
  %v484 = vadd.f32 %v482, %v483
  %v485 = vmul.f32 %v484, %v222
  %v486 = vadd.f32 %v485, 1e-05
  %v487 = vrsqrt.pop %v486
  %v488 = vmul.f32 %v487, %v486
  %v489 = vmul.f32 %v488, %v487
  %v490 = vmul.f32 0.5, %v489
  %v491 = vsub.f32 1.5, %v490
  %v492 = vmul.f32 %v487, %v491
  %vm493 = vweird.f32 %v486
  %vm494 = vweird.f32 %v487
  %vm495 = vmor %vm493, %vm494
  %v496 = vsel %vm495, %v487, %v492
  %v497 = vmul.f32 %v224, %v496
  %v498 = vmul.f32 %v225, %v496
  %v499 = vmul.f32 %v226, %v496
  %v500 = vmul.f32 %v227, %v496
  %v501 = vmul.f32 %v228, %v496
  %v502 = vmul.f32 %v229, %v496
  %v503 = vmul.f32 %v230, %v496
  %v504 = vmul.f32 %v231, %v496
  %v505 = vmul.f32 %v232, %v496
  %v506 = vmul.f32 %v233, %v496
  %v507 = vmul.f32 %v234, %v496
  %v508 = vmul.f32 %v235, %v496
  %v509 = vmul.f32 %v236, %v496
  %v510 = vmul.f32 %v237, %v496
  %v511 = vmul.f32 %v238, %v496
  %v512 = vmul.f32 %v239, %v496
  %v513 = vmul.f32 %v240, %v496
  %v514 = vmul.f32 %v241, %v496
  %v515 = vmul.f32 %v242, %v496
  %v516 = vmul.f32 %v243, %v496
  %v517 = vmul.f32 %v244, %v496
  %v518 = vmul.f32 %v245, %v496
  %v519 = vmul.f32 %v246, %v496
  %v520 = vmul.f32 %v247, %v496
  %v521 = vmul.f32 %v248, %v496
  %v522 = vmul.f32 %v249, %v496
  %v523 = vmul.f32 %v250, %v496
  %v524 = vmul.f32 %v251, %v496
  %v525 = vmul.f32 %v252, %v496
  %v526 = vmul.f32 %v253, %v496
  %v527 = vmul.f32 %v254, %v496
  %v528 = vmul.f32 %v255, %v496
  %v529 = vmul.f32 %v256, %v496
  %v530 = vmul.f32 %v257, %v496
  %v531 = vmul.f32 %v258, %v496
  %v532 = vmul.f32 %v259, %v496
  %v533 = vmul.f32 %v260, %v496
  %v534 = vmul.f32 %v261, %v496
  %v535 = vmul.f32 %v262, %v496
  %v536 = vmul.f32 %v263, %v496
  %v537 = vmul.f32 %v264, %v496
  %v538 = vmul.f32 %v265, %v496
  %v539 = vmul.f32 %v266, %v496
  %v540 = vmul.f32 %v267, %v496
  %v541 = vmul.f32 %v268, %v496
  %v542 = vmul.f32 %v269, %v496
  %v543 = vmul.f32 %v270, %v496
  %v544 = vmul.f32 %v271, %v496
  %v545 = vmul.f32 %v272, %v496
  %v546 = vmul.f32 %v273, %v496
  %v547 = vmul.f32 %v274, %v496
  %v548 = vmul.f32 %v275, %v496
  %v549 = vmul.f32 %v276, %v496
  %v550 = vmul.f32 %v277, %v496
  %v551 = vmul.f32 %v278, %v496
  %v552 = vmul.f32 %v279, %v496
  %v553 = vmul.f32 %v280, %v496
  %v554 = vmul.f32 %v281, %v496
  %v555 = vmul.f32 %v282, %v496
  %v556 = vmul.f32 %v283, %v496
  %v557 = vmul.f32 %v284, %v496
  %v558 = vmul.f32 %v285, %v496
  %v559 = vmul.f32 %v286, %v496
  %v560 = vmul.f32 %v287, %v496
  %v561 = vld [vmem:[%s1] sm:$0x1]
  %v563 = vperm.slane %v561, 0
  %v565 = vmul.f32 %v497, %v563
  %v566 = vmul.f32 %v498, %v563
  %v567 = vmul.f32 %v499, %v563
  %v568 = vmul.f32 %v500, %v563
  %v569 = vmul.f32 %v501, %v563
  %v570 = vmul.f32 %v502, %v563
  %v571 = vmul.f32 %v503, %v563
  %v572 = vmul.f32 %v504, %v563
  %v573 = vmul.f32 %v505, %v563
  %v574 = vmul.f32 %v506, %v563
  %v575 = vmul.f32 %v507, %v563
  %v576 = vmul.f32 %v508, %v563
  %v577 = vmul.f32 %v509, %v563
  %v578 = vmul.f32 %v510, %v563
  %v579 = vmul.f32 %v511, %v563
  %v580 = vmul.f32 %v512, %v563
  %v581 = vmul.f32 %v513, %v563
  %v582 = vmul.f32 %v514, %v563
  %v583 = vmul.f32 %v515, %v563
  %v584 = vmul.f32 %v516, %v563
  %v585 = vmul.f32 %v517, %v563
  %v586 = vmul.f32 %v518, %v563
  %v587 = vmul.f32 %v519, %v563
  %v588 = vmul.f32 %v520, %v563
  %v589 = vmul.f32 %v521, %v563
  %v590 = vmul.f32 %v522, %v563
  %v591 = vmul.f32 %v523, %v563
  %v592 = vmul.f32 %v524, %v563
  %v593 = vmul.f32 %v525, %v563
  %v594 = vmul.f32 %v526, %v563
  %v595 = vmul.f32 %v527, %v563
  %v596 = vmul.f32 %v528, %v563
  %v597 = vmul.f32 %v529, %v563
  %v598 = vmul.f32 %v530, %v563
  %v599 = vmul.f32 %v531, %v563
  %v600 = vmul.f32 %v532, %v563
  %v601 = vmul.f32 %v533, %v563
  %v602 = vmul.f32 %v534, %v563
  %v603 = vmul.f32 %v535, %v563
  %v604 = vmul.f32 %v536, %v563
  %v605 = vmul.f32 %v537, %v563
  %v606 = vmul.f32 %v538, %v563
  %v607 = vmul.f32 %v539, %v563
  %v608 = vmul.f32 %v540, %v563
  %v609 = vmul.f32 %v541, %v563
  %v610 = vmul.f32 %v542, %v563
  %v611 = vmul.f32 %v543, %v563
  %v612 = vmul.f32 %v544, %v563
  %v613 = vmul.f32 %v545, %v563
  %v614 = vmul.f32 %v546, %v563
  %v615 = vmul.f32 %v547, %v563
  %v616 = vmul.f32 %v548, %v563
  %v617 = vmul.f32 %v549, %v563
  %v618 = vmul.f32 %v550, %v563
  %v619 = vmul.f32 %v551, %v563
  %v620 = vmul.f32 %v552, %v563
  %v621 = vmul.f32 %v553, %v563
  %v622 = vmul.f32 %v554, %v563
  %v623 = vmul.f32 %v555, %v563
  %v624 = vmul.f32 %v556, %v563
  %v625 = vmul.f32 %v557, %v563
  %v626 = vmul.f32 %v558, %v563
  %v627 = vmul.f32 %v559, %v563
  %v628 = vmul.f32 %v560, %v563
  %v629 = vld [vmem:[%s2] sm:$0x1]
  %v631 = vperm.slane %v629, 0
  %v633 = vadd.f32 %v565, %v631
  %v634 = vadd.f32 %v566, %v631
  %v635 = vadd.f32 %v567, %v631
  %v636 = vadd.f32 %v568, %v631
  %v637 = vadd.f32 %v569, %v631
  %v638 = vadd.f32 %v570, %v631
  %v639 = vadd.f32 %v571, %v631
  %v640 = vadd.f32 %v572, %v631
  %v641 = vadd.f32 %v573, %v631
  %v642 = vadd.f32 %v574, %v631
  %v643 = vadd.f32 %v575, %v631
  %v644 = vadd.f32 %v576, %v631
  %v645 = vadd.f32 %v577, %v631
  %v646 = vadd.f32 %v578, %v631
  %v647 = vadd.f32 %v579, %v631
  %v648 = vadd.f32 %v580, %v631
  %v649 = vadd.f32 %v581, %v631
  %v650 = vadd.f32 %v582, %v631
  %v651 = vadd.f32 %v583, %v631
  %v652 = vadd.f32 %v584, %v631
  %v653 = vadd.f32 %v585, %v631
  %v654 = vadd.f32 %v586, %v631
  %v655 = vadd.f32 %v587, %v631
  %v656 = vadd.f32 %v588, %v631
  %v657 = vadd.f32 %v589, %v631
  %v658 = vadd.f32 %v590, %v631
  %v659 = vadd.f32 %v591, %v631
  %v660 = vadd.f32 %v592, %v631
  %v661 = vadd.f32 %v593, %v631
  %v662 = vadd.f32 %v594, %v631
  %v663 = vadd.f32 %v595, %v631
  %v664 = vadd.f32 %v596, %v631
  %v665 = vadd.f32 %v597, %v631
  %v666 = vadd.f32 %v598, %v631
  %v667 = vadd.f32 %v599, %v631
  %v668 = vadd.f32 %v600, %v631
  %v669 = vadd.f32 %v601, %v631
  %v670 = vadd.f32 %v602, %v631
  %v671 = vadd.f32 %v603, %v631
  %v672 = vadd.f32 %v604, %v631
  %v673 = vadd.f32 %v605, %v631
  %v674 = vadd.f32 %v606, %v631
  %v675 = vadd.f32 %v607, %v631
  %v676 = vadd.f32 %v608, %v631
  %v677 = vadd.f32 %v609, %v631
  %v678 = vadd.f32 %v610, %v631
  %v679 = vadd.f32 %v611, %v631
  %v680 = vadd.f32 %v612, %v631
  %v681 = vadd.f32 %v613, %v631
  %v682 = vadd.f32 %v614, %v631
  %v683 = vadd.f32 %v615, %v631
  %v684 = vadd.f32 %v616, %v631
  %v685 = vadd.f32 %v617, %v631
  %v686 = vadd.f32 %v618, %v631
  %v687 = vadd.f32 %v619, %v631
  %v688 = vadd.f32 %v620, %v631
  %v689 = vadd.f32 %v621, %v631
  %v690 = vadd.f32 %v622, %v631
  %v691 = vadd.f32 %v623, %v631
  %v692 = vadd.f32 %v624, %v631
  %v693 = vadd.f32 %v625, %v631
  %v694 = vadd.f32 %v626, %v631
  %v695 = vadd.f32 %v627, %v631
  %v696 = vadd.f32 %v628, %v631
  %v697 = vmax.f32 %v633, 0.0
  %v698 = vmax.f32 %v634, 0.0
  %v699 = vmax.f32 %v635, 0.0
  %v700 = vmax.f32 %v636, 0.0
  %v701 = vmax.f32 %v637, 0.0
  %v702 = vmax.f32 %v638, 0.0
  %v703 = vmax.f32 %v639, 0.0
  %v704 = vmax.f32 %v640, 0.0
  %v705 = vmax.f32 %v641, 0.0
  %v706 = vmax.f32 %v642, 0.0
  %v707 = vmax.f32 %v643, 0.0
  %v708 = vmax.f32 %v644, 0.0
  %v709 = vmax.f32 %v645, 0.0
  %v710 = vmax.f32 %v646, 0.0
  %v711 = vmax.f32 %v647, 0.0
  %v712 = vmax.f32 %v648, 0.0
  %v713 = vmax.f32 %v649, 0.0
  %v714 = vmax.f32 %v650, 0.0
  %v715 = vmax.f32 %v651, 0.0
  %v716 = vmax.f32 %v652, 0.0
  %v717 = vmax.f32 %v653, 0.0
  %v718 = vmax.f32 %v654, 0.0
  %v719 = vmax.f32 %v655, 0.0
  %v720 = vmax.f32 %v656, 0.0
  %v721 = vmax.f32 %v657, 0.0
  %v722 = vmax.f32 %v658, 0.0
  %v723 = vmax.f32 %v659, 0.0
  %v724 = vmax.f32 %v660, 0.0
  %v725 = vmax.f32 %v661, 0.0
  %v726 = vmax.f32 %v662, 0.0
  %v727 = vmax.f32 %v663, 0.0
  %v728 = vmax.f32 %v664, 0.0
  %v729 = vmax.f32 %v665, 0.0
  %v730 = vmax.f32 %v666, 0.0
  %v731 = vmax.f32 %v667, 0.0
  %v732 = vmax.f32 %v668, 0.0
  %v733 = vmax.f32 %v669, 0.0
  %v734 = vmax.f32 %v670, 0.0
  %v735 = vmax.f32 %v671, 0.0
  %v736 = vmax.f32 %v672, 0.0
  %v737 = vmax.f32 %v673, 0.0
  %v738 = vmax.f32 %v674, 0.0
  %v739 = vmax.f32 %v675, 0.0
  %v740 = vmax.f32 %v676, 0.0
  %v741 = vmax.f32 %v677, 0.0
  %v742 = vmax.f32 %v678, 0.0
  %v743 = vmax.f32 %v679, 0.0
  %v744 = vmax.f32 %v680, 0.0
  %v745 = vmax.f32 %v681, 0.0
  %v746 = vmax.f32 %v682, 0.0
  %v747 = vmax.f32 %v683, 0.0
  %v748 = vmax.f32 %v684, 0.0
  %v749 = vmax.f32 %v685, 0.0
  %v750 = vmax.f32 %v686, 0.0
  %v751 = vmax.f32 %v687, 0.0
  %v752 = vmax.f32 %v688, 0.0
  %v753 = vmax.f32 %v689, 0.0
  %v754 = vmax.f32 %v690, 0.0
  %v755 = vmax.f32 %v691, 0.0
  %v756 = vmax.f32 %v692, 0.0
  %v757 = vmax.f32 %v693, 0.0
  %v758 = vmax.f32 %v694, 0.0
  %v759 = vmax.f32 %v695, 0.0
  %v760 = vmax.f32 %v696, 0.0
  %v761 = vpack.c.bf16 %v698, %v697
  %v762 = vpack.c.bf16 %v700, %v699
  %v763 = vpack.c.bf16 %v702, %v701
  %v764 = vpack.c.bf16 %v704, %v703
  %v765 = vpack.c.bf16 %v706, %v705
  %v766 = vpack.c.bf16 %v708, %v707
  %v767 = vpack.c.bf16 %v710, %v709
  %v768 = vpack.c.bf16 %v712, %v711
  %v769 = vpack.c.bf16 %v714, %v713
  %v770 = vpack.c.bf16 %v716, %v715
  %v771 = vpack.c.bf16 %v718, %v717
  %v772 = vpack.c.bf16 %v720, %v719
  %v773 = vpack.c.bf16 %v722, %v721
  %v774 = vpack.c.bf16 %v724, %v723
  %v775 = vpack.c.bf16 %v726, %v725
  %v776 = vpack.c.bf16 %v728, %v727
  %v777 = vpack.c.bf16 %v730, %v729
  %v778 = vpack.c.bf16 %v732, %v731
  %v779 = vpack.c.bf16 %v734, %v733
  %v780 = vpack.c.bf16 %v736, %v735
  %v781 = vpack.c.bf16 %v738, %v737
  %v782 = vpack.c.bf16 %v740, %v739
  %v783 = vpack.c.bf16 %v742, %v741
  %v784 = vpack.c.bf16 %v744, %v743
  %v785 = vpack.c.bf16 %v746, %v745
  %v786 = vpack.c.bf16 %v748, %v747
  %v787 = vpack.c.bf16 %v750, %v749
  %v788 = vpack.c.bf16 %v752, %v751
  %v789 = vpack.c.bf16 %v754, %v753
  %v790 = vpack.c.bf16 %v756, %v755
  %v791 = vpack.c.bf16 %v758, %v757
  %v792 = vpack.c.bf16 %v760, %v759
  %v793 = vld [vmem:[%s3] sm:$0xf]
  %v794 = vld [vmem:[%s3 + $0x4] sm:$0xf]
  %v797 = vunpack.c.l.b16 %v793
  %v798 = vunpack.c.l.b16 %v794
  %v799 = vpack.c.b16 %v798, %v797
  %v802 = vsel %vm82, %v761, 0
  %v805 = vsel %vm82, %v762, 0
  %v808 = vsel %vm82, %v763, 0
  %v811 = vsel %vm82, %v764, 0
  %v814 = vsel %vm82, %v765, 0
  %v817 = vsel %vm82, %v766, 0
  %v820 = vsel %vm82, %v767, 0
  %v823 = vsel %vm82, %v768, 0
  %v826 = vsel %vm82, %v769, 0
  %v829 = vsel %vm82, %v770, 0
  %v832 = vsel %vm82, %v771, 0
  %v835 = vsel %vm82, %v772, 0
  %v838 = vsel %vm82, %v773, 0
  %v841 = vsel %vm82, %v774, 0
  %v844 = vsel %vm82, %v775, 0
  %v847 = vsel %vm82, %v776, 0
  %v850 = vsel %vm82, %v777, 0
  %v853 = vsel %vm82, %v778, 0
  %v856 = vsel %vm82, %v779, 0
  %v859 = vsel %vm82, %v780, 0
  %v862 = vsel %vm82, %v781, 0
  %v865 = vsel %vm82, %v782, 0
  %v868 = vsel %vm82, %v783, 0
  %v871 = vsel %vm82, %v784, 0
  %v874 = vsel %vm82, %v785, 0
  %v877 = vsel %vm82, %v786, 0
  %v880 = vsel %vm82, %v787, 0
  %v883 = vsel %vm82, %v788, 0
  %v886 = vsel %vm82, %v789, 0
  %v889 = vsel %vm82, %v790, 0
  %v892 = vsel %vm82, %v791, 0
  %v895 = vsel %vm82, %v792, 0
  %897 = vmatpush.bf16.msra.mxu0 0
  %898 = vmatpush.bf16.msra.mxu0 0
  %899 = vmatpush.bf16.msra.mxu0 0
  %900 = vmatpush.bf16.msra.mxu0 0
  %901 = vmatpush.bf16.msra.mxu0 0
  %902 = vmatpush.bf16.msra.mxu0 0
  %903 = vmatpush.bf16.msra.mxu0 0
  %904 = vmatpush.bf16.msra.mxu0 %v799
  %905 = vmatmul.bf16.gmra.mxu0 %v802
  %v906 = vpop.f32.mrf.mxu0
  %v907 = vadd.f32 0.0, %v906
  %v908 = vpop.f32.mrf.mxu0
  %v909 = vadd.f32 0.0, %v908
  %910 = vmatmul.bf16.gmra.mxu0 %v805
  %v911 = vpop.f32.mrf.mxu0
  %v912 = vadd.f32 0.0, %v911
  %v913 = vpop.f32.mrf.mxu0
  %v914 = vadd.f32 0.0, %v913
  %915 = vmatmul.bf16.gmra.mxu0 %v808
  %v916 = vpop.f32.mrf.mxu0
  %v917 = vadd.f32 0.0, %v916
  %v918 = vpop.f32.mrf.mxu0
  %v919 = vadd.f32 0.0, %v918
  %920 = vmatmul.bf16.gmra.mxu0 %v811
  %v921 = vpop.f32.mrf.mxu0
  %v922 = vadd.f32 0.0, %v921
  %v923 = vpop.f32.mrf.mxu0
  %v924 = vadd.f32 0.0, %v923
  %925 = vmatmul.bf16.gmra.mxu0 %v814
  %v926 = vpop.f32.mrf.mxu0
  %v927 = vadd.f32 0.0, %v926
  %v928 = vpop.f32.mrf.mxu0
  %v929 = vadd.f32 0.0, %v928
  %930 = vmatmul.bf16.gmra.mxu0 %v817
  %v931 = vpop.f32.mrf.mxu0
  %v932 = vadd.f32 0.0, %v931
  %v933 = vpop.f32.mrf.mxu0
  %v934 = vadd.f32 0.0, %v933
  %935 = vmatmul.bf16.gmra.mxu0 %v820
  %v936 = vpop.f32.mrf.mxu0
  %v937 = vadd.f32 0.0, %v936
  %v938 = vpop.f32.mrf.mxu0
  %v939 = vadd.f32 0.0, %v938
  %940 = vmatmul.bf16.gmra.mxu0 %v823
  %v941 = vpop.f32.mrf.mxu0
  %v942 = vadd.f32 0.0, %v941
  %v943 = vpop.f32.mrf.mxu0
  %v944 = vadd.f32 0.0, %v943
  %945 = vmatmul.bf16.gmra.mxu0 %v826
  %v946 = vpop.f32.mrf.mxu0
  %v947 = vadd.f32 0.0, %v946
  %v948 = vpop.f32.mrf.mxu0
  %v949 = vadd.f32 0.0, %v948
  %950 = vmatmul.bf16.gmra.mxu0 %v829
  %v951 = vpop.f32.mrf.mxu0
  %v952 = vadd.f32 0.0, %v951
  %v953 = vpop.f32.mrf.mxu0
  %v954 = vadd.f32 0.0, %v953
  %955 = vmatmul.bf16.gmra.mxu0 %v832
  %v956 = vpop.f32.mrf.mxu0
  %v957 = vadd.f32 0.0, %v956
  %v958 = vpop.f32.mrf.mxu0
  %v959 = vadd.f32 0.0, %v958
  %960 = vmatmul.bf16.gmra.mxu0 %v835
  %v961 = vpop.f32.mrf.mxu0
  %v962 = vadd.f32 0.0, %v961
  %v963 = vpop.f32.mrf.mxu0
  %v964 = vadd.f32 0.0, %v963
  %965 = vmatmul.bf16.gmra.mxu0 %v838
  %v966 = vpop.f32.mrf.mxu0
  %v967 = vadd.f32 0.0, %v966
  %v968 = vpop.f32.mrf.mxu0
  %v969 = vadd.f32 0.0, %v968
  %970 = vmatmul.bf16.gmra.mxu0 %v841
  %v971 = vpop.f32.mrf.mxu0
  %v972 = vadd.f32 0.0, %v971
  %v973 = vpop.f32.mrf.mxu0
  %v974 = vadd.f32 0.0, %v973
  %975 = vmatmul.bf16.gmra.mxu0 %v844
  %v976 = vpop.f32.mrf.mxu0
  %v977 = vadd.f32 0.0, %v976
  %v978 = vpop.f32.mrf.mxu0
  %v979 = vadd.f32 0.0, %v978
  %980 = vmatmul.bf16.gmra.mxu0 %v847
  %v981 = vpop.f32.mrf.mxu0
  %v982 = vadd.f32 0.0, %v981
  %v983 = vpop.f32.mrf.mxu0
  %v984 = vadd.f32 0.0, %v983
  %985 = vmatmul.bf16.gmra.mxu0 %v850
  %v986 = vpop.f32.mrf.mxu0
  %v987 = vadd.f32 0.0, %v986
  %v988 = vpop.f32.mrf.mxu0
  %v989 = vadd.f32 0.0, %v988
  %990 = vmatmul.bf16.gmra.mxu0 %v853
  %v991 = vpop.f32.mrf.mxu0
  %v992 = vadd.f32 0.0, %v991
  %v993 = vpop.f32.mrf.mxu0
  %v994 = vadd.f32 0.0, %v993
  %995 = vmatmul.bf16.gmra.mxu0 %v856
  %v996 = vpop.f32.mrf.mxu0
  %v997 = vadd.f32 0.0, %v996
  %v998 = vpop.f32.mrf.mxu0
  %v999 = vadd.f32 0.0, %v998
  %1000 = vmatmul.bf16.gmra.mxu0 %v859
  %v1001 = vpop.f32.mrf.mxu0
  %v1002 = vadd.f32 0.0, %v1001
  %v1003 = vpop.f32.mrf.mxu0
  %v1004 = vadd.f32 0.0, %v1003
  %1005 = vmatmul.bf16.gmra.mxu0 %v862
  %v1006 = vpop.f32.mrf.mxu0
  %v1007 = vadd.f32 0.0, %v1006
  %v1008 = vpop.f32.mrf.mxu0
  %v1009 = vadd.f32 0.0, %v1008
  %1010 = vmatmul.bf16.gmra.mxu0 %v865
  %v1011 = vpop.f32.mrf.mxu0
  %v1012 = vadd.f32 0.0, %v1011
  %v1013 = vpop.f32.mrf.mxu0
  %v1014 = vadd.f32 0.0, %v1013
  %1015 = vmatmul.bf16.gmra.mxu0 %v868
  %v1016 = vpop.f32.mrf.mxu0
  %v1017 = vadd.f32 0.0, %v1016
  %v1018 = vpop.f32.mrf.mxu0
  %v1019 = vadd.f32 0.0, %v1018
  %1020 = vmatmul.bf16.gmra.mxu0 %v871
  %v1021 = vpop.f32.mrf.mxu0
  %v1022 = vadd.f32 0.0, %v1021
  %v1023 = vpop.f32.mrf.mxu0
  %v1024 = vadd.f32 0.0, %v1023
  %1025 = vmatmul.bf16.gmra.mxu0 %v874
  %v1026 = vpop.f32.mrf.mxu0
  %v1027 = vadd.f32 0.0, %v1026
  %v1028 = vpop.f32.mrf.mxu0
  %v1029 = vadd.f32 0.0, %v1028
  %1030 = vmatmul.bf16.gmra.mxu0 %v877
  %v1031 = vpop.f32.mrf.mxu0
  %v1032 = vadd.f32 0.0, %v1031
  %v1033 = vpop.f32.mrf.mxu0
  %v1034 = vadd.f32 0.0, %v1033
  %1035 = vmatmul.bf16.gmra.mxu0 %v880
  %v1036 = vpop.f32.mrf.mxu0
  %v1037 = vadd.f32 0.0, %v1036
  %v1038 = vpop.f32.mrf.mxu0
  %v1039 = vadd.f32 0.0, %v1038
  %1040 = vmatmul.bf16.gmra.mxu0 %v883
  %v1041 = vpop.f32.mrf.mxu0
  %v1042 = vadd.f32 0.0, %v1041
  %v1043 = vpop.f32.mrf.mxu0
  %v1044 = vadd.f32 0.0, %v1043
  %1045 = vmatmul.bf16.gmra.mxu0 %v886
  %v1046 = vpop.f32.mrf.mxu0
  %v1047 = vadd.f32 0.0, %v1046
  %v1048 = vpop.f32.mrf.mxu0
  %v1049 = vadd.f32 0.0, %v1048
  %1050 = vmatmul.bf16.gmra.mxu0 %v889
  %v1051 = vpop.f32.mrf.mxu0
  %v1052 = vadd.f32 0.0, %v1051
  %v1053 = vpop.f32.mrf.mxu0
  %v1054 = vadd.f32 0.0, %v1053
  %1055 = vmatmul.bf16.gmra.mxu0 %v892
  %v1056 = vpop.f32.mrf.mxu0
  %v1057 = vadd.f32 0.0, %v1056
  %v1058 = vpop.f32.mrf.mxu0
  %v1059 = vadd.f32 0.0, %v1058
  %1060 = vmatmul.bf16.gmra.mxu0 %v895
  %v1061 = vpop.f32.mrf.mxu0
  %v1062 = vadd.f32 0.0, %v1061
  %v1063 = vpop.f32.mrf.mxu0
  %v1064 = vadd.f32 0.0, %v1063
  %1065 = vdwg.mxu0
  %1066 = vst [vmem:[%s4] sm:$0xff] %v907
  %1067 = vst [vmem:[%s4 + $0x8] sm:$0xff] %v909
  %1068 = vst [vmem:[%s4 + $0x10] sm:$0xff] %v912
  %1069 = vst [vmem:[%s4 + $0x18] sm:$0xff] %v914
  %1070 = vst [vmem:[%s4 + $0x20] sm:$0xff] %v917
  %1071 = vst [vmem:[%s4 + $0x28] sm:$0xff] %v919
  %1072 = vst [vmem:[%s4 + $0x30] sm:$0xff] %v922
  %1073 = vst [vmem:[%s4 + $0x38] sm:$0xff] %v924
  %1074 = vst [vmem:[%s4 + $0x40] sm:$0xff] %v927
  %1075 = vst [vmem:[%s4 + $0x48] sm:$0xff] %v929
  %1076 = vst [vmem:[%s4 + $0x50] sm:$0xff] %v932
  %1077 = vst [vmem:[%s4 + $0x58] sm:$0xff] %v934
  %1078 = vst [vmem:[%s4 + $0x60] sm:$0xff] %v937
  %1079 = vst [vmem:[%s4 + $0x68] sm:$0xff] %v939
  %1080 = vst [vmem:[%s4 + $0x70] sm:$0xff] %v942
  %1081 = vst [vmem:[%s4 + $0x78] sm:$0xff] %v944
  %1082 = vst [vmem:[%s4 + $0x80] sm:$0xff] %v947
  %1083 = vst [vmem:[%s4 + $0x88] sm:$0xff] %v949
  %1084 = vst [vmem:[%s4 + $0x90] sm:$0xff] %v952
  %1085 = vst [vmem:[%s4 + $0x98] sm:$0xff] %v954
  %1086 = vst [vmem:[%s4 + $0xa0] sm:$0xff] %v957
  %1087 = vst [vmem:[%s4 + $0xa8] sm:$0xff] %v959
  %1088 = vst [vmem:[%s4 + $0xb0] sm:$0xff] %v962
  %1089 = vst [vmem:[%s4 + $0xb8] sm:$0xff] %v964
  %1090 = vst [vmem:[%s4 + $0xc0] sm:$0xff] %v967
  %1091 = vst [vmem:[%s4 + $0xc8] sm:$0xff] %v969
  %1092 = vst [vmem:[%s4 + $0xd0] sm:$0xff] %v972
  %1093 = vst [vmem:[%s4 + $0xd8] sm:$0xff] %v974
  %1094 = vst [vmem:[%s4 + $0xe0] sm:$0xff] %v977
  %1095 = vst [vmem:[%s4 + $0xe8] sm:$0xff] %v979
  %1096 = vst [vmem:[%s4 + $0xf0] sm:$0xff] %v982
  %1097 = vst [vmem:[%s4 + $0xf8] sm:$0xff] %v984
  %1098 = vst [vmem:[%s4 + $0x100] sm:$0xff] %v987
  %1099 = vst [vmem:[%s4 + $0x108] sm:$0xff] %v989
  %1100 = vst [vmem:[%s4 + $0x110] sm:$0xff] %v992
  %1101 = vst [vmem:[%s4 + $0x118] sm:$0xff] %v994
  %1102 = vst [vmem:[%s4 + $0x120] sm:$0xff] %v997
  %1103 = vst [vmem:[%s4 + $0x128] sm:$0xff] %v999
  %1104 = vst [vmem:[%s4 + $0x130] sm:$0xff] %v1002
  %1105 = vst [vmem:[%s4 + $0x138] sm:$0xff] %v1004
  %1106 = vst [vmem:[%s4 + $0x140] sm:$0xff] %v1007
  %1107 = vst [vmem:[%s4 + $0x148] sm:$0xff] %v1009
  %1108 = vst [vmem:[%s4 + $0x150] sm:$0xff] %v1012
  %1109 = vst [vmem:[%s4 + $0x158] sm:$0xff] %v1014
  %1110 = vst [vmem:[%s4 + $0x160] sm:$0xff] %v1017
  %1111 = vst [vmem:[%s4 + $0x168] sm:$0xff] %v1019
  %1112 = vst [vmem:[%s4 + $0x170] sm:$0xff] %v1022
  %1113 = vst [vmem:[%s4 + $0x178] sm:$0xff] %v1024
  %1114 = vst [vmem:[%s4 + $0x180] sm:$0xff] %v1027
  %1115 = vst [vmem:[%s4 + $0x188] sm:$0xff] %v1029
  %1116 = vst [vmem:[%s4 + $0x190] sm:$0xff] %v1032
  %1117 = vst [vmem:[%s4 + $0x198] sm:$0xff] %v1034
  %1118 = vst [vmem:[%s4 + $0x1a0] sm:$0xff] %v1037
  %1119 = vst [vmem:[%s4 + $0x1a8] sm:$0xff] %v1039
  %1120 = vst [vmem:[%s4 + $0x1b0] sm:$0xff] %v1042
  %1121 = vst [vmem:[%s4 + $0x1b8] sm:$0xff] %v1044
  %1122 = vst [vmem:[%s4 + $0x1c0] sm:$0xff] %v1047
  %1123 = vst [vmem:[%s4 + $0x1c8] sm:$0xff] %v1049
  %1124 = vst [vmem:[%s4 + $0x1d0] sm:$0xff] %v1052
  %1125 = vst [vmem:[%s4 + $0x1d8] sm:$0xff] %v1054
  %1126 = vst [vmem:[%s4 + $0x1e0] sm:$0xff] %v1057
  %1127 = vst [vmem:[%s4 + $0x1e8] sm:$0xff] %v1059
  %1128 = vst [vmem:[%s4 + $0x1f0] sm:$0xff] %v1062
  %1129 = vst [vmem:[%s4 + $0x1f8] sm:$0xff] %v1064
  // Predicated region
  $region18: #{generator_forward.9} parent=0 // pred_check
    _
  $region19: #{generator_forward.9} parent=0 // pred_check_branch
    %1131 = sbr.rel (0) target = $region21
  $region20: #{generator_forward.9} parent=0 // pred_region
    _
  $region21: #{generator_forward.9} parent=0 // pred_fallthru
    _
  // Predicated region
  $region22: #{generator_forward.9} parent=0 // pred_check
    _
  $region23: #{generator_forward.9} parent=0 // pred_check_branch
    %1133 = sbr.rel (0) target = $region25
  $region24: #{generator_forward.9} parent=0 // pred_region
    _
  $region25: #{generator_forward.9} parent=0 // pred_fallthru
    _

// kernel: generator_forward.11
$region0: #{generator_forward.11}
  #allocation0 [shape = 'u32[]', space=smem, size = 0x4, offset = 0x4, fixed_abs, tag = 'smem constant byte address 0x4 - core index']
  #allocation1 [shape = 'u32[72,128]{1,0:T(1,128)}', space=vmem, size = 0x9000, scoped, tag = 'internal scratch']
  %s0 = inlined_call_operand.vmem [shape: f32[64,128], index: 0, kind: input, shape index: {}]
  %s1 = inlined_call_operand.vmem [shape: f32[64,128], index: 1, kind: output, shape index: {}]
  %s2 = sld [smem:[#allocation0]]
  $region14: #{generator_forward.11} parent=0
    _
  %s4 = ssub.s32 1, %s2
  %s5 = scalar_select 0, %s4, %s2
  // Predicated region
  $region2: #{generator_forward.11} parent=0 // pred_check
    _
  $region3: #{generator_forward.11} parent=0 // pred_check_branch
    %7 = sbr.rel (0) target = $region5
  $region4: #{generator_forward.11} parent=0 // pred_region
    _
  $region5: #{generator_forward.11} parent=0 // pred_fallthru
    _
  %v8 = vld [vmem:[%s0] sm:$0xff]
  %v9 = vld [vmem:[%s0 + $0x8] sm:$0xff]
  %v10 = vld [vmem:[%s0 + $0x10] sm:$0xff]
  %v11 = vld [vmem:[%s0 + $0x18] sm:$0xff]
  %v12 = vld [vmem:[%s0 + $0x20] sm:$0xff]
  %v13 = vld [vmem:[%s0 + $0x28] sm:$0xff]
  %v14 = vld [vmem:[%s0 + $0x30] sm:$0xff]
  %v15 = vld [vmem:[%s0 + $0x38] sm:$0xff]
  %v16 = vtanh.pop %v8
  %v17 = vtanh.pop %v9
  %v18 = vtanh.pop %v10
  %v19 = vtanh.pop %v11
  %v20 = vtanh.pop %v12
  %v21 = vtanh.pop %v13
  %v22 = vtanh.pop %v14
  %v23 = vtanh.pop %v15
  %24 = vst [vmem:[%s1] sm:$0xff] %v16
  %25 = vst [vmem:[%s1 + $0x8] sm:$0xff] %v17
  %26 = vst [vmem:[%s1 + $0x10] sm:$0xff] %v18
  %27 = vst [vmem:[%s1 + $0x18] sm:$0xff] %v19
  %28 = vst [vmem:[%s1 + $0x20] sm:$0xff] %v20
  %29 = vst [vmem:[%s1 + $0x28] sm:$0xff] %v21
  %30 = vst [vmem:[%s1 + $0x30] sm:$0xff] %v22
  %31 = vst [vmem:[%s1 + $0x38] sm:$0xff] %v23
  // Predicated region
  $region6: #{generator_forward.11} parent=0 // pred_check
    _
  $region7: #{generator_forward.11} parent=0 // pred_check_branch
    %33 = sbr.rel (0) target = $region9
  $region8: #{generator_forward.11} parent=0 // pred_region
    _
  $region9: #{generator_forward.11} parent=0 // pred_fallthru
    _
  // Predicated region
  $region10: #{generator_forward.11} parent=0 // pred_check
    _
  $region11: #{generator_forward.11} parent=0 // pred_check_branch
    %35 = sbr.rel (0) target = $region13
  $region12: #{generator_forward.11} parent=0 // pred_region
    _
  $region13: #{generator_forward.11} parent=0 // pred_fallthru
    _

// kernel: generator_forward.10
$region0: #{generator_forward.10}
  #allocation0 [shape = 'u32[]', space=smem, size = 0x4, offset = 0x4, fixed_abs, tag = 'smem constant byte address 0x4 - core index']
  #allocation1 [shape = 'u32[72,128]{1,0:T(1,128)}', space=vmem, size = 0x9000, scoped, tag = 'internal scratch']
  %s0 = inlined_call_operand.vmem [shape: f32[2048,8], index: 0, kind: input, shape index: {}]
  %s1 = inlined_call_operand.vmem [shape: f32[1,8], index: 1, kind: input, shape index: {}]
  %s2 = inlined_call_operand.vmem [shape: f32[1,8], index: 2, kind: input, shape index: {}]
  %s3 = inlined_call_operand.vmem [shape: bf16[8,16], index: 3, kind: input, shape index: {}]
  %s4 = inlined_call_operand.vmem [shape: f32[2048,16], index: 4, kind: output, shape index: {}]
  %s5 = sld [smem:[#allocation0]]
  $region26: #{generator_forward.10} parent=0
    _
  %s7 = ssub.s32 1, %s5
  %s8 = scalar_select 0, %s7, %s5
  // Predicated region
  $region2: #{generator_forward.10} parent=0 // pred_check
    _
  $region3: #{generator_forward.10} parent=0 // pred_check_branch
    %10 = sbr.rel (0) target = $region5
  $region4: #{generator_forward.10} parent=0 // pred_region
    _
  $region5: #{generator_forward.10} parent=0 // pred_fallthru
    _
  // Predicated region
  $region6: #{generator_forward.10} parent=0 // pred_check
    _
  $region7: #{generator_forward.10} parent=0 // pred_check_branch
    %12 = sbr.rel (0) target = $region9
  $region8: #{generator_forward.10} parent=0 // pred_region
    _
  $region9: #{generator_forward.10} parent=0 // pred_fallthru
    _
  // Predicated region
  $region10: #{generator_forward.10} parent=0 // pred_check
    _
  $region11: #{generator_forward.10} parent=0 // pred_check_branch
    %14 = sbr.rel (0) target = $region13
  $region12: #{generator_forward.10} parent=0 // pred_region
    _
  $region13: #{generator_forward.10} parent=0 // pred_fallthru
    _
  // Predicated region
  $region14: #{generator_forward.10} parent=0 // pred_check
    _
  $region15: #{generator_forward.10} parent=0 // pred_check_branch
    %16 = sbr.rel (0) target = $region17
  $region16: #{generator_forward.10} parent=0 // pred_region
    _
  $region17: #{generator_forward.10} parent=0 // pred_fallthru
    _
  %v18 = vld [vmem:[%s0] sm:$0xff]
  %v19 = vld [vmem:[%s0 + $0x8] sm:$0xff]
  %v20 = vld [vmem:[%s0 + $0x10] sm:$0xff]
  %v21 = vld [vmem:[%s0 + $0x18] sm:$0xff]
  %v22 = vld [vmem:[%s0 + $0x20] sm:$0xff]
  %v23 = vld [vmem:[%s0 + $0x28] sm:$0xff]
  %v24 = vld [vmem:[%s0 + $0x30] sm:$0xff]
  %v25 = vld [vmem:[%s0 + $0x38] sm:$0xff]
  %v26 = vld [vmem:[%s0 + $0x40] sm:$0xff]
  %v27 = vld [vmem:[%s0 + $0x48] sm:$0xff]
  %v28 = vld [vmem:[%s0 + $0x50] sm:$0xff]
  %v29 = vld [vmem:[%s0 + $0x58] sm:$0xff]
  %v30 = vld [vmem:[%s0 + $0x60] sm:$0xff]
  %v31 = vld [vmem:[%s0 + $0x68] sm:$0xff]
  %v32 = vld [vmem:[%s0 + $0x70] sm:$0xff]
  %v33 = vld [vmem:[%s0 + $0x78] sm:$0xff]
  %v34 = vld [vmem:[%s0 + $0x80] sm:$0xff]
  %v35 = vld [vmem:[%s0 + $0x88] sm:$0xff]
  %v36 = vld [vmem:[%s0 + $0x90] sm:$0xff]
  %v37 = vld [vmem:[%s0 + $0x98] sm:$0xff]
  %v38 = vld [vmem:[%s0 + $0xa0] sm:$0xff]
  %v39 = vld [vmem:[%s0 + $0xa8] sm:$0xff]
  %v40 = vld [vmem:[%s0 + $0xb0] sm:$0xff]
  %v41 = vld [vmem:[%s0 + $0xb8] sm:$0xff]
  %v42 = vld [vmem:[%s0 + $0xc0] sm:$0xff]
  %v43 = vld [vmem:[%s0 + $0xc8] sm:$0xff]
  %v44 = vld [vmem:[%s0 + $0xd0] sm:$0xff]
  %v45 = vld [vmem:[%s0 + $0xd8] sm:$0xff]
  %v46 = vld [vmem:[%s0 + $0xe0] sm:$0xff]
  %v47 = vld [vmem:[%s0 + $0xe8] sm:$0xff]
  %v48 = vld [vmem:[%s0 + $0xf0] sm:$0xff]
  %v49 = vld [vmem:[%s0 + $0xf8] sm:$0xff]
  %v50 = vld [vmem:[%s0 + $0x100] sm:$0xff]
  %v51 = vld [vmem:[%s0 + $0x108] sm:$0xff]
  %v52 = vld [vmem:[%s0 + $0x110] sm:$0xff]
  %v53 = vld [vmem:[%s0 + $0x118] sm:$0xff]
  %v54 = vld [vmem:[%s0 + $0x120] sm:$0xff]
  %v55 = vld [vmem:[%s0 + $0x128] sm:$0xff]
  %v56 = vld [vmem:[%s0 + $0x130] sm:$0xff]
  %v57 = vld [vmem:[%s0 + $0x138] sm:$0xff]
  %v58 = vld [vmem:[%s0 + $0x140] sm:$0xff]
  %v59 = vld [vmem:[%s0 + $0x148] sm:$0xff]
  %v60 = vld [vmem:[%s0 + $0x150] sm:$0xff]
  %v61 = vld [vmem:[%s0 + $0x158] sm:$0xff]
  %v62 = vld [vmem:[%s0 + $0x160] sm:$0xff]
  %v63 = vld [vmem:[%s0 + $0x168] sm:$0xff]
  %v64 = vld [vmem:[%s0 + $0x170] sm:$0xff]
  %v65 = vld [vmem:[%s0 + $0x178] sm:$0xff]
  %v66 = vld [vmem:[%s0 + $0x180] sm:$0xff]
  %v67 = vld [vmem:[%s0 + $0x188] sm:$0xff]
  %v68 = vld [vmem:[%s0 + $0x190] sm:$0xff]
  %v69 = vld [vmem:[%s0 + $0x198] sm:$0xff]
  %v70 = vld [vmem:[%s0 + $0x1a0] sm:$0xff]
  %v71 = vld [vmem:[%s0 + $0x1a8] sm:$0xff]
  %v72 = vld [vmem:[%s0 + $0x1b0] sm:$0xff]
  %v73 = vld [vmem:[%s0 + $0x1b8] sm:$0xff]
  %v74 = vld [vmem:[%s0 + $0x1c0] sm:$0xff]
  %v75 = vld [vmem:[%s0 + $0x1c8] sm:$0xff]
  %v76 = vld [vmem:[%s0 + $0x1d0] sm:$0xff]
  %v77 = vld [vmem:[%s0 + $0x1d8] sm:$0xff]
  %v78 = vld [vmem:[%s0 + $0x1e0] sm:$0xff]
  %v79 = vld [vmem:[%s0 + $0x1e8] sm:$0xff]
  %v80 = vld [vmem:[%s0 + $0x1f0] sm:$0xff]
  %v81 = vld [vmem:[%s0 + $0x1f8] sm:$0xff]
  %v82 = vld [vmem:[%s0 + $0x200] sm:$0xff]
  %v83 = vld [vmem:[%s0 + $0x208] sm:$0xff]
  %v84 = vld [vmem:[%s0 + $0x210] sm:$0xff]
  %v85 = vld [vmem:[%s0 + $0x218] sm:$0xff]
  %v86 = vld [vmem:[%s0 + $0x220] sm:$0xff]
  %v87 = vld [vmem:[%s0 + $0x228] sm:$0xff]
  %v88 = vld [vmem:[%s0 + $0x230] sm:$0xff]
  %v89 = vld [vmem:[%s0 + $0x238] sm:$0xff]
  %v90 = vld [vmem:[%s0 + $0x240] sm:$0xff]
  %v91 = vld [vmem:[%s0 + $0x248] sm:$0xff]
  %v92 = vld [vmem:[%s0 + $0x250] sm:$0xff]
  %v93 = vld [vmem:[%s0 + $0x258] sm:$0xff]
  %v94 = vld [vmem:[%s0 + $0x260] sm:$0xff]
  %v95 = vld [vmem:[%s0 + $0x268] sm:$0xff]
  %v96 = vld [vmem:[%s0 + $0x270] sm:$0xff]
  %v97 = vld [vmem:[%s0 + $0x278] sm:$0xff]
  %v98 = vld [vmem:[%s0 + $0x280] sm:$0xff]
  %v99 = vld [vmem:[%s0 + $0x288] sm:$0xff]
  %v100 = vld [vmem:[%s0 + $0x290] sm:$0xff]
  %v101 = vld [vmem:[%s0 + $0x298] sm:$0xff]
  %v102 = vld [vmem:[%s0 + $0x2a0] sm:$0xff]
  %v103 = vld [vmem:[%s0 + $0x2a8] sm:$0xff]
  %v104 = vld [vmem:[%s0 + $0x2b0] sm:$0xff]
  %v105 = vld [vmem:[%s0 + $0x2b8] sm:$0xff]
  %v106 = vld [vmem:[%s0 + $0x2c0] sm:$0xff]
  %v107 = vld [vmem:[%s0 + $0x2c8] sm:$0xff]
  %v108 = vld [vmem:[%s0 + $0x2d0] sm:$0xff]
  %v109 = vld [vmem:[%s0 + $0x2d8] sm:$0xff]
  %v110 = vld [vmem:[%s0 + $0x2e0] sm:$0xff]
  %v111 = vld [vmem:[%s0 + $0x2e8] sm:$0xff]
  %v112 = vld [vmem:[%s0 + $0x2f0] sm:$0xff]
  %v113 = vld [vmem:[%s0 + $0x2f8] sm:$0xff]
  %v114 = vld [vmem:[%s0 + $0x300] sm:$0xff]
  %v115 = vld [vmem:[%s0 + $0x308] sm:$0xff]
  %v116 = vld [vmem:[%s0 + $0x310] sm:$0xff]
  %v117 = vld [vmem:[%s0 + $0x318] sm:$0xff]
  %v118 = vld [vmem:[%s0 + $0x320] sm:$0xff]
  %v119 = vld [vmem:[%s0 + $0x328] sm:$0xff]
  %v120 = vld [vmem:[%s0 + $0x330] sm:$0xff]
  %v121 = vld [vmem:[%s0 + $0x338] sm:$0xff]
  %v122 = vld [vmem:[%s0 + $0x340] sm:$0xff]
  %v123 = vld [vmem:[%s0 + $0x348] sm:$0xff]
  %v124 = vld [vmem:[%s0 + $0x350] sm:$0xff]
  %v125 = vld [vmem:[%s0 + $0x358] sm:$0xff]
  %v126 = vld [vmem:[%s0 + $0x360] sm:$0xff]
  %v127 = vld [vmem:[%s0 + $0x368] sm:$0xff]
  %v128 = vld [vmem:[%s0 + $0x370] sm:$0xff]
  %v129 = vld [vmem:[%s0 + $0x378] sm:$0xff]
  %v130 = vld [vmem:[%s0 + $0x380] sm:$0xff]
  %v131 = vld [vmem:[%s0 + $0x388] sm:$0xff]
  %v132 = vld [vmem:[%s0 + $0x390] sm:$0xff]
  %v133 = vld [vmem:[%s0 + $0x398] sm:$0xff]
  %v134 = vld [vmem:[%s0 + $0x3a0] sm:$0xff]
  %v135 = vld [vmem:[%s0 + $0x3a8] sm:$0xff]
  %v136 = vld [vmem:[%s0 + $0x3b0] sm:$0xff]
  %v137 = vld [vmem:[%s0 + $0x3b8] sm:$0xff]
  %v138 = vld [vmem:[%s0 + $0x3c0] sm:$0xff]
  %v139 = vld [vmem:[%s0 + $0x3c8] sm:$0xff]
  %v140 = vld [vmem:[%s0 + $0x3d0] sm:$0xff]
  %v141 = vld [vmem:[%s0 + $0x3d8] sm:$0xff]
  %v142 = vld [vmem:[%s0 + $0x3e0] sm:$0xff]
  %v143 = vld [vmem:[%s0 + $0x3e8] sm:$0xff]
  %v144 = vld [vmem:[%s0 + $0x3f0] sm:$0xff]
  %v145 = vld [vmem:[%s0 + $0x3f8] sm:$0xff]
  %v146 = vld [vmem:[%s0 + $0x400] sm:$0xff]
  %v147 = vld [vmem:[%s0 + $0x408] sm:$0xff]
  %v148 = vld [vmem:[%s0 + $0x410] sm:$0xff]
  %v149 = vld [vmem:[%s0 + $0x418] sm:$0xff]
  %v150 = vld [vmem:[%s0 + $0x420] sm:$0xff]
  %v151 = vld [vmem:[%s0 + $0x428] sm:$0xff]
  %v152 = vld [vmem:[%s0 + $0x430] sm:$0xff]
  %v153 = vld [vmem:[%s0 + $0x438] sm:$0xff]
  %v154 = vld [vmem:[%s0 + $0x440] sm:$0xff]
  %v155 = vld [vmem:[%s0 + $0x448] sm:$0xff]
  %v156 = vld [vmem:[%s0 + $0x450] sm:$0xff]
  %v157 = vld [vmem:[%s0 + $0x458] sm:$0xff]
  %v158 = vld [vmem:[%s0 + $0x460] sm:$0xff]
  %v159 = vld [vmem:[%s0 + $0x468] sm:$0xff]
  %v160 = vld [vmem:[%s0 + $0x470] sm:$0xff]
  %v161 = vld [vmem:[%s0 + $0x478] sm:$0xff]
  %v162 = vld [vmem:[%s0 + $0x480] sm:$0xff]
  %v163 = vld [vmem:[%s0 + $0x488] sm:$0xff]
  %v164 = vld [vmem:[%s0 + $0x490] sm:$0xff]
  %v165 = vld [vmem:[%s0 + $0x498] sm:$0xff]
  %v166 = vld [vmem:[%s0 + $0x4a0] sm:$0xff]
  %v167 = vld [vmem:[%s0 + $0x4a8] sm:$0xff]
  %v168 = vld [vmem:[%s0 + $0x4b0] sm:$0xff]
  %v169 = vld [vmem:[%s0 + $0x4b8] sm:$0xff]
  %v170 = vld [vmem:[%s0 + $0x4c0] sm:$0xff]
  %v171 = vld [vmem:[%s0 + $0x4c8] sm:$0xff]
  %v172 = vld [vmem:[%s0 + $0x4d0] sm:$0xff]
  %v173 = vld [vmem:[%s0 + $0x4d8] sm:$0xff]
  %v174 = vld [vmem:[%s0 + $0x4e0] sm:$0xff]
  %v175 = vld [vmem:[%s0 + $0x4e8] sm:$0xff]
  %v176 = vld [vmem:[%s0 + $0x4f0] sm:$0xff]
  %v177 = vld [vmem:[%s0 + $0x4f8] sm:$0xff]
  %v178 = vld [vmem:[%s0 + $0x500] sm:$0xff]
  %v179 = vld [vmem:[%s0 + $0x508] sm:$0xff]
  %v180 = vld [vmem:[%s0 + $0x510] sm:$0xff]
  %v181 = vld [vmem:[%s0 + $0x518] sm:$0xff]
  %v182 = vld [vmem:[%s0 + $0x520] sm:$0xff]
  %v183 = vld [vmem:[%s0 + $0x528] sm:$0xff]
  %v184 = vld [vmem:[%s0 + $0x530] sm:$0xff]
  %v185 = vld [vmem:[%s0 + $0x538] sm:$0xff]
  %v186 = vld [vmem:[%s0 + $0x540] sm:$0xff]
  %v187 = vld [vmem:[%s0 + $0x548] sm:$0xff]
  %v188 = vld [vmem:[%s0 + $0x550] sm:$0xff]
  %v189 = vld [vmem:[%s0 + $0x558] sm:$0xff]
  %v190 = vld [vmem:[%s0 + $0x560] sm:$0xff]
  %v191 = vld [vmem:[%s0 + $0x568] sm:$0xff]
  %v192 = vld [vmem:[%s0 + $0x570] sm:$0xff]
  %v193 = vld [vmem:[%s0 + $0x578] sm:$0xff]
  %v194 = vld [vmem:[%s0 + $0x580] sm:$0xff]
  %v195 = vld [vmem:[%s0 + $0x588] sm:$0xff]
  %v196 = vld [vmem:[%s0 + $0x590] sm:$0xff]
  %v197 = vld [vmem:[%s0 + $0x598] sm:$0xff]
  %v198 = vld [vmem:[%s0 + $0x5a0] sm:$0xff]
  %v199 = vld [vmem:[%s0 + $0x5a8] sm:$0xff]
  %v200 = vld [vmem:[%s0 + $0x5b0] sm:$0xff]
  %v201 = vld [vmem:[%s0 + $0x5b8] sm:$0xff]
  %v202 = vld [vmem:[%s0 + $0x5c0] sm:$0xff]
  %v203 = vld [vmem:[%s0 + $0x5c8] sm:$0xff]
  %v204 = vld [vmem:[%s0 + $0x5d0] sm:$0xff]
  %v205 = vld [vmem:[%s0 + $0x5d8] sm:$0xff]
  %v206 = vld [vmem:[%s0 + $0x5e0] sm:$0xff]
  %v207 = vld [vmem:[%s0 + $0x5e8] sm:$0xff]
  %v208 = vld [vmem:[%s0 + $0x5f0] sm:$0xff]
  %v209 = vld [vmem:[%s0 + $0x5f8] sm:$0xff]
  %v210 = vld [vmem:[%s0 + $0x600] sm:$0xff]
  %v211 = vld [vmem:[%s0 + $0x608] sm:$0xff]
  %v212 = vld [vmem:[%s0 + $0x610] sm:$0xff]
  %v213 = vld [vmem:[%s0 + $0x618] sm:$0xff]
  %v214 = vld [vmem:[%s0 + $0x620] sm:$0xff]
  %v215 = vld [vmem:[%s0 + $0x628] sm:$0xff]
  %v216 = vld [vmem:[%s0 + $0x630] sm:$0xff]
  %v217 = vld [vmem:[%s0 + $0x638] sm:$0xff]
  %v218 = vld [vmem:[%s0 + $0x640] sm:$0xff]
  %v219 = vld [vmem:[%s0 + $0x648] sm:$0xff]
  %v220 = vld [vmem:[%s0 + $0x650] sm:$0xff]
  %v221 = vld [vmem:[%s0 + $0x658] sm:$0xff]
  %v222 = vld [vmem:[%s0 + $0x660] sm:$0xff]
  %v223 = vld [vmem:[%s0 + $0x668] sm:$0xff]
  %v224 = vld [vmem:[%s0 + $0x670] sm:$0xff]
  %v225 = vld [vmem:[%s0 + $0x678] sm:$0xff]
  %v226 = vld [vmem:[%s0 + $0x680] sm:$0xff]
  %v227 = vld [vmem:[%s0 + $0x688] sm:$0xff]
  %v228 = vld [vmem:[%s0 + $0x690] sm:$0xff]
  %v229 = vld [vmem:[%s0 + $0x698] sm:$0xff]
  %v230 = vld [vmem:[%s0 + $0x6a0] sm:$0xff]
  %v231 = vld [vmem:[%s0 + $0x6a8] sm:$0xff]
  %v232 = vld [vmem:[%s0 + $0x6b0] sm:$0xff]
  %v233 = vld [vmem:[%s0 + $0x6b8] sm:$0xff]
  %v234 = vld [vmem:[%s0 + $0x6c0] sm:$0xff]
  %v235 = vld [vmem:[%s0 + $0x6c8] sm:$0xff]
  %v236 = vld [vmem:[%s0 + $0x6d0] sm:$0xff]
  %v237 = vld [vmem:[%s0 + $0x6d8] sm:$0xff]
  %v238 = vld [vmem:[%s0 + $0x6e0] sm:$0xff]
  %v239 = vld [vmem:[%s0 + $0x6e8] sm:$0xff]
  %v240 = vld [vmem:[%s0 + $0x6f0] sm:$0xff]
  %v241 = vld [vmem:[%s0 + $0x6f8] sm:$0xff]
  %v242 = vld [vmem:[%s0 + $0x700] sm:$0xff]
  %v243 = vld [vmem:[%s0 + $0x708] sm:$0xff]
  %v244 = vld [vmem:[%s0 + $0x710] sm:$0xff]
  %v245 = vld [vmem:[%s0 + $0x718] sm:$0xff]
  %v246 = vld [vmem:[%s0 + $0x720] sm:$0xff]
  %v247 = vld [vmem:[%s0 + $0x728] sm:$0xff]
  %v248 = vld [vmem:[%s0 + $0x730] sm:$0xff]
  %v249 = vld [vmem:[%s0 + $0x738] sm:$0xff]
  %v250 = vld [vmem:[%s0 + $0x740] sm:$0xff]
  %v251 = vld [vmem:[%s0 + $0x748] sm:$0xff]
  %v252 = vld [vmem:[%s0 + $0x750] sm:$0xff]
  %v253 = vld [vmem:[%s0 + $0x758] sm:$0xff]
  %v254 = vld [vmem:[%s0 + $0x760] sm:$0xff]
  %v255 = vld [vmem:[%s0 + $0x768] sm:$0xff]
  %v256 = vld [vmem:[%s0 + $0x770] sm:$0xff]
  %v257 = vld [vmem:[%s0 + $0x778] sm:$0xff]
  %v258 = vld [vmem:[%s0 + $0x780] sm:$0xff]
  %v259 = vld [vmem:[%s0 + $0x788] sm:$0xff]
  %v260 = vld [vmem:[%s0 + $0x790] sm:$0xff]
  %v261 = vld [vmem:[%s0 + $0x798] sm:$0xff]
  %v262 = vld [vmem:[%s0 + $0x7a0] sm:$0xff]
  %v263 = vld [vmem:[%s0 + $0x7a8] sm:$0xff]
  %v264 = vld [vmem:[%s0 + $0x7b0] sm:$0xff]
  %v265 = vld [vmem:[%s0 + $0x7b8] sm:$0xff]
  %v266 = vld [vmem:[%s0 + $0x7c0] sm:$0xff]
  %v267 = vld [vmem:[%s0 + $0x7c8] sm:$0xff]
  %v268 = vld [vmem:[%s0 + $0x7d0] sm:$0xff]
  %v269 = vld [vmem:[%s0 + $0x7d8] sm:$0xff]
  %v270 = vld [vmem:[%s0 + $0x7e0] sm:$0xff]
  %v271 = vld [vmem:[%s0 + $0x7e8] sm:$0xff]
  %v272 = vld [vmem:[%s0 + $0x7f0] sm:$0xff]
  %v273 = vld [vmem:[%s0 + $0x7f8] sm:$0xff]
  %vm274 = vcmask 64512
  %v275 = vsel %vm274, %v18, 0.0
  %v276 = vsel %vm274, %v19, 0.0
  %v277 = vadd.f32 %v275, %v276
  %v278 = vsel %vm274, %v20, 0.0
  %v279 = vadd.f32 %v277, %v278
  %v280 = vsel %vm274, %v21, 0.0
  %v281 = vadd.f32 %v279, %v280
  %v282 = vsel %vm274, %v22, 0.0
  %v283 = vadd.f32 %v281, %v282
  %v284 = vsel %vm274, %v23, 0.0
  %v285 = vadd.f32 %v283, %v284
  %v286 = vsel %vm274, %v24, 0.0
  %v287 = vadd.f32 %v285, %v286
  %v288 = vsel %vm274, %v25, 0.0
  %v289 = vadd.f32 %v287, %v288
  %v290 = vsel %vm274, %v26, 0.0
  %v291 = vadd.f32 %v289, %v290
  %v292 = vsel %vm274, %v27, 0.0
  %v293 = vadd.f32 %v291, %v292
  %v294 = vsel %vm274, %v28, 0.0
  %v295 = vadd.f32 %v293, %v294
  %v296 = vsel %vm274, %v29, 0.0
  %v297 = vadd.f32 %v295, %v296
  %v298 = vsel %vm274, %v30, 0.0
  %v299 = vadd.f32 %v297, %v298
  %v300 = vsel %vm274, %v31, 0.0
  %v301 = vadd.f32 %v299, %v300
  %v302 = vsel %vm274, %v32, 0.0
  %v303 = vadd.f32 %v301, %v302
  %v304 = vsel %vm274, %v33, 0.0
  %v305 = vadd.f32 %v303, %v304
  %v306 = vsel %vm274, %v34, 0.0
  %v307 = vadd.f32 %v305, %v306
  %v308 = vsel %vm274, %v35, 0.0
  %v309 = vadd.f32 %v307, %v308
  %v310 = vsel %vm274, %v36, 0.0
  %v311 = vadd.f32 %v309, %v310
  %v312 = vsel %vm274, %v37, 0.0
  %v313 = vadd.f32 %v311, %v312
  %v314 = vsel %vm274, %v38, 0.0
  %v315 = vadd.f32 %v313, %v314
  %v316 = vsel %vm274, %v39, 0.0
  %v317 = vadd.f32 %v315, %v316
  %v318 = vsel %vm274, %v40, 0.0
  %v319 = vadd.f32 %v317, %v318
  %v320 = vsel %vm274, %v41, 0.0
  %v321 = vadd.f32 %v319, %v320
  %v322 = vsel %vm274, %v42, 0.0
  %v323 = vadd.f32 %v321, %v322
  %v324 = vsel %vm274, %v43, 0.0
  %v325 = vadd.f32 %v323, %v324
  %v326 = vsel %vm274, %v44, 0.0
  %v327 = vadd.f32 %v325, %v326
  %v328 = vsel %vm274, %v45, 0.0
  %v329 = vadd.f32 %v327, %v328
  %v330 = vsel %vm274, %v46, 0.0
  %v331 = vadd.f32 %v329, %v330
  %v332 = vsel %vm274, %v47, 0.0
  %v333 = vadd.f32 %v331, %v332
  %v334 = vsel %vm274, %v48, 0.0
  %v335 = vadd.f32 %v333, %v334
  %v336 = vsel %vm274, %v49, 0.0
  %v337 = vadd.f32 %v335, %v336
  %v338 = vsel %vm274, %v50, 0.0
  %v339 = vadd.f32 %v337, %v338
  %v340 = vsel %vm274, %v51, 0.0
  %v341 = vadd.f32 %v339, %v340
  %v342 = vsel %vm274, %v52, 0.0
  %v343 = vadd.f32 %v341, %v342
  %v344 = vsel %vm274, %v53, 0.0
  %v345 = vadd.f32 %v343, %v344
  %v346 = vsel %vm274, %v54, 0.0
  %v347 = vadd.f32 %v345, %v346
  %v348 = vsel %vm274, %v55, 0.0
  %v349 = vadd.f32 %v347, %v348
  %v350 = vsel %vm274, %v56, 0.0
  %v351 = vadd.f32 %v349, %v350
  %v352 = vsel %vm274, %v57, 0.0
  %v353 = vadd.f32 %v351, %v352
  %v354 = vsel %vm274, %v58, 0.0
  %v355 = vadd.f32 %v353, %v354
  %v356 = vsel %vm274, %v59, 0.0
  %v357 = vadd.f32 %v355, %v356
  %v358 = vsel %vm274, %v60, 0.0
  %v359 = vadd.f32 %v357, %v358
  %v360 = vsel %vm274, %v61, 0.0
  %v361 = vadd.f32 %v359, %v360
  %v362 = vsel %vm274, %v62, 0.0
  %v363 = vadd.f32 %v361, %v362
  %v364 = vsel %vm274, %v63, 0.0
  %v365 = vadd.f32 %v363, %v364
  %v366 = vsel %vm274, %v64, 0.0
  %v367 = vadd.f32 %v365, %v366
  %v368 = vsel %vm274, %v65, 0.0
  %v369 = vadd.f32 %v367, %v368
  %v370 = vsel %vm274, %v66, 0.0
  %v371 = vadd.f32 %v369, %v370
  %v372 = vsel %vm274, %v67, 0.0
  %v373 = vadd.f32 %v371, %v372
  %v374 = vsel %vm274, %v68, 0.0
  %v375 = vadd.f32 %v373, %v374
  %v376 = vsel %vm274, %v69, 0.0
  %v377 = vadd.f32 %v375, %v376
  %v378 = vsel %vm274, %v70, 0.0
  %v379 = vadd.f32 %v377, %v378
  %v380 = vsel %vm274, %v71, 0.0
  %v381 = vadd.f32 %v379, %v380
  %v382 = vsel %vm274, %v72, 0.0
  %v383 = vadd.f32 %v381, %v382
  %v384 = vsel %vm274, %v73, 0.0
  %v385 = vadd.f32 %v383, %v384
  %v386 = vsel %vm274, %v74, 0.0
  %v387 = vadd.f32 %v385, %v386
  %v388 = vsel %vm274, %v75, 0.0
  %v389 = vadd.f32 %v387, %v388
  %v390 = vsel %vm274, %v76, 0.0
  %v391 = vadd.f32 %v389, %v390
  %v392 = vsel %vm274, %v77, 0.0
  %v393 = vadd.f32 %v391, %v392
  %v394 = vsel %vm274, %v78, 0.0
  %v395 = vadd.f32 %v393, %v394
  %v396 = vsel %vm274, %v79, 0.0
  %v397 = vadd.f32 %v395, %v396
  %v398 = vsel %vm274, %v80, 0.0
  %v399 = vadd.f32 %v397, %v398
  %v400 = vsel %vm274, %v81, 0.0
  %v401 = vadd.f32 %v399, %v400
  %v402 = vsel %vm274, %v82, 0.0
  %v403 = vadd.f32 %v401, %v402
  %v404 = vsel %vm274, %v83, 0.0
  %v405 = vadd.f32 %v403, %v404
  %v406 = vsel %vm274, %v84, 0.0
  %v407 = vadd.f32 %v405, %v406
  %v408 = vsel %vm274, %v85, 0.0
  %v409 = vadd.f32 %v407, %v408
  %v410 = vsel %vm274, %v86, 0.0
  %v411 = vadd.f32 %v409, %v410
  %v412 = vsel %vm274, %v87, 0.0
  %v413 = vadd.f32 %v411, %v412
  %v414 = vsel %vm274, %v88, 0.0
  %v415 = vadd.f32 %v413, %v414
  %v416 = vsel %vm274, %v89, 0.0
  %v417 = vadd.f32 %v415, %v416
  %v418 = vsel %vm274, %v90, 0.0
  %v419 = vadd.f32 %v417, %v418
  %v420 = vsel %vm274, %v91, 0.0
  %v421 = vadd.f32 %v419, %v420
  %v422 = vsel %vm274, %v92, 0.0
  %v423 = vadd.f32 %v421, %v422
  %v424 = vsel %vm274, %v93, 0.0
  %v425 = vadd.f32 %v423, %v424
  %v426 = vsel %vm274, %v94, 0.0
  %v427 = vadd.f32 %v425, %v426
  %v428 = vsel %vm274, %v95, 0.0
  %v429 = vadd.f32 %v427, %v428
  %v430 = vsel %vm274, %v96, 0.0
  %v431 = vadd.f32 %v429, %v430
  %v432 = vsel %vm274, %v97, 0.0
  %v433 = vadd.f32 %v431, %v432
  %v434 = vsel %vm274, %v98, 0.0
  %v435 = vadd.f32 %v433, %v434
  %v436 = vsel %vm274, %v99, 0.0
  %v437 = vadd.f32 %v435, %v436
  %v438 = vsel %vm274, %v100, 0.0
  %v439 = vadd.f32 %v437, %v438
  %v440 = vsel %vm274, %v101, 0.0
  %v441 = vadd.f32 %v439, %v440
  %v442 = vsel %vm274, %v102, 0.0
  %v443 = vadd.f32 %v441, %v442
  %v444 = vsel %vm274, %v103, 0.0
  %v445 = vadd.f32 %v443, %v444
  %v446 = vsel %vm274, %v104, 0.0
  %v447 = vadd.f32 %v445, %v446
  %v448 = vsel %vm274, %v105, 0.0
  %v449 = vadd.f32 %v447, %v448
  %v450 = vsel %vm274, %v106, 0.0
  %v451 = vadd.f32 %v449, %v450
  %v452 = vsel %vm274, %v107, 0.0
  %v453 = vadd.f32 %v451, %v452
  %v454 = vsel %vm274, %v108, 0.0
  %v455 = vadd.f32 %v453, %v454
  %v456 = vsel %vm274, %v109, 0.0
  %v457 = vadd.f32 %v455, %v456
  %v458 = vsel %vm274, %v110, 0.0
  %v459 = vadd.f32 %v457, %v458
  %v460 = vsel %vm274, %v111, 0.0
  %v461 = vadd.f32 %v459, %v460
  %v462 = vsel %vm274, %v112, 0.0
  %v463 = vadd.f32 %v461, %v462
  %v464 = vsel %vm274, %v113, 0.0
  %v465 = vadd.f32 %v463, %v464
  %v466 = vsel %vm274, %v114, 0.0
  %v467 = vadd.f32 %v465, %v466
  %v468 = vsel %vm274, %v115, 0.0
  %v469 = vadd.f32 %v467, %v468
  %v470 = vsel %vm274, %v116, 0.0
  %v471 = vadd.f32 %v469, %v470
  %v472 = vsel %vm274, %v117, 0.0
  %v473 = vadd.f32 %v471, %v472
  %v474 = vsel %vm274, %v118, 0.0
  %v475 = vadd.f32 %v473, %v474
  %v476 = vsel %vm274, %v119, 0.0
  %v477 = vadd.f32 %v475, %v476
  %v478 = vsel %vm274, %v120, 0.0
  %v479 = vadd.f32 %v477, %v478
  %v480 = vsel %vm274, %v121, 0.0
  %v481 = vadd.f32 %v479, %v480
  %v482 = vsel %vm274, %v122, 0.0
  %v483 = vadd.f32 %v481, %v482
  %v484 = vsel %vm274, %v123, 0.0
  %v485 = vadd.f32 %v483, %v484
  %v486 = vsel %vm274, %v124, 0.0
  %v487 = vadd.f32 %v485, %v486
  %v488 = vsel %vm274, %v125, 0.0
  %v489 = vadd.f32 %v487, %v488
  %v490 = vsel %vm274, %v126, 0.0
  %v491 = vadd.f32 %v489, %v490
  %v492 = vsel %vm274, %v127, 0.0
  %v493 = vadd.f32 %v491, %v492
  %v494 = vsel %vm274, %v128, 0.0
  %v495 = vadd.f32 %v493, %v494
  %v496 = vsel %vm274, %v129, 0.0
  %v497 = vadd.f32 %v495, %v496
  %v498 = vsel %vm274, %v130, 0.0
  %v499 = vadd.f32 %v497, %v498
  %v500 = vsel %vm274, %v131, 0.0
  %v501 = vadd.f32 %v499, %v500
  %v502 = vsel %vm274, %v132, 0.0
  %v503 = vadd.f32 %v501, %v502
  %v504 = vsel %vm274, %v133, 0.0
  %v505 = vadd.f32 %v503, %v504
  %v506 = vsel %vm274, %v134, 0.0
  %v507 = vadd.f32 %v505, %v506
  %v508 = vsel %vm274, %v135, 0.0
  %v509 = vadd.f32 %v507, %v508
  %v510 = vsel %vm274, %v136, 0.0
  %v511 = vadd.f32 %v509, %v510
  %v512 = vsel %vm274, %v137, 0.0
  %v513 = vadd.f32 %v511, %v512
  %v514 = vsel %vm274, %v138, 0.0
  %v515 = vadd.f32 %v513, %v514
  %v516 = vsel %vm274, %v139, 0.0
  %v517 = vadd.f32 %v515, %v516
  %v518 = vsel %vm274, %v140, 0.0
  %v519 = vadd.f32 %v517, %v518
  %v520 = vsel %vm274, %v141, 0.0
  %v521 = vadd.f32 %v519, %v520
  %v522 = vsel %vm274, %v142, 0.0
  %v523 = vadd.f32 %v521, %v522
  %v524 = vsel %vm274, %v143, 0.0
  %v525 = vadd.f32 %v523, %v524
  %v526 = vsel %vm274, %v144, 0.0
  %v527 = vadd.f32 %v525, %v526
  %v528 = vsel %vm274, %v145, 0.0
  %v529 = vadd.f32 %v527, %v528
  %v530 = vsel %vm274, %v146, 0.0
  %v531 = vadd.f32 %v529, %v530
  %v532 = vsel %vm274, %v147, 0.0
  %v533 = vadd.f32 %v531, %v532
  %v534 = vsel %vm274, %v148, 0.0
  %v535 = vadd.f32 %v533, %v534
  %v536 = vsel %vm274, %v149, 0.0
  %v537 = vadd.f32 %v535, %v536
  %v538 = vsel %vm274, %v150, 0.0
  %v539 = vadd.f32 %v537, %v538
  %v540 = vsel %vm274, %v151, 0.0
  %v541 = vadd.f32 %v539, %v540
  %v542 = vsel %vm274, %v152, 0.0
  %v543 = vadd.f32 %v541, %v542
  %v544 = vsel %vm274, %v153, 0.0
  %v545 = vadd.f32 %v543, %v544
  %v546 = vsel %vm274, %v154, 0.0
  %v547 = vadd.f32 %v545, %v546
  %v548 = vsel %vm274, %v155, 0.0
  %v549 = vadd.f32 %v547, %v548
  %v550 = vsel %vm274, %v156, 0.0
  %v551 = vadd.f32 %v549, %v550
  %v552 = vsel %vm274, %v157, 0.0
  %v553 = vadd.f32 %v551, %v552
  %v554 = vsel %vm274, %v158, 0.0
  %v555 = vadd.f32 %v553, %v554
  %v556 = vsel %vm274, %v159, 0.0
  %v557 = vadd.f32 %v555, %v556
  %v558 = vsel %vm274, %v160, 0.0
  %v559 = vadd.f32 %v557, %v558
  %v560 = vsel %vm274, %v161, 0.0
  %v561 = vadd.f32 %v559, %v560
  %v562 = vsel %vm274, %v162, 0.0
  %v563 = vadd.f32 %v561, %v562
  %v564 = vsel %vm274, %v163, 0.0
  %v565 = vadd.f32 %v563, %v564
  %v566 = vsel %vm274, %v164, 0.0
  %v567 = vadd.f32 %v565, %v566
  %v568 = vsel %vm274, %v165, 0.0
  %v569 = vadd.f32 %v567, %v568
  %v570 = vsel %vm274, %v166, 0.0
  %v571 = vadd.f32 %v569, %v570
  %v572 = vsel %vm274, %v167, 0.0
  %v573 = vadd.f32 %v571, %v572
  %v574 = vsel %vm274, %v168, 0.0
  %v575 = vadd.f32 %v573, %v574
  %v576 = vsel %vm274, %v169, 0.0
  %v577 = vadd.f32 %v575, %v576
  %v578 = vsel %vm274, %v170, 0.0
  %v579 = vadd.f32 %v577, %v578
  %v580 = vsel %vm274, %v171, 0.0
  %v581 = vadd.f32 %v579, %v580
  %v582 = vsel %vm274, %v172, 0.0
  %v583 = vadd.f32 %v581, %v582
  %v584 = vsel %vm274, %v173, 0.0
  %v585 = vadd.f32 %v583, %v584
  %v586 = vsel %vm274, %v174, 0.0
  %v587 = vadd.f32 %v585, %v586
  %v588 = vsel %vm274, %v175, 0.0
  %v589 = vadd.f32 %v587, %v588
  %v590 = vsel %vm274, %v176, 0.0
  %v591 = vadd.f32 %v589, %v590
  %v592 = vsel %vm274, %v177, 0.0
  %v593 = vadd.f32 %v591, %v592
  %v594 = vsel %vm274, %v178, 0.0
  %v595 = vadd.f32 %v593, %v594
  %v596 = vsel %vm274, %v179, 0.0
  %v597 = vadd.f32 %v595, %v596
  %v598 = vsel %vm274, %v180, 0.0
  %v599 = vadd.f32 %v597, %v598
  %v600 = vsel %vm274, %v181, 0.0
  %v601 = vadd.f32 %v599, %v600
  %v602 = vsel %vm274, %v182, 0.0
  %v603 = vadd.f32 %v601, %v602
  %v604 = vsel %vm274, %v183, 0.0
  %v605 = vadd.f32 %v603, %v604
  %v606 = vsel %vm274, %v184, 0.0
  %v607 = vadd.f32 %v605, %v606
  %v608 = vsel %vm274, %v185, 0.0
  %v609 = vadd.f32 %v607, %v608
  %v610 = vsel %vm274, %v186, 0.0
  %v611 = vadd.f32 %v609, %v610
  %v612 = vsel %vm274, %v187, 0.0
  %v613 = vadd.f32 %v611, %v612
  %v614 = vsel %vm274, %v188, 0.0
  %v615 = vadd.f32 %v613, %v614
  %v616 = vsel %vm274, %v189, 0.0
  %v617 = vadd.f32 %v615, %v616
  %v618 = vsel %vm274, %v190, 0.0
  %v619 = vadd.f32 %v617, %v618
  %v620 = vsel %vm274, %v191, 0.0
  %v621 = vadd.f32 %v619, %v620
  %v622 = vsel %vm274, %v192, 0.0
  %v623 = vadd.f32 %v621, %v622
  %v624 = vsel %vm274, %v193, 0.0
  %v625 = vadd.f32 %v623, %v624
  %v626 = vsel %vm274, %v194, 0.0
  %v627 = vadd.f32 %v625, %v626
  %v628 = vsel %vm274, %v195, 0.0
  %v629 = vadd.f32 %v627, %v628
  %v630 = vsel %vm274, %v196, 0.0
  %v631 = vadd.f32 %v629, %v630
  %v632 = vsel %vm274, %v197, 0.0
  %v633 = vadd.f32 %v631, %v632
  %v634 = vsel %vm274, %v198, 0.0
  %v635 = vadd.f32 %v633, %v634
  %v636 = vsel %vm274, %v199, 0.0
  %v637 = vadd.f32 %v635, %v636
  %v638 = vsel %vm274, %v200, 0.0
  %v639 = vadd.f32 %v637, %v638
  %v640 = vsel %vm274, %v201, 0.0
  %v641 = vadd.f32 %v639, %v640
  %v642 = vsel %vm274, %v202, 0.0
  %v643 = vadd.f32 %v641, %v642
  %v644 = vsel %vm274, %v203, 0.0
  %v645 = vadd.f32 %v643, %v644
  %v646 = vsel %vm274, %v204, 0.0
  %v647 = vadd.f32 %v645, %v646
  %v648 = vsel %vm274, %v205, 0.0
  %v649 = vadd.f32 %v647, %v648
  %v650 = vsel %vm274, %v206, 0.0
  %v651 = vadd.f32 %v649, %v650
  %v652 = vsel %vm274, %v207, 0.0
  %v653 = vadd.f32 %v651, %v652
  %v654 = vsel %vm274, %v208, 0.0
  %v655 = vadd.f32 %v653, %v654
  %v656 = vsel %vm274, %v209, 0.0
  %v657 = vadd.f32 %v655, %v656
  %v658 = vsel %vm274, %v210, 0.0
  %v659 = vadd.f32 %v657, %v658
  %v660 = vsel %vm274, %v211, 0.0
  %v661 = vadd.f32 %v659, %v660
  %v662 = vsel %vm274, %v212, 0.0
  %v663 = vadd.f32 %v661, %v662
  %v664 = vsel %vm274, %v213, 0.0
  %v665 = vadd.f32 %v663, %v664
  %v666 = vsel %vm274, %v214, 0.0
  %v667 = vadd.f32 %v665, %v666
  %v668 = vsel %vm274, %v215, 0.0
  %v669 = vadd.f32 %v667, %v668
  %v670 = vsel %vm274, %v216, 0.0
  %v671 = vadd.f32 %v669, %v670
  %v672 = vsel %vm274, %v217, 0.0
  %v673 = vadd.f32 %v671, %v672
  %v674 = vsel %vm274, %v218, 0.0
  %v675 = vadd.f32 %v673, %v674
  %v676 = vsel %vm274, %v219, 0.0
  %v677 = vadd.f32 %v675, %v676
  %v678 = vsel %vm274, %v220, 0.0
  %v679 = vadd.f32 %v677, %v678
  %v680 = vsel %vm274, %v221, 0.0
  %v681 = vadd.f32 %v679, %v680
  %v682 = vsel %vm274, %v222, 0.0
  %v683 = vadd.f32 %v681, %v682
  %v684 = vsel %vm274, %v223, 0.0
  %v685 = vadd.f32 %v683, %v684
  %v686 = vsel %vm274, %v224, 0.0
  %v687 = vadd.f32 %v685, %v686
  %v688 = vsel %vm274, %v225, 0.0
  %v689 = vadd.f32 %v687, %v688
  %v690 = vsel %vm274, %v226, 0.0
  %v691 = vadd.f32 %v689, %v690
  %v692 = vsel %vm274, %v227, 0.0
  %v693 = vadd.f32 %v691, %v692
  %v694 = vsel %vm274, %v228, 0.0
  %v695 = vadd.f32 %v693, %v694
  %v696 = vsel %vm274, %v229, 0.0
  %v697 = vadd.f32 %v695, %v696
  %v698 = vsel %vm274, %v230, 0.0
  %v699 = vadd.f32 %v697, %v698
  %v700 = vsel %vm274, %v231, 0.0
  %v701 = vadd.f32 %v699, %v700
  %v702 = vsel %vm274, %v232, 0.0
  %v703 = vadd.f32 %v701, %v702
  %v704 = vsel %vm274, %v233, 0.0
  %v705 = vadd.f32 %v703, %v704
  %v706 = vsel %vm274, %v234, 0.0
  %v707 = vadd.f32 %v705, %v706
  %v708 = vsel %vm274, %v235, 0.0
  %v709 = vadd.f32 %v707, %v708
  %v710 = vsel %vm274, %v236, 0.0
  %v711 = vadd.f32 %v709, %v710
  %v712 = vsel %vm274, %v237, 0.0
  %v713 = vadd.f32 %v711, %v712
  %v714 = vsel %vm274, %v238, 0.0
  %v715 = vadd.f32 %v713, %v714
  %v716 = vsel %vm274, %v239, 0.0
  %v717 = vadd.f32 %v715, %v716
  %v718 = vsel %vm274, %v240, 0.0
  %v719 = vadd.f32 %v717, %v718
  %v720 = vsel %vm274, %v241, 0.0
  %v721 = vadd.f32 %v719, %v720
  %v722 = vsel %vm274, %v242, 0.0
  %v723 = vadd.f32 %v721, %v722
  %v724 = vsel %vm274, %v243, 0.0
  %v725 = vadd.f32 %v723, %v724
  %v726 = vsel %vm274, %v244, 0.0
  %v727 = vadd.f32 %v725, %v726
  %v728 = vsel %vm274, %v245, 0.0
  %v729 = vadd.f32 %v727, %v728
  %v730 = vsel %vm274, %v246, 0.0
  %v731 = vadd.f32 %v729, %v730
  %v732 = vsel %vm274, %v247, 0.0
  %v733 = vadd.f32 %v731, %v732
  %v734 = vsel %vm274, %v248, 0.0
  %v735 = vadd.f32 %v733, %v734
  %v736 = vsel %vm274, %v249, 0.0
  %v737 = vadd.f32 %v735, %v736
  %v738 = vsel %vm274, %v250, 0.0
  %v739 = vadd.f32 %v737, %v738
  %v740 = vsel %vm274, %v251, 0.0
  %v741 = vadd.f32 %v739, %v740
  %v742 = vsel %vm274, %v252, 0.0
  %v743 = vadd.f32 %v741, %v742
  %v744 = vsel %vm274, %v253, 0.0
  %v745 = vadd.f32 %v743, %v744
  %v746 = vsel %vm274, %v254, 0.0
  %v747 = vadd.f32 %v745, %v746
  %v748 = vsel %vm274, %v255, 0.0
  %v749 = vadd.f32 %v747, %v748
  %v750 = vsel %vm274, %v256, 0.0
  %v751 = vadd.f32 %v749, %v750
  %v752 = vsel %vm274, %v257, 0.0
  %v753 = vadd.f32 %v751, %v752
  %v754 = vsel %vm274, %v258, 0.0
  %v755 = vadd.f32 %v753, %v754
  %v756 = vsel %vm274, %v259, 0.0
  %v757 = vadd.f32 %v755, %v756
  %v758 = vsel %vm274, %v260, 0.0
  %v759 = vadd.f32 %v757, %v758
  %v760 = vsel %vm274, %v261, 0.0
  %v761 = vadd.f32 %v759, %v760
  %v762 = vsel %vm274, %v262, 0.0
  %v763 = vadd.f32 %v761, %v762
  %v764 = vsel %vm274, %v263, 0.0
  %v765 = vadd.f32 %v763, %v764
  %v766 = vsel %vm274, %v264, 0.0
  %v767 = vadd.f32 %v765, %v766
  %v768 = vsel %vm274, %v265, 0.0
  %v769 = vadd.f32 %v767, %v768
  %v770 = vsel %vm274, %v266, 0.0
  %v771 = vadd.f32 %v769, %v770
  %v772 = vsel %vm274, %v267, 0.0
  %v773 = vadd.f32 %v771, %v772
  %v774 = vsel %vm274, %v268, 0.0
  %v775 = vadd.f32 %v773, %v774
  %v776 = vsel %vm274, %v269, 0.0
  %v777 = vadd.f32 %v775, %v776
  %v778 = vsel %vm274, %v270, 0.0
  %v779 = vadd.f32 %v777, %v778
  %v780 = vsel %vm274, %v271, 0.0
  %v781 = vadd.f32 %v779, %v780
  %v782 = vsel %vm274, %v272, 0.0
  %v783 = vadd.f32 %v781, %v782
  %v784 = vsel %vm274, %v273, 0.0
  %v785 = vadd.f32 %v783, %v784
  %v786 = vrot.slane %v785, 4
  %v787 = vadd.f32 %v785, %v786
  %v788 = vrot.slane %v787, 2
  %v789 = vadd.f32 %v787, %v788
  %v790 = vrot.slane %v789, 1
  %v791 = vadd.f32 %v789, %v790
  %v792 = vrcp.pop 2048.0
  %v793 = vmul.f32 2048.0, %v792
  %v794 = vsub.f32 1.0, %v793
  %v795 = vmul.f32 %v792, %v794
  %v796 = vadd.f32 %v792, %v795
  %vm797 = vweird.f32 %v792
  %v798 = vsel %vm797, %v792, %v796
  %v799 = vmul.f32 %v791, %v798
  %v800 = vsub.f32 %v18, %v799
  %v801 = vsub.f32 %v19, %v799
  %v802 = vsub.f32 %v20, %v799
  %v803 = vsub.f32 %v21, %v799
  %v804 = vsub.f32 %v22, %v799
  %v805 = vsub.f32 %v23, %v799
  %v806 = vsub.f32 %v24, %v799
  %v807 = vsub.f32 %v25, %v799
  %v808 = vsub.f32 %v26, %v799
  %v809 = vsub.f32 %v27, %v799
  %v810 = vsub.f32 %v28, %v799
  %v811 = vsub.f32 %v29, %v799
  %v812 = vsub.f32 %v30, %v799
  %v813 = vsub.f32 %v31, %v799
  %v814 = vsub.f32 %v32, %v799
  %v815 = vsub.f32 %v33, %v799
  %v816 = vsub.f32 %v34, %v799
  %v817 = vsub.f32 %v35, %v799
  %v818 = vsub.f32 %v36, %v799
  %v819 = vsub.f32 %v37, %v799
  %v820 = vsub.f32 %v38, %v799
  %v821 = vsub.f32 %v39, %v799
  %v822 = vsub.f32 %v40, %v799
  %v823 = vsub.f32 %v41, %v799
  %v824 = vsub.f32 %v42, %v799
  %v825 = vsub.f32 %v43, %v799
  %v826 = vsub.f32 %v44, %v799
  %v827 = vsub.f32 %v45, %v799
  %v828 = vsub.f32 %v46, %v799
  %v829 = vsub.f32 %v47, %v799
  %v830 = vsub.f32 %v48, %v799
  %v831 = vsub.f32 %v49, %v799
  %v832 = vsub.f32 %v50, %v799
  %v833 = vsub.f32 %v51, %v799
  %v834 = vsub.f32 %v52, %v799
  %v835 = vsub.f32 %v53, %v799
  %v836 = vsub.f32 %v54, %v799
  %v837 = vsub.f32 %v55, %v799
  %v838 = vsub.f32 %v56, %v799
  %v839 = vsub.f32 %v57, %v799
  %v840 = vsub.f32 %v58, %v799
  %v841 = vsub.f32 %v59, %v799
  %v842 = vsub.f32 %v60, %v799
  %v843 = vsub.f32 %v61, %v799
  %v844 = vsub.f32 %v62, %v799
  %v845 = vsub.f32 %v63, %v799
  %v846 = vsub.f32 %v64, %v799
  %v847 = vsub.f32 %v65, %v799
  %v848 = vsub.f32 %v66, %v799
  %v849 = vsub.f32 %v67, %v799
  %v850 = vsub.f32 %v68, %v799
  %v851 = vsub.f32 %v69, %v799
  %v852 = vsub.f32 %v70, %v799
  %v853 = vsub.f32 %v71, %v799
  %v854 = vsub.f32 %v72, %v799
  %v855 = vsub.f32 %v73, %v799
  %v856 = vsub.f32 %v74, %v799
  %v857 = vsub.f32 %v75, %v799
  %v858 = vsub.f32 %v76, %v799
  %v859 = vsub.f32 %v77, %v799
  %v860 = vsub.f32 %v78, %v799
  %v861 = vsub.f32 %v79, %v799
  %v862 = vsub.f32 %v80, %v799
  %v863 = vsub.f32 %v81, %v799
  %v864 = vsub.f32 %v82, %v799
  %v865 = vsub.f32 %v83, %v799
  %v866 = vsub.f32 %v84, %v799
  %v867 = vsub.f32 %v85, %v799
  %v868 = vsub.f32 %v86, %v799
  %v869 = vsub.f32 %v87, %v799
  %v870 = vsub.f32 %v88, %v799
  %v871 = vsub.f32 %v89, %v799
  %v872 = vsub.f32 %v90, %v799
  %v873 = vsub.f32 %v91, %v799
  %v874 = vsub.f32 %v92, %v799
  %v875 = vsub.f32 %v93, %v799
  %v876 = vsub.f32 %v94, %v799
  %v877 = vsub.f32 %v95, %v799
  %v878 = vsub.f32 %v96, %v799
  %v879 = vsub.f32 %v97, %v799
  %v880 = vsub.f32 %v98, %v799
  %v881 = vsub.f32 %v99, %v799
  %v882 = vsub.f32 %v100, %v799
  %v883 = vsub.f32 %v101, %v799
  %v884 = vsub.f32 %v102, %v799
  %v885 = vsub.f32 %v103, %v799
  %v886 = vsub.f32 %v104, %v799
  %v887 = vsub.f32 %v105, %v799
  %v888 = vsub.f32 %v106, %v799
  %v889 = vsub.f32 %v107, %v799
  %v890 = vsub.f32 %v108, %v799
  %v891 = vsub.f32 %v109, %v799
  %v892 = vsub.f32 %v110, %v799
  %v893 = vsub.f32 %v111, %v799
  %v894 = vsub.f32 %v112, %v799
  %v895 = vsub.f32 %v113, %v799
  %v896 = vsub.f32 %v114, %v799
  %v897 = vsub.f32 %v115, %v799
  %v898 = vsub.f32 %v116, %v799
  %v899 = vsub.f32 %v117, %v799
  %v900 = vsub.f32 %v118, %v799
  %v901 = vsub.f32 %v119, %v799
  %v902 = vsub.f32 %v120, %v799
  %v903 = vsub.f32 %v121, %v799
  %v904 = vsub.f32 %v122, %v799
  %v905 = vsub.f32 %v123, %v799
  %v906 = vsub.f32 %v124, %v799
  %v907 = vsub.f32 %v125, %v799
  %v908 = vsub.f32 %v126, %v799
  %v909 = vsub.f32 %v127, %v799
  %v910 = vsub.f32 %v128, %v799
  %v911 = vsub.f32 %v129, %v799
  %v912 = vsub.f32 %v130, %v799
  %v913 = vsub.f32 %v131, %v799
  %v914 = vsub.f32 %v132, %v799
  %v915 = vsub.f32 %v133, %v799
  %v916 = vsub.f32 %v134, %v799
  %v917 = vsub.f32 %v135, %v799
  %v918 = vsub.f32 %v136, %v799
  %v919 = vsub.f32 %v137, %v799
  %v920 = vsub.f32 %v138, %v799
  %v921 = vsub.f32 %v139, %v799
  %v922 = vsub.f32 %v140, %v799
  %v923 = vsub.f32 %v141, %v799
  %v924 = vsub.f32 %v142, %v799
  %v925 = vsub.f32 %v143, %v799
  %v926 = vsub.f32 %v144, %v799
  %v927 = vsub.f32 %v145, %v799
  %v928 = vsub.f32 %v146, %v799
  %v929 = vsub.f32 %v147, %v799
  %v930 = vsub.f32 %v148, %v799
  %v931 = vsub.f32 %v149, %v799
  %v932 = vsub.f32 %v150, %v799
  %v933 = vsub.f32 %v151, %v799
  %v934 = vsub.f32 %v152, %v799
  %v935 = vsub.f32 %v153, %v799
  %v936 = vsub.f32 %v154, %v799
  %v937 = vsub.f32 %v155, %v799
  %v938 = vsub.f32 %v156, %v799
  %v939 = vsub.f32 %v157, %v799
  %v940 = vsub.f32 %v158, %v799
  %v941 = vsub.f32 %v159, %v799
  %v942 = vsub.f32 %v160, %v799
  %v943 = vsub.f32 %v161, %v799
  %v944 = vsub.f32 %v162, %v799
  %v945 = vsub.f32 %v163, %v799
  %v946 = vsub.f32 %v164, %v799
  %v947 = vsub.f32 %v165, %v799
  %v948 = vsub.f32 %v166, %v799
  %v949 = vsub.f32 %v167, %v799
  %v950 = vsub.f32 %v168, %v799
  %v951 = vsub.f32 %v169, %v799
  %v952 = vsub.f32 %v170, %v799
  %v953 = vsub.f32 %v171, %v799
  %v954 = vsub.f32 %v172, %v799
  %v955 = vsub.f32 %v173, %v799
  %v956 = vsub.f32 %v174, %v799
  %v957 = vsub.f32 %v175, %v799
  %v958 = vsub.f32 %v176, %v799
  %v959 = vsub.f32 %v177, %v799
  %v960 = vsub.f32 %v178, %v799
  %v961 = vsub.f32 %v179, %v799
  %v962 = vsub.f32 %v180, %v799
  %v963 = vsub.f32 %v181, %v799
  %v964 = vsub.f32 %v182, %v799
  %v965 = vsub.f32 %v183, %v799
  %v966 = vsub.f32 %v184, %v799
  %v967 = vsub.f32 %v185, %v799
  %v968 = vsub.f32 %v186, %v799
  %v969 = vsub.f32 %v187, %v799
  %v970 = vsub.f32 %v188, %v799
  %v971 = vsub.f32 %v189, %v799
  %v972 = vsub.f32 %v190, %v799
  %v973 = vsub.f32 %v191, %v799
  %v974 = vsub.f32 %v192, %v799
  %v975 = vsub.f32 %v193, %v799
  %v976 = vsub.f32 %v194, %v799
  %v977 = vsub.f32 %v195, %v799
  %v978 = vsub.f32 %v196, %v799
  %v979 = vsub.f32 %v197, %v799
  %v980 = vsub.f32 %v198, %v799
  %v981 = vsub.f32 %v199, %v799
  %v982 = vsub.f32 %v200, %v799
  %v983 = vsub.f32 %v201, %v799
  %v984 = vsub.f32 %v202, %v799
  %v985 = vsub.f32 %v203, %v799
  %v986 = vsub.f32 %v204, %v799
  %v987 = vsub.f32 %v205, %v799
  %v988 = vsub.f32 %v206, %v799
  %v989 = vsub.f32 %v207, %v799
  %v990 = vsub.f32 %v208, %v799
  %v991 = vsub.f32 %v209, %v799
  %v992 = vsub.f32 %v210, %v799
  %v993 = vsub.f32 %v211, %v799
  %v994 = vsub.f32 %v212, %v799
  %v995 = vsub.f32 %v213, %v799
  %v996 = vsub.f32 %v214, %v799
  %v997 = vsub.f32 %v215, %v799
  %v998 = vsub.f32 %v216, %v799
  %v999 = vsub.f32 %v217, %v799
  %v1000 = vsub.f32 %v218, %v799
  %v1001 = vsub.f32 %v219, %v799
  %v1002 = vsub.f32 %v220, %v799
  %v1003 = vsub.f32 %v221, %v799
  %v1004 = vsub.f32 %v222, %v799
  %v1005 = vsub.f32 %v223, %v799
  %v1006 = vsub.f32 %v224, %v799
  %v1007 = vsub.f32 %v225, %v799
  %v1008 = vsub.f32 %v226, %v799
  %v1009 = vsub.f32 %v227, %v799
  %v1010 = vsub.f32 %v228, %v799
  %v1011 = vsub.f32 %v229, %v799
  %v1012 = vsub.f32 %v230, %v799
  %v1013 = vsub.f32 %v231, %v799
  %v1014 = vsub.f32 %v232, %v799
  %v1015 = vsub.f32 %v233, %v799
  %v1016 = vsub.f32 %v234, %v799
  %v1017 = vsub.f32 %v235, %v799
  %v1018 = vsub.f32 %v236, %v799
  %v1019 = vsub.f32 %v237, %v799
  %v1020 = vsub.f32 %v238, %v799
  %v1021 = vsub.f32 %v239, %v799
  %v1022 = vsub.f32 %v240, %v799
  %v1023 = vsub.f32 %v241, %v799
  %v1024 = vsub.f32 %v242, %v799
  %v1025 = vsub.f32 %v243, %v799
  %v1026 = vsub.f32 %v244, %v799
  %v1027 = vsub.f32 %v245, %v799
  %v1028 = vsub.f32 %v246, %v799
  %v1029 = vsub.f32 %v247, %v799
  %v1030 = vsub.f32 %v248, %v799
  %v1031 = vsub.f32 %v249, %v799
  %v1032 = vsub.f32 %v250, %v799
  %v1033 = vsub.f32 %v251, %v799
  %v1034 = vsub.f32 %v252, %v799
  %v1035 = vsub.f32 %v253, %v799
  %v1036 = vsub.f32 %v254, %v799
  %v1037 = vsub.f32 %v255, %v799
  %v1038 = vsub.f32 %v256, %v799
  %v1039 = vsub.f32 %v257, %v799
  %v1040 = vsub.f32 %v258, %v799
  %v1041 = vsub.f32 %v259, %v799
  %v1042 = vsub.f32 %v260, %v799
  %v1043 = vsub.f32 %v261, %v799
  %v1044 = vsub.f32 %v262, %v799
  %v1045 = vsub.f32 %v263, %v799
  %v1046 = vsub.f32 %v264, %v799
  %v1047 = vsub.f32 %v265, %v799
  %v1048 = vsub.f32 %v266, %v799
  %v1049 = vsub.f32 %v267, %v799
  %v1050 = vsub.f32 %v268, %v799
  %v1051 = vsub.f32 %v269, %v799
  %v1052 = vsub.f32 %v270, %v799
  %v1053 = vsub.f32 %v271, %v799
  %v1054 = vsub.f32 %v272, %v799
  %v1055 = vsub.f32 %v273, %v799
  %v1056 = vmul.f32 %v800, %v800
  %v1057 = vmul.f32 %v801, %v801
  %v1058 = vmul.f32 %v802, %v802
  %v1059 = vmul.f32 %v803, %v803
  %v1060 = vmul.f32 %v804, %v804
  %v1061 = vmul.f32 %v805, %v805
  %v1062 = vmul.f32 %v806, %v806
  %v1063 = vmul.f32 %v807, %v807
  %v1064 = vmul.f32 %v808, %v808
  %v1065 = vmul.f32 %v809, %v809
  %v1066 = vmul.f32 %v810, %v810
  %v1067 = vmul.f32 %v811, %v811
  %v1068 = vmul.f32 %v812, %v812
  %v1069 = vmul.f32 %v813, %v813
  %v1070 = vmul.f32 %v814, %v814
  %v1071 = vmul.f32 %v815, %v815
  %v1072 = vmul.f32 %v816, %v816
  %v1073 = vmul.f32 %v817, %v817
  %v1074 = vmul.f32 %v818, %v818
  %v1075 = vmul.f32 %v819, %v819
  %v1076 = vmul.f32 %v820, %v820
  %v1077 = vmul.f32 %v821, %v821
  %v1078 = vmul.f32 %v822, %v822
  %v1079 = vmul.f32 %v823, %v823
  %v1080 = vmul.f32 %v824, %v824
  %v1081 = vmul.f32 %v825, %v825
  %v1082 = vmul.f32 %v826, %v826
  %v1083 = vmul.f32 %v827, %v827
  %v1084 = vmul.f32 %v828, %v828
  %v1085 = vmul.f32 %v829, %v829
  %v1086 = vmul.f32 %v830, %v830
  %v1087 = vmul.f32 %v831, %v831
  %v1088 = vmul.f32 %v832, %v832
  %v1089 = vmul.f32 %v833, %v833
  %v1090 = vmul.f32 %v834, %v834
  %v1091 = vmul.f32 %v835, %v835
  %v1092 = vmul.f32 %v836, %v836
  %v1093 = vmul.f32 %v837, %v837
  %v1094 = vmul.f32 %v838, %v838
  %v1095 = vmul.f32 %v839, %v839
  %v1096 = vmul.f32 %v840, %v840
  %v1097 = vmul.f32 %v841, %v841
  %v1098 = vmul.f32 %v842, %v842
  %v1099 = vmul.f32 %v843, %v843
  %v1100 = vmul.f32 %v844, %v844
  %v1101 = vmul.f32 %v845, %v845
  %v1102 = vmul.f32 %v846, %v846
  %v1103 = vmul.f32 %v847, %v847
  %v1104 = vmul.f32 %v848, %v848
  %v1105 = vmul.f32 %v849, %v849
  %v1106 = vmul.f32 %v850, %v850
  %v1107 = vmul.f32 %v851, %v851
  %v1108 = vmul.f32 %v852, %v852
  %v1109 = vmul.f32 %v853, %v853
  %v1110 = vmul.f32 %v854, %v854
  %v1111 = vmul.f32 %v855, %v855
  %v1112 = vmul.f32 %v856, %v856
  %v1113 = vmul.f32 %v857, %v857
  %v1114 = vmul.f32 %v858, %v858
  %v1115 = vmul.f32 %v859, %v859
  %v1116 = vmul.f32 %v860, %v860
  %v1117 = vmul.f32 %v861, %v861
  %v1118 = vmul.f32 %v862, %v862
  %v1119 = vmul.f32 %v863, %v863
  %v1120 = vmul.f32 %v864, %v864
  %v1121 = vmul.f32 %v865, %v865
  %v1122 = vmul.f32 %v866, %v866
  %v1123 = vmul.f32 %v867, %v867
  %v1124 = vmul.f32 %v868, %v868
  %v1125 = vmul.f32 %v869, %v869
  %v1126 = vmul.f32 %v870, %v870
  %v1127 = vmul.f32 %v871, %v871
  %v1128 = vmul.f32 %v872, %v872
  %v1129 = vmul.f32 %v873, %v873
  %v1130 = vmul.f32 %v874, %v874
  %v1131 = vmul.f32 %v875, %v875
  %v1132 = vmul.f32 %v876, %v876
  %v1133 = vmul.f32 %v877, %v877
  %v1134 = vmul.f32 %v878, %v878
  %v1135 = vmul.f32 %v879, %v879
  %v1136 = vmul.f32 %v880, %v880
  %v1137 = vmul.f32 %v881, %v881
  %v1138 = vmul.f32 %v882, %v882
  %v1139 = vmul.f32 %v883, %v883
  %v1140 = vmul.f32 %v884, %v884
  %v1141 = vmul.f32 %v885, %v885
  %v1142 = vmul.f32 %v886, %v886
  %v1143 = vmul.f32 %v887, %v887
  %v1144 = vmul.f32 %v888, %v888
  %v1145 = vmul.f32 %v889, %v889
  %v1146 = vmul.f32 %v890, %v890
  %v1147 = vmul.f32 %v891, %v891
  %v1148 = vmul.f32 %v892, %v892
  %v1149 = vmul.f32 %v893, %v893
  %v1150 = vmul.f32 %v894, %v894
  %v1151 = vmul.f32 %v895, %v895
  %v1152 = vmul.f32 %v896, %v896
  %v1153 = vmul.f32 %v897, %v897
  %v1154 = vmul.f32 %v898, %v898
  %v1155 = vmul.f32 %v899, %v899
  %v1156 = vmul.f32 %v900, %v900
  %v1157 = vmul.f32 %v901, %v901
  %v1158 = vmul.f32 %v902, %v902
  %v1159 = vmul.f32 %v903, %v903
  %v1160 = vmul.f32 %v904, %v904
  %v1161 = vmul.f32 %v905, %v905
  %v1162 = vmul.f32 %v906, %v906
  %v1163 = vmul.f32 %v907, %v907
  %v1164 = vmul.f32 %v908, %v908
  %v1165 = vmul.f32 %v909, %v909
  %v1166 = vmul.f32 %v910, %v910
  %v1167 = vmul.f32 %v911, %v911
  %v1168 = vmul.f32 %v912, %v912
  %v1169 = vmul.f32 %v913, %v913
  %v1170 = vmul.f32 %v914, %v914
  %v1171 = vmul.f32 %v915, %v915
  %v1172 = vmul.f32 %v916, %v916
  %v1173 = vmul.f32 %v917, %v917
  %v1174 = vmul.f32 %v918, %v918
  %v1175 = vmul.f32 %v919, %v919
  %v1176 = vmul.f32 %v920, %v920
  %v1177 = vmul.f32 %v921, %v921
  %v1178 = vmul.f32 %v922, %v922
  %v1179 = vmul.f32 %v923, %v923
  %v1180 = vmul.f32 %v924, %v924
  %v1181 = vmul.f32 %v925, %v925
  %v1182 = vmul.f32 %v926, %v926
  %v1183 = vmul.f32 %v927, %v927
  %v1184 = vmul.f32 %v928, %v928
  %v1185 = vmul.f32 %v929, %v929
  %v1186 = vmul.f32 %v930, %v930
  %v1187 = vmul.f32 %v931, %v931
  %v1188 = vmul.f32 %v932, %v932
  %v1189 = vmul.f32 %v933, %v933
  %v1190 = vmul.f32 %v934, %v934
  %v1191 = vmul.f32 %v935, %v935
  %v1192 = vmul.f32 %v936, %v936
  %v1193 = vmul.f32 %v937, %v937
  %v1194 = vmul.f32 %v938, %v938
  %v1195 = vmul.f32 %v939, %v939
  %v1196 = vmul.f32 %v940, %v940
  %v1197 = vmul.f32 %v941, %v941
  %v1198 = vmul.f32 %v942, %v942
  %v1199 = vmul.f32 %v943, %v943
  %v1200 = vmul.f32 %v944, %v944
  %v1201 = vmul.f32 %v945, %v945
  %v1202 = vmul.f32 %v946, %v946
  %v1203 = vmul.f32 %v947, %v947
  %v1204 = vmul.f32 %v948, %v948
  %v1205 = vmul.f32 %v949, %v949
  %v1206 = vmul.f32 %v950, %v950
  %v1207 = vmul.f32 %v951, %v951
  %v1208 = vmul.f32 %v952, %v952
  %v1209 = vmul.f32 %v953, %v953
  %v1210 = vmul.f32 %v954, %v954
  %v1211 = vmul.f32 %v955, %v955
  %v1212 = vmul.f32 %v956, %v956
  %v1213 = vmul.f32 %v957, %v957
  %v1214 = vmul.f32 %v958, %v958
  %v1215 = vmul.f32 %v959, %v959
  %v1216 = vmul.f32 %v960, %v960
  %v1217 = vmul.f32 %v961, %v961
  %v1218 = vmul.f32 %v962, %v962
  %v1219 = vmul.f32 %v963, %v963
  %v1220 = vmul.f32 %v964, %v964
  %v1221 = vmul.f32 %v965, %v965
  %v1222 = vmul.f32 %v966, %v966
  %v1223 = vmul.f32 %v967, %v967
  %v1224 = vmul.f32 %v968, %v968
  %v1225 = vmul.f32 %v969, %v969
  %v1226 = vmul.f32 %v970, %v970
  %v1227 = vmul.f32 %v971, %v971
  %v1228 = vmul.f32 %v972, %v972
  %v1229 = vmul.f32 %v973, %v973
  %v1230 = vmul.f32 %v974, %v974
  %v1231 = vmul.f32 %v975, %v975
  %v1232 = vmul.f32 %v976, %v976
  %v1233 = vmul.f32 %v977, %v977
  %v1234 = vmul.f32 %v978, %v978
  %v1235 = vmul.f32 %v979, %v979
  %v1236 = vmul.f32 %v980, %v980
  %v1237 = vmul.f32 %v981, %v981
  %v1238 = vmul.f32 %v982, %v982
  %v1239 = vmul.f32 %v983, %v983
  %v1240 = vmul.f32 %v984, %v984
  %v1241 = vmul.f32 %v985, %v985
  %v1242 = vmul.f32 %v986, %v986
  %v1243 = vmul.f32 %v987, %v987
  %v1244 = vmul.f32 %v988, %v988
  %v1245 = vmul.f32 %v989, %v989
  %v1246 = vmul.f32 %v990, %v990
  %v1247 = vmul.f32 %v991, %v991
  %v1248 = vmul.f32 %v992, %v992
  %v1249 = vmul.f32 %v993, %v993
  %v1250 = vmul.f32 %v994, %v994
  %v1251 = vmul.f32 %v995, %v995
  %v1252 = vmul.f32 %v996, %v996
  %v1253 = vmul.f32 %v997, %v997
  %v1254 = vmul.f32 %v998, %v998
  %v1255 = vmul.f32 %v999, %v999
  %v1256 = vmul.f32 %v1000, %v1000
  %v1257 = vmul.f32 %v1001, %v1001
  %v1258 = vmul.f32 %v1002, %v1002
  %v1259 = vmul.f32 %v1003, %v1003
  %v1260 = vmul.f32 %v1004, %v1004
  %v1261 = vmul.f32 %v1005, %v1005
  %v1262 = vmul.f32 %v1006, %v1006
  %v1263 = vmul.f32 %v1007, %v1007
  %v1264 = vmul.f32 %v1008, %v1008
  %v1265 = vmul.f32 %v1009, %v1009
  %v1266 = vmul.f32 %v1010, %v1010
  %v1267 = vmul.f32 %v1011, %v1011
  %v1268 = vmul.f32 %v1012, %v1012
  %v1269 = vmul.f32 %v1013, %v1013
  %v1270 = vmul.f32 %v1014, %v1014
  %v1271 = vmul.f32 %v1015, %v1015
  %v1272 = vmul.f32 %v1016, %v1016
  %v1273 = vmul.f32 %v1017, %v1017
  %v1274 = vmul.f32 %v1018, %v1018
  %v1275 = vmul.f32 %v1019, %v1019
  %v1276 = vmul.f32 %v1020, %v1020
  %v1277 = vmul.f32 %v1021, %v1021
  %v1278 = vmul.f32 %v1022, %v1022
  %v1279 = vmul.f32 %v1023, %v1023
  %v1280 = vmul.f32 %v1024, %v1024
  %v1281 = vmul.f32 %v1025, %v1025
  %v1282 = vmul.f32 %v1026, %v1026
  %v1283 = vmul.f32 %v1027, %v1027
  %v1284 = vmul.f32 %v1028, %v1028
  %v1285 = vmul.f32 %v1029, %v1029
  %v1286 = vmul.f32 %v1030, %v1030
  %v1287 = vmul.f32 %v1031, %v1031
  %v1288 = vmul.f32 %v1032, %v1032
  %v1289 = vmul.f32 %v1033, %v1033
  %v1290 = vmul.f32 %v1034, %v1034
  %v1291 = vmul.f32 %v1035, %v1035
  %v1292 = vmul.f32 %v1036, %v1036
  %v1293 = vmul.f32 %v1037, %v1037
  %v1294 = vmul.f32 %v1038, %v1038
  %v1295 = vmul.f32 %v1039, %v1039
  %v1296 = vmul.f32 %v1040, %v1040
  %v1297 = vmul.f32 %v1041, %v1041
  %v1298 = vmul.f32 %v1042, %v1042
  %v1299 = vmul.f32 %v1043, %v1043
  %v1300 = vmul.f32 %v1044, %v1044
  %v1301 = vmul.f32 %v1045, %v1045
  %v1302 = vmul.f32 %v1046, %v1046
  %v1303 = vmul.f32 %v1047, %v1047
  %v1304 = vmul.f32 %v1048, %v1048
  %v1305 = vmul.f32 %v1049, %v1049
  %v1306 = vmul.f32 %v1050, %v1050
  %v1307 = vmul.f32 %v1051, %v1051
  %v1308 = vmul.f32 %v1052, %v1052
  %v1309 = vmul.f32 %v1053, %v1053
  %v1310 = vmul.f32 %v1054, %v1054
  %v1311 = vmul.f32 %v1055, %v1055
  %v1312 = vsel %vm274, %v1056, 0.0
  %v1313 = vsel %vm274, %v1057, 0.0
  %v1314 = vadd.f32 %v1312, %v1313
  %v1315 = vsel %vm274, %v1058, 0.0
  %v1316 = vadd.f32 %v1314, %v1315
  %v1317 = vsel %vm274, %v1059, 0.0
  %v1318 = vadd.f32 %v1316, %v1317
  %v1319 = vsel %vm274, %v1060, 0.0
  %v1320 = vadd.f32 %v1318, %v1319
  %v1321 = vsel %vm274, %v1061, 0.0
  %v1322 = vadd.f32 %v1320, %v1321
  %v1323 = vsel %vm274, %v1062, 0.0
  %v1324 = vadd.f32 %v1322, %v1323
  %v1325 = vsel %vm274, %v1063, 0.0
  %v1326 = vadd.f32 %v1324, %v1325
  %v1327 = vsel %vm274, %v1064, 0.0
  %v1328 = vadd.f32 %v1326, %v1327
  %v1329 = vsel %vm274, %v1065, 0.0
  %v1330 = vadd.f32 %v1328, %v1329
  %v1331 = vsel %vm274, %v1066, 0.0
  %v1332 = vadd.f32 %v1330, %v1331
  %v1333 = vsel %vm274, %v1067, 0.0
  %v1334 = vadd.f32 %v1332, %v1333
  %v1335 = vsel %vm274, %v1068, 0.0
  %v1336 = vadd.f32 %v1334, %v1335
  %v1337 = vsel %vm274, %v1069, 0.0
  %v1338 = vadd.f32 %v1336, %v1337
  %v1339 = vsel %vm274, %v1070, 0.0
  %v1340 = vadd.f32 %v1338, %v1339
  %v1341 = vsel %vm274, %v1071, 0.0
  %v1342 = vadd.f32 %v1340, %v1341
  %v1343 = vsel %vm274, %v1072, 0.0
  %v1344 = vadd.f32 %v1342, %v1343
  %v1345 = vsel %vm274, %v1073, 0.0
  %v1346 = vadd.f32 %v1344, %v1345
  %v1347 = vsel %vm274, %v1074, 0.0
  %v1348 = vadd.f32 %v1346, %v1347
  %v1349 = vsel %vm274, %v1075, 0.0
  %v1350 = vadd.f32 %v1348, %v1349
  %v1351 = vsel %vm274, %v1076, 0.0
  %v1352 = vadd.f32 %v1350, %v1351
  %v1353 = vsel %vm274, %v1077, 0.0
  %v1354 = vadd.f32 %v1352, %v1353
  %v1355 = vsel %vm274, %v1078, 0.0
  %v1356 = vadd.f32 %v1354, %v1355
  %v1357 = vsel %vm274, %v1079, 0.0
  %v1358 = vadd.f32 %v1356, %v1357
  %v1359 = vsel %vm274, %v1080, 0.0
  %v1360 = vadd.f32 %v1358, %v1359
  %v1361 = vsel %vm274, %v1081, 0.0
  %v1362 = vadd.f32 %v1360, %v1361
  %v1363 = vsel %vm274, %v1082, 0.0
  %v1364 = vadd.f32 %v1362, %v1363
  %v1365 = vsel %vm274, %v1083, 0.0
  %v1366 = vadd.f32 %v1364, %v1365
  %v1367 = vsel %vm274, %v1084, 0.0
  %v1368 = vadd.f32 %v1366, %v1367
  %v1369 = vsel %vm274, %v1085, 0.0
  %v1370 = vadd.f32 %v1368, %v1369
  %v1371 = vsel %vm274, %v1086, 0.0
  %v1372 = vadd.f32 %v1370, %v1371
  %v1373 = vsel %vm274, %v1087, 0.0
  %v1374 = vadd.f32 %v1372, %v1373
  %v1375 = vsel %vm274, %v1088, 0.0
  %v1376 = vadd.f32 %v1374, %v1375
  %v1377 = vsel %vm274, %v1089, 0.0
  %v1378 = vadd.f32 %v1376, %v1377
  %v1379 = vsel %vm274, %v1090, 0.0
  %v1380 = vadd.f32 %v1378, %v1379
  %v1381 = vsel %vm274, %v1091, 0.0
  %v1382 = vadd.f32 %v1380, %v1381
  %v1383 = vsel %vm274, %v1092, 0.0
  %v1384 = vadd.f32 %v1382, %v1383
  %v1385 = vsel %vm274, %v1093, 0.0
  %v1386 = vadd.f32 %v1384, %v1385
  %v1387 = vsel %vm274, %v1094, 0.0
  %v1388 = vadd.f32 %v1386, %v1387
  %v1389 = vsel %vm274, %v1095, 0.0
  %v1390 = vadd.f32 %v1388, %v1389
  %v1391 = vsel %vm274, %v1096, 0.0
  %v1392 = vadd.f32 %v1390, %v1391
  %v1393 = vsel %vm274, %v1097, 0.0
  %v1394 = vadd.f32 %v1392, %v1393
  %v1395 = vsel %vm274, %v1098, 0.0
  %v1396 = vadd.f32 %v1394, %v1395
  %v1397 = vsel %vm274, %v1099, 0.0
  %v1398 = vadd.f32 %v1396, %v1397
  %v1399 = vsel %vm274, %v1100, 0.0
  %v1400 = vadd.f32 %v1398, %v1399
  %v1401 = vsel %vm274, %v1101, 0.0
  %v1402 = vadd.f32 %v1400, %v1401
  %v1403 = vsel %vm274, %v1102, 0.0
  %v1404 = vadd.f32 %v1402, %v1403
  %v1405 = vsel %vm274, %v1103, 0.0
  %v1406 = vadd.f32 %v1404, %v1405
  %v1407 = vsel %vm274, %v1104, 0.0
  %v1408 = vadd.f32 %v1406, %v1407
  %v1409 = vsel %vm274, %v1105, 0.0
  %v1410 = vadd.f32 %v1408, %v1409
  %v1411 = vsel %vm274, %v1106, 0.0
  %v1412 = vadd.f32 %v1410, %v1411
  %v1413 = vsel %vm274, %v1107, 0.0
  %v1414 = vadd.f32 %v1412, %v1413
  %v1415 = vsel %vm274, %v1108, 0.0
  %v1416 = vadd.f32 %v1414, %v1415
  %v1417 = vsel %vm274, %v1109, 0.0
  %v1418 = vadd.f32 %v1416, %v1417
  %v1419 = vsel %vm274, %v1110, 0.0
  %v1420 = vadd.f32 %v1418, %v1419
  %v1421 = vsel %vm274, %v1111, 0.0
  %v1422 = vadd.f32 %v1420, %v1421
  %v1423 = vsel %vm274, %v1112, 0.0
  %v1424 = vadd.f32 %v1422, %v1423
  %v1425 = vsel %vm274, %v1113, 0.0
  %v1426 = vadd.f32 %v1424, %v1425
  %v1427 = vsel %vm274, %v1114, 0.0
  %v1428 = vadd.f32 %v1426, %v1427
  %v1429 = vsel %vm274, %v1115, 0.0
  %v1430 = vadd.f32 %v1428, %v1429
  %v1431 = vsel %vm274, %v1116, 0.0
  %v1432 = vadd.f32 %v1430, %v1431
  %v1433 = vsel %vm274, %v1117, 0.0
  %v1434 = vadd.f32 %v1432, %v1433
  %v1435 = vsel %vm274, %v1118, 0.0
  %v1436 = vadd.f32 %v1434, %v1435
  %v1437 = vsel %vm274, %v1119, 0.0
  %v1438 = vadd.f32 %v1436, %v1437
  %v1439 = vsel %vm274, %v1120, 0.0
  %v1440 = vadd.f32 %v1438, %v1439
  %v1441 = vsel %vm274, %v1121, 0.0
  %v1442 = vadd.f32 %v1440, %v1441
  %v1443 = vsel %vm274, %v1122, 0.0
  %v1444 = vadd.f32 %v1442, %v1443
  %v1445 = vsel %vm274, %v1123, 0.0
  %v1446 = vadd.f32 %v1444, %v1445
  %v1447 = vsel %vm274, %v1124, 0.0
  %v1448 = vadd.f32 %v1446, %v1447
  %v1449 = vsel %vm274, %v1125, 0.0
  %v1450 = vadd.f32 %v1448, %v1449
  %v1451 = vsel %vm274, %v1126, 0.0
  %v1452 = vadd.f32 %v1450, %v1451
  %v1453 = vsel %vm274, %v1127, 0.0
  %v1454 = vadd.f32 %v1452, %v1453
  %v1455 = vsel %vm274, %v1128, 0.0
  %v1456 = vadd.f32 %v1454, %v1455
  %v1457 = vsel %vm274, %v1129, 0.0
  %v1458 = vadd.f32 %v1456, %v1457
  %v1459 = vsel %vm274, %v1130, 0.0
  %v1460 = vadd.f32 %v1458, %v1459
  %v1461 = vsel %vm274, %v1131, 0.0
  %v1462 = vadd.f32 %v1460, %v1461
  %v1463 = vsel %vm274, %v1132, 0.0
  %v1464 = vadd.f32 %v1462, %v1463
  %v1465 = vsel %vm274, %v1133, 0.0
  %v1466 = vadd.f32 %v1464, %v1465
  %v1467 = vsel %vm274, %v1134, 0.0
  %v1468 = vadd.f32 %v1466, %v1467
  %v1469 = vsel %vm274, %v1135, 0.0
  %v1470 = vadd.f32 %v1468, %v1469
  %v1471 = vsel %vm274, %v1136, 0.0
  %v1472 = vadd.f32 %v1470, %v1471
  %v1473 = vsel %vm274, %v1137, 0.0
  %v1474 = vadd.f32 %v1472, %v1473
  %v1475 = vsel %vm274, %v1138, 0.0
  %v1476 = vadd.f32 %v1474, %v1475
  %v1477 = vsel %vm274, %v1139, 0.0
  %v1478 = vadd.f32 %v1476, %v1477
  %v1479 = vsel %vm274, %v1140, 0.0
  %v1480 = vadd.f32 %v1478, %v1479
  %v1481 = vsel %vm274, %v1141, 0.0
  %v1482 = vadd.f32 %v1480, %v1481
  %v1483 = vsel %vm274, %v1142, 0.0
  %v1484 = vadd.f32 %v1482, %v1483
  %v1485 = vsel %vm274, %v1143, 0.0
  %v1486 = vadd.f32 %v1484, %v1485
  %v1487 = vsel %vm274, %v1144, 0.0
  %v1488 = vadd.f32 %v1486, %v1487
  %v1489 = vsel %vm274, %v1145, 0.0
  %v1490 = vadd.f32 %v1488, %v1489
  %v1491 = vsel %vm274, %v1146, 0.0
  %v1492 = vadd.f32 %v1490, %v1491
  %v1493 = vsel %vm274, %v1147, 0.0
  %v1494 = vadd.f32 %v1492, %v1493
  %v1495 = vsel %vm274, %v1148, 0.0
  %v1496 = vadd.f32 %v1494, %v1495
  %v1497 = vsel %vm274, %v1149, 0.0
  %v1498 = vadd.f32 %v1496, %v1497
  %v1499 = vsel %vm274, %v1150, 0.0
  %v1500 = vadd.f32 %v1498, %v1499
  %v1501 = vsel %vm274, %v1151, 0.0
  %v1502 = vadd.f32 %v1500, %v1501
  %v1503 = vsel %vm274, %v1152, 0.0
  %v1504 = vadd.f32 %v1502, %v1503
  %v1505 = vsel %vm274, %v1153, 0.0
  %v1506 = vadd.f32 %v1504, %v1505
  %v1507 = vsel %vm274, %v1154, 0.0
  %v1508 = vadd.f32 %v1506, %v1507
  %v1509 = vsel %vm274, %v1155, 0.0
  %v1510 = vadd.f32 %v1508, %v1509
  %v1511 = vsel %vm274, %v1156, 0.0
  %v1512 = vadd.f32 %v1510, %v1511
  %v1513 = vsel %vm274, %v1157, 0.0
  %v1514 = vadd.f32 %v1512, %v1513
  %v1515 = vsel %vm274, %v1158, 0.0
  %v1516 = vadd.f32 %v1514, %v1515
  %v1517 = vsel %vm274, %v1159, 0.0
  %v1518 = vadd.f32 %v1516, %v1517
  %v1519 = vsel %vm274, %v1160, 0.0
  %v1520 = vadd.f32 %v1518, %v1519
  %v1521 = vsel %vm274, %v1161, 0.0
  %v1522 = vadd.f32 %v1520, %v1521
  %v1523 = vsel %vm274, %v1162, 0.0
  %v1524 = vadd.f32 %v1522, %v1523
  %v1525 = vsel %vm274, %v1163, 0.0
  %v1526 = vadd.f32 %v1524, %v1525
  %v1527 = vsel %vm274, %v1164, 0.0
  %v1528 = vadd.f32 %v1526, %v1527
  %v1529 = vsel %vm274, %v1165, 0.0
  %v1530 = vadd.f32 %v1528, %v1529
  %v1531 = vsel %vm274, %v1166, 0.0
  %v1532 = vadd.f32 %v1530, %v1531
  %v1533 = vsel %vm274, %v1167, 0.0
  %v1534 = vadd.f32 %v1532, %v1533
  %v1535 = vsel %vm274, %v1168, 0.0
  %v1536 = vadd.f32 %v1534, %v1535
  %v1537 = vsel %vm274, %v1169, 0.0
  %v1538 = vadd.f32 %v1536, %v1537
  %v1539 = vsel %vm274, %v1170, 0.0
  %v1540 = vadd.f32 %v1538, %v1539
  %v1541 = vsel %vm274, %v1171, 0.0
  %v1542 = vadd.f32 %v1540, %v1541
  %v1543 = vsel %vm274, %v1172, 0.0
  %v1544 = vadd.f32 %v1542, %v1543
  %v1545 = vsel %vm274, %v1173, 0.0
  %v1546 = vadd.f32 %v1544, %v1545
  %v1547 = vsel %vm274, %v1174, 0.0
  %v1548 = vadd.f32 %v1546, %v1547
  %v1549 = vsel %vm274, %v1175, 0.0
  %v1550 = vadd.f32 %v1548, %v1549
  %v1551 = vsel %vm274, %v1176, 0.0
  %v1552 = vadd.f32 %v1550, %v1551
  %v1553 = vsel %vm274, %v1177, 0.0
  %v1554 = vadd.f32 %v1552, %v1553
  %v1555 = vsel %vm274, %v1178, 0.0
  %v1556 = vadd.f32 %v1554, %v1555
  %v1557 = vsel %vm274, %v1179, 0.0
  %v1558 = vadd.f32 %v1556, %v1557
  %v1559 = vsel %vm274, %v1180, 0.0
  %v1560 = vadd.f32 %v1558, %v1559
  %v1561 = vsel %vm274, %v1181, 0.0
  %v1562 = vadd.f32 %v1560, %v1561
  %v1563 = vsel %vm274, %v1182, 0.0
  %v1564 = vadd.f32 %v1562, %v1563
  %v1565 = vsel %vm274, %v1183, 0.0
  %v1566 = vadd.f32 %v1564, %v1565
  %v1567 = vsel %vm274, %v1184, 0.0
  %v1568 = vadd.f32 %v1566, %v1567
  %v1569 = vsel %vm274, %v1185, 0.0
  %v1570 = vadd.f32 %v1568, %v1569
  %v1571 = vsel %vm274, %v1186, 0.0
  %v1572 = vadd.f32 %v1570, %v1571
  %v1573 = vsel %vm274, %v1187, 0.0
  %v1574 = vadd.f32 %v1572, %v1573
  %v1575 = vsel %vm274, %v1188, 0.0
  %v1576 = vadd.f32 %v1574, %v1575
  %v1577 = vsel %vm274, %v1189, 0.0
  %v1578 = vadd.f32 %v1576, %v1577
  %v1579 = vsel %vm274, %v1190, 0.0
  %v1580 = vadd.f32 %v1578, %v1579
  %v1581 = vsel %vm274, %v1191, 0.0
  %v1582 = vadd.f32 %v1580, %v1581
  %v1583 = vsel %vm274, %v1192, 0.0
  %v1584 = vadd.f32 %v1582, %v1583
  %v1585 = vsel %vm274, %v1193, 0.0
  %v1586 = vadd.f32 %v1584, %v1585
  %v1587 = vsel %vm274, %v1194, 0.0
  %v1588 = vadd.f32 %v1586, %v1587
  %v1589 = vsel %vm274, %v1195, 0.0
  %v1590 = vadd.f32 %v1588, %v1589
  %v1591 = vsel %vm274, %v1196, 0.0
  %v1592 = vadd.f32 %v1590, %v1591
  %v1593 = vsel %vm274, %v1197, 0.0
  %v1594 = vadd.f32 %v1592, %v1593
  %v1595 = vsel %vm274, %v1198, 0.0
  %v1596 = vadd.f32 %v1594, %v1595
  %v1597 = vsel %vm274, %v1199, 0.0
  %v1598 = vadd.f32 %v1596, %v1597
  %v1599 = vsel %vm274, %v1200, 0.0
  %v1600 = vadd.f32 %v1598, %v1599
  %v1601 = vsel %vm274, %v1201, 0.0
  %v1602 = vadd.f32 %v1600, %v1601
  %v1603 = vsel %vm274, %v1202, 0.0
  %v1604 = vadd.f32 %v1602, %v1603
  %v1605 = vsel %vm274, %v1203, 0.0
  %v1606 = vadd.f32 %v1604, %v1605
  %v1607 = vsel %vm274, %v1204, 0.0
  %v1608 = vadd.f32 %v1606, %v1607
  %v1609 = vsel %vm274, %v1205, 0.0
  %v1610 = vadd.f32 %v1608, %v1609
  %v1611 = vsel %vm274, %v1206, 0.0
  %v1612 = vadd.f32 %v1610, %v1611
  %v1613 = vsel %vm274, %v1207, 0.0
  %v1614 = vadd.f32 %v1612, %v1613
  %v1615 = vsel %vm274, %v1208, 0.0
  %v1616 = vadd.f32 %v1614, %v1615
  %v1617 = vsel %vm274, %v1209, 0.0
  %v1618 = vadd.f32 %v1616, %v1617
  %v1619 = vsel %vm274, %v1210, 0.0
  %v1620 = vadd.f32 %v1618, %v1619
  %v1621 = vsel %vm274, %v1211, 0.0
  %v1622 = vadd.f32 %v1620, %v1621
  %v1623 = vsel %vm274, %v1212, 0.0
  %v1624 = vadd.f32 %v1622, %v1623
  %v1625 = vsel %vm274, %v1213, 0.0
  %v1626 = vadd.f32 %v1624, %v1625
  %v1627 = vsel %vm274, %v1214, 0.0
  %v1628 = vadd.f32 %v1626, %v1627
  %v1629 = vsel %vm274, %v1215, 0.0
  %v1630 = vadd.f32 %v1628, %v1629
  %v1631 = vsel %vm274, %v1216, 0.0
  %v1632 = vadd.f32 %v1630, %v1631
  %v1633 = vsel %vm274, %v1217, 0.0
  %v1634 = vadd.f32 %v1632, %v1633
  %v1635 = vsel %vm274, %v1218, 0.0
  %v1636 = vadd.f32 %v1634, %v1635
  %v1637 = vsel %vm274, %v1219, 0.0
  %v1638 = vadd.f32 %v1636, %v1637
  %v1639 = vsel %vm274, %v1220, 0.0
  %v1640 = vadd.f32 %v1638, %v1639
  %v1641 = vsel %vm274, %v1221, 0.0
  %v1642 = vadd.f32 %v1640, %v1641
  %v1643 = vsel %vm274, %v1222, 0.0
  %v1644 = vadd.f32 %v1642, %v1643
  %v1645 = vsel %vm274, %v1223, 0.0
  %v1646 = vadd.f32 %v1644, %v1645
  %v1647 = vsel %vm274, %v1224, 0.0
  %v1648 = vadd.f32 %v1646, %v1647
  %v1649 = vsel %vm274, %v1225, 0.0
  %v1650 = vadd.f32 %v1648, %v1649
  %v1651 = vsel %vm274, %v1226, 0.0
  %v1652 = vadd.f32 %v1650, %v1651
  %v1653 = vsel %vm274, %v1227, 0.0
  %v1654 = vadd.f32 %v1652, %v1653
  %v1655 = vsel %vm274, %v1228, 0.0
  %v1656 = vadd.f32 %v1654, %v1655
  %v1657 = vsel %vm274, %v1229, 0.0
  %v1658 = vadd.f32 %v1656, %v1657
  %v1659 = vsel %vm274, %v1230, 0.0
  %v1660 = vadd.f32 %v1658, %v1659
  %v1661 = vsel %vm274, %v1231, 0.0
  %v1662 = vadd.f32 %v1660, %v1661
  %v1663 = vsel %vm274, %v1232, 0.0
  %v1664 = vadd.f32 %v1662, %v1663
  %v1665 = vsel %vm274, %v1233, 0.0
  %v1666 = vadd.f32 %v1664, %v1665
  %v1667 = vsel %vm274, %v1234, 0.0
  %v1668 = vadd.f32 %v1666, %v1667
  %v1669 = vsel %vm274, %v1235, 0.0
  %v1670 = vadd.f32 %v1668, %v1669
  %v1671 = vsel %vm274, %v1236, 0.0
  %v1672 = vadd.f32 %v1670, %v1671
  %v1673 = vsel %vm274, %v1237, 0.0
  %v1674 = vadd.f32 %v1672, %v1673
  %v1675 = vsel %vm274, %v1238, 0.0
  %v1676 = vadd.f32 %v1674, %v1675
  %v1677 = vsel %vm274, %v1239, 0.0
  %v1678 = vadd.f32 %v1676, %v1677
  %v1679 = vsel %vm274, %v1240, 0.0
  %v1680 = vadd.f32 %v1678, %v1679
  %v1681 = vsel %vm274, %v1241, 0.0
  %v1682 = vadd.f32 %v1680, %v1681
  %v1683 = vsel %vm274, %v1242, 0.0
  %v1684 = vadd.f32 %v1682, %v1683
  %v1685 = vsel %vm274, %v1243, 0.0
  %v1686 = vadd.f32 %v1684, %v1685
  %v1687 = vsel %vm274, %v1244, 0.0
  %v1688 = vadd.f32 %v1686, %v1687
  %v1689 = vsel %vm274, %v1245, 0.0
  %v1690 = vadd.f32 %v1688, %v1689
  %v1691 = vsel %vm274, %v1246, 0.0
  %v1692 = vadd.f32 %v1690, %v1691
  %v1693 = vsel %vm274, %v1247, 0.0
  %v1694 = vadd.f32 %v1692, %v1693
  %v1695 = vsel %vm274, %v1248, 0.0
  %v1696 = vadd.f32 %v1694, %v1695
  %v1697 = vsel %vm274, %v1249, 0.0
  %v1698 = vadd.f32 %v1696, %v1697
  %v1699 = vsel %vm274, %v1250, 0.0
  %v1700 = vadd.f32 %v1698, %v1699
  %v1701 = vsel %vm274, %v1251, 0.0
  %v1702 = vadd.f32 %v1700, %v1701
  %v1703 = vsel %vm274, %v1252, 0.0
  %v1704 = vadd.f32 %v1702, %v1703
  %v1705 = vsel %vm274, %v1253, 0.0
  %v1706 = vadd.f32 %v1704, %v1705
  %v1707 = vsel %vm274, %v1254, 0.0
  %v1708 = vadd.f32 %v1706, %v1707
  %v1709 = vsel %vm274, %v1255, 0.0
  %v1710 = vadd.f32 %v1708, %v1709
  %v1711 = vsel %vm274, %v1256, 0.0
  %v1712 = vadd.f32 %v1710, %v1711
  %v1713 = vsel %vm274, %v1257, 0.0
  %v1714 = vadd.f32 %v1712, %v1713
  %v1715 = vsel %vm274, %v1258, 0.0
  %v1716 = vadd.f32 %v1714, %v1715
  %v1717 = vsel %vm274, %v1259, 0.0
  %v1718 = vadd.f32 %v1716, %v1717
  %v1719 = vsel %vm274, %v1260, 0.0
  %v1720 = vadd.f32 %v1718, %v1719
  %v1721 = vsel %vm274, %v1261, 0.0
  %v1722 = vadd.f32 %v1720, %v1721
  %v1723 = vsel %vm274, %v1262, 0.0
  %v1724 = vadd.f32 %v1722, %v1723
  %v1725 = vsel %vm274, %v1263, 0.0
  %v1726 = vadd.f32 %v1724, %v1725
  %v1727 = vsel %vm274, %v1264, 0.0
  %v1728 = vadd.f32 %v1726, %v1727
  %v1729 = vsel %vm274, %v1265, 0.0
  %v1730 = vadd.f32 %v1728, %v1729
  %v1731 = vsel %vm274, %v1266, 0.0
  %v1732 = vadd.f32 %v1730, %v1731
  %v1733 = vsel %vm274, %v1267, 0.0
  %v1734 = vadd.f32 %v1732, %v1733
  %v1735 = vsel %vm274, %v1268, 0.0
  %v1736 = vadd.f32 %v1734, %v1735
  %v1737 = vsel %vm274, %v1269, 0.0
  %v1738 = vadd.f32 %v1736, %v1737
  %v1739 = vsel %vm274, %v1270, 0.0
  %v1740 = vadd.f32 %v1738, %v1739
  %v1741 = vsel %vm274, %v1271, 0.0
  %v1742 = vadd.f32 %v1740, %v1741
  %v1743 = vsel %vm274, %v1272, 0.0
  %v1744 = vadd.f32 %v1742, %v1743
  %v1745 = vsel %vm274, %v1273, 0.0
  %v1746 = vadd.f32 %v1744, %v1745
  %v1747 = vsel %vm274, %v1274, 0.0
  %v1748 = vadd.f32 %v1746, %v1747
  %v1749 = vsel %vm274, %v1275, 0.0
  %v1750 = vadd.f32 %v1748, %v1749
  %v1751 = vsel %vm274, %v1276, 0.0
  %v1752 = vadd.f32 %v1750, %v1751
  %v1753 = vsel %vm274, %v1277, 0.0
  %v1754 = vadd.f32 %v1752, %v1753
  %v1755 = vsel %vm274, %v1278, 0.0
  %v1756 = vadd.f32 %v1754, %v1755
  %v1757 = vsel %vm274, %v1279, 0.0
  %v1758 = vadd.f32 %v1756, %v1757
  %v1759 = vsel %vm274, %v1280, 0.0
  %v1760 = vadd.f32 %v1758, %v1759
  %v1761 = vsel %vm274, %v1281, 0.0
  %v1762 = vadd.f32 %v1760, %v1761
  %v1763 = vsel %vm274, %v1282, 0.0
  %v1764 = vadd.f32 %v1762, %v1763
  %v1765 = vsel %vm274, %v1283, 0.0
  %v1766 = vadd.f32 %v1764, %v1765
  %v1767 = vsel %vm274, %v1284, 0.0
  %v1768 = vadd.f32 %v1766, %v1767
  %v1769 = vsel %vm274, %v1285, 0.0
  %v1770 = vadd.f32 %v1768, %v1769
  %v1771 = vsel %vm274, %v1286, 0.0
  %v1772 = vadd.f32 %v1770, %v1771
  %v1773 = vsel %vm274, %v1287, 0.0
  %v1774 = vadd.f32 %v1772, %v1773
  %v1775 = vsel %vm274, %v1288, 0.0
  %v1776 = vadd.f32 %v1774, %v1775
  %v1777 = vsel %vm274, %v1289, 0.0
  %v1778 = vadd.f32 %v1776, %v1777
  %v1779 = vsel %vm274, %v1290, 0.0
  %v1780 = vadd.f32 %v1778, %v1779
  %v1781 = vsel %vm274, %v1291, 0.0
  %v1782 = vadd.f32 %v1780, %v1781
  %v1783 = vsel %vm274, %v1292, 0.0
  %v1784 = vadd.f32 %v1782, %v1783
  %v1785 = vsel %vm274, %v1293, 0.0
  %v1786 = vadd.f32 %v1784, %v1785
  %v1787 = vsel %vm274, %v1294, 0.0
  %v1788 = vadd.f32 %v1786, %v1787
  %v1789 = vsel %vm274, %v1295, 0.0
  %v1790 = vadd.f32 %v1788, %v1789
  %v1791 = vsel %vm274, %v1296, 0.0
  %v1792 = vadd.f32 %v1790, %v1791
  %v1793 = vsel %vm274, %v1297, 0.0
  %v1794 = vadd.f32 %v1792, %v1793
  %v1795 = vsel %vm274, %v1298, 0.0
  %v1796 = vadd.f32 %v1794, %v1795
  %v1797 = vsel %vm274, %v1299, 0.0
  %v1798 = vadd.f32 %v1796, %v1797
  %v1799 = vsel %vm274, %v1300, 0.0
  %v1800 = vadd.f32 %v1798, %v1799
  %v1801 = vsel %vm274, %v1301, 0.0
  %v1802 = vadd.f32 %v1800, %v1801
  %v1803 = vsel %vm274, %v1302, 0.0
  %v1804 = vadd.f32 %v1802, %v1803
  %v1805 = vsel %vm274, %v1303, 0.0
  %v1806 = vadd.f32 %v1804, %v1805
  %v1807 = vsel %vm274, %v1304, 0.0
  %v1808 = vadd.f32 %v1806, %v1807
  %v1809 = vsel %vm274, %v1305, 0.0
  %v1810 = vadd.f32 %v1808, %v1809
  %v1811 = vsel %vm274, %v1306, 0.0
  %v1812 = vadd.f32 %v1810, %v1811
  %v1813 = vsel %vm274, %v1307, 0.0
  %v1814 = vadd.f32 %v1812, %v1813
  %v1815 = vsel %vm274, %v1308, 0.0
  %v1816 = vadd.f32 %v1814, %v1815
  %v1817 = vsel %vm274, %v1309, 0.0
  %v1818 = vadd.f32 %v1816, %v1817
  %v1819 = vsel %vm274, %v1310, 0.0
  %v1820 = vadd.f32 %v1818, %v1819
  %v1821 = vsel %vm274, %v1311, 0.0
  %v1822 = vadd.f32 %v1820, %v1821
  %v1823 = vrot.slane %v1822, 4
  %v1824 = vadd.f32 %v1822, %v1823
  %v1825 = vrot.slane %v1824, 2
  %v1826 = vadd.f32 %v1824, %v1825
  %v1827 = vrot.slane %v1826, 1
  %v1828 = vadd.f32 %v1826, %v1827
  %v1829 = vmul.f32 %v1828, %v798
  %v1830 = vadd.f32 %v1829, 1e-05
  %v1831 = vrsqrt.pop %v1830
  %v1832 = vmul.f32 %v1831, %v1830
  %v1833 = vmul.f32 %v1832, %v1831
  %v1834 = vmul.f32 0.5, %v1833
  %v1835 = vsub.f32 1.5, %v1834
  %v1836 = vmul.f32 %v1831, %v1835
  %vm1837 = vweird.f32 %v1830
  %vm1838 = vweird.f32 %v1831
  %vm1839 = vmor %vm1837, %vm1838
  %v1840 = vsel %vm1839, %v1831, %v1836
  %v1841 = vmul.f32 %v800, %v1840
  %v1842 = vmul.f32 %v801, %v1840
  %v1843 = vmul.f32 %v802, %v1840
  %v1844 = vmul.f32 %v803, %v1840
  %v1845 = vmul.f32 %v804, %v1840
  %v1846 = vmul.f32 %v805, %v1840
  %v1847 = vmul.f32 %v806, %v1840
  %v1848 = vmul.f32 %v807, %v1840
  %v1849 = vmul.f32 %v808, %v1840
  %v1850 = vmul.f32 %v809, %v1840
  %v1851 = vmul.f32 %v810, %v1840
  %v1852 = vmul.f32 %v811, %v1840
  %v1853 = vmul.f32 %v812, %v1840
  %v1854 = vmul.f32 %v813, %v1840
  %v1855 = vmul.f32 %v814, %v1840
  %v1856 = vmul.f32 %v815, %v1840
  %v1857 = vmul.f32 %v816, %v1840
  %v1858 = vmul.f32 %v817, %v1840
  %v1859 = vmul.f32 %v818, %v1840
  %v1860 = vmul.f32 %v819, %v1840
  %v1861 = vmul.f32 %v820, %v1840
  %v1862 = vmul.f32 %v821, %v1840
  %v1863 = vmul.f32 %v822, %v1840
  %v1864 = vmul.f32 %v823, %v1840
  %v1865 = vmul.f32 %v824, %v1840
  %v1866 = vmul.f32 %v825, %v1840
  %v1867 = vmul.f32 %v826, %v1840
  %v1868 = vmul.f32 %v827, %v1840
  %v1869 = vmul.f32 %v828, %v1840
  %v1870 = vmul.f32 %v829, %v1840
  %v1871 = vmul.f32 %v830, %v1840
  %v1872 = vmul.f32 %v831, %v1840
  %v1873 = vmul.f32 %v832, %v1840
  %v1874 = vmul.f32 %v833, %v1840
  %v1875 = vmul.f32 %v834, %v1840
  %v1876 = vmul.f32 %v835, %v1840
  %v1877 = vmul.f32 %v836, %v1840
  %v1878 = vmul.f32 %v837, %v1840
  %v1879 = vmul.f32 %v838, %v1840
  %v1880 = vmul.f32 %v839, %v1840
  %v1881 = vmul.f32 %v840, %v1840
  %v1882 = vmul.f32 %v841, %v1840
  %v1883 = vmul.f32 %v842, %v1840
  %v1884 = vmul.f32 %v843, %v1840
  %v1885 = vmul.f32 %v844, %v1840
  %v1886 = vmul.f32 %v845, %v1840
  %v1887 = vmul.f32 %v846, %v1840
  %v1888 = vmul.f32 %v847, %v1840
  %v1889 = vmul.f32 %v848, %v1840
  %v1890 = vmul.f32 %v849, %v1840
  %v1891 = vmul.f32 %v850, %v1840
  %v1892 = vmul.f32 %v851, %v1840
  %v1893 = vmul.f32 %v852, %v1840
  %v1894 = vmul.f32 %v853, %v1840
  %v1895 = vmul.f32 %v854, %v1840
  %v1896 = vmul.f32 %v855, %v1840
  %v1897 = vmul.f32 %v856, %v1840
  %v1898 = vmul.f32 %v857, %v1840
  %v1899 = vmul.f32 %v858, %v1840
  %v1900 = vmul.f32 %v859, %v1840
  %v1901 = vmul.f32 %v860, %v1840
  %v1902 = vmul.f32 %v861, %v1840
  %v1903 = vmul.f32 %v862, %v1840
  %v1904 = vmul.f32 %v863, %v1840
  %v1905 = vmul.f32 %v864, %v1840
  %v1906 = vmul.f32 %v865, %v1840
  %v1907 = vmul.f32 %v866, %v1840
  %v1908 = vmul.f32 %v867, %v1840
  %v1909 = vmul.f32 %v868, %v1840
  %v1910 = vmul.f32 %v869, %v1840
  %v1911 = vmul.f32 %v870, %v1840
  %v1912 = vmul.f32 %v871, %v1840
  %v1913 = vmul.f32 %v872, %v1840
  %v1914 = vmul.f32 %v873, %v1840
  %v1915 = vmul.f32 %v874, %v1840
  %v1916 = vmul.f32 %v875, %v1840
  %v1917 = vmul.f32 %v876, %v1840
  %v1918 = vmul.f32 %v877, %v1840
  %v1919 = vmul.f32 %v878, %v1840
  %v1920 = vmul.f32 %v879, %v1840
  %v1921 = vmul.f32 %v880, %v1840
  %v1922 = vmul.f32 %v881, %v1840
  %v1923 = vmul.f32 %v882, %v1840
  %v1924 = vmul.f32 %v883, %v1840
  %v1925 = vmul.f32 %v884, %v1840
  %v1926 = vmul.f32 %v885, %v1840
  %v1927 = vmul.f32 %v886, %v1840
  %v1928 = vmul.f32 %v887, %v1840
  %v1929 = vmul.f32 %v888, %v1840
  %v1930 = vmul.f32 %v889, %v1840
  %v1931 = vmul.f32 %v890, %v1840
  %v1932 = vmul.f32 %v891, %v1840
  %v1933 = vmul.f32 %v892, %v1840
  %v1934 = vmul.f32 %v893, %v1840
  %v1935 = vmul.f32 %v894, %v1840
  %v1936 = vmul.f32 %v895, %v1840
  %v1937 = vmul.f32 %v896, %v1840
  %v1938 = vmul.f32 %v897, %v1840
  %v1939 = vmul.f32 %v898, %v1840
  %v1940 = vmul.f32 %v899, %v1840
  %v1941 = vmul.f32 %v900, %v1840
  %v1942 = vmul.f32 %v901, %v1840
  %v1943 = vmul.f32 %v902, %v1840
  %v1944 = vmul.f32 %v903, %v1840
  %v1945 = vmul.f32 %v904, %v1840
  %v1946 = vmul.f32 %v905, %v1840
  %v1947 = vmul.f32 %v906, %v1840
  %v1948 = vmul.f32 %v907, %v1840
  %v1949 = vmul.f32 %v908, %v1840
  %v1950 = vmul.f32 %v909, %v1840
  %v1951 = vmul.f32 %v910, %v1840
  %v1952 = vmul.f32 %v911, %v1840
  %v1953 = vmul.f32 %v912, %v1840
  %v1954 = vmul.f32 %v913, %v1840
  %v1955 = vmul.f32 %v914, %v1840
  %v1956 = vmul.f32 %v915, %v1840
  %v1957 = vmul.f32 %v916, %v1840
  %v1958 = vmul.f32 %v917, %v1840
  %v1959 = vmul.f32 %v918, %v1840
  %v1960 = vmul.f32 %v919, %v1840
  %v1961 = vmul.f32 %v920, %v1840
  %v1962 = vmul.f32 %v921, %v1840
  %v1963 = vmul.f32 %v922, %v1840
  %v1964 = vmul.f32 %v923, %v1840
  %v1965 = vmul.f32 %v924, %v1840
  %v1966 = vmul.f32 %v925, %v1840
  %v1967 = vmul.f32 %v926, %v1840
  %v1968 = vmul.f32 %v927, %v1840
  %v1969 = vmul.f32 %v928, %v1840
  %v1970 = vmul.f32 %v929, %v1840
  %v1971 = vmul.f32 %v930, %v1840
  %v1972 = vmul.f32 %v931, %v1840
  %v1973 = vmul.f32 %v932, %v1840
  %v1974 = vmul.f32 %v933, %v1840
  %v1975 = vmul.f32 %v934, %v1840
  %v1976 = vmul.f32 %v935, %v1840
  %v1977 = vmul.f32 %v936, %v1840
  %v1978 = vmul.f32 %v937, %v1840
  %v1979 = vmul.f32 %v938, %v1840
  %v1980 = vmul.f32 %v939, %v1840
  %v1981 = vmul.f32 %v940, %v1840
  %v1982 = vmul.f32 %v941, %v1840
  %v1983 = vmul.f32 %v942, %v1840
  %v1984 = vmul.f32 %v943, %v1840
  %v1985 = vmul.f32 %v944, %v1840
  %v1986 = vmul.f32 %v945, %v1840
  %v1987 = vmul.f32 %v946, %v1840
  %v1988 = vmul.f32 %v947, %v1840
  %v1989 = vmul.f32 %v948, %v1840
  %v1990 = vmul.f32 %v949, %v1840
  %v1991 = vmul.f32 %v950, %v1840
  %v1992 = vmul.f32 %v951, %v1840
  %v1993 = vmul.f32 %v952, %v1840
  %v1994 = vmul.f32 %v953, %v1840
  %v1995 = vmul.f32 %v954, %v1840
  %v1996 = vmul.f32 %v955, %v1840
  %v1997 = vmul.f32 %v956, %v1840
  %v1998 = vmul.f32 %v957, %v1840
  %v1999 = vmul.f32 %v958, %v1840
  %v2000 = vmul.f32 %v959, %v1840
  %v2001 = vmul.f32 %v960, %v1840
  %v2002 = vmul.f32 %v961, %v1840
  %v2003 = vmul.f32 %v962, %v1840
  %v2004 = vmul.f32 %v963, %v1840
  %v2005 = vmul.f32 %v964, %v1840
  %v2006 = vmul.f32 %v965, %v1840
  %v2007 = vmul.f32 %v966, %v1840
  %v2008 = vmul.f32 %v967, %v1840
  %v2009 = vmul.f32 %v968, %v1840
  %v2010 = vmul.f32 %v969, %v1840
  %v2011 = vmul.f32 %v970, %v1840
  %v2012 = vmul.f32 %v971, %v1840
  %v2013 = vmul.f32 %v972, %v1840
  %v2014 = vmul.f32 %v973, %v1840
  %v2015 = vmul.f32 %v974, %v1840
  %v2016 = vmul.f32 %v975, %v1840
  %v2017 = vmul.f32 %v976, %v1840
  %v2018 = vmul.f32 %v977, %v1840
  %v2019 = vmul.f32 %v978, %v1840
  %v2020 = vmul.f32 %v979, %v1840
  %v2021 = vmul.f32 %v980, %v1840
  %v2022 = vmul.f32 %v981, %v1840
  %v2023 = vmul.f32 %v982, %v1840
  %v2024 = vmul.f32 %v983, %v1840
  %v2025 = vmul.f32 %v984, %v1840
  %v2026 = vmul.f32 %v985, %v1840
  %v2027 = vmul.f32 %v986, %v1840
  %v2028 = vmul.f32 %v987, %v1840
  %v2029 = vmul.f32 %v988, %v1840
  %v2030 = vmul.f32 %v989, %v1840
  %v2031 = vmul.f32 %v990, %v1840
  %v2032 = vmul.f32 %v991, %v1840
  %v2033 = vmul.f32 %v992, %v1840
  %v2034 = vmul.f32 %v993, %v1840
  %v2035 = vmul.f32 %v994, %v1840
  %v2036 = vmul.f32 %v995, %v1840
  %v2037 = vmul.f32 %v996, %v1840
  %v2038 = vmul.f32 %v997, %v1840
  %v2039 = vmul.f32 %v998, %v1840
  %v2040 = vmul.f32 %v999, %v1840
  %v2041 = vmul.f32 %v1000, %v1840
  %v2042 = vmul.f32 %v1001, %v1840
  %v2043 = vmul.f32 %v1002, %v1840
  %v2044 = vmul.f32 %v1003, %v1840
  %v2045 = vmul.f32 %v1004, %v1840
  %v2046 = vmul.f32 %v1005, %v1840
  %v2047 = vmul.f32 %v1006, %v1840
  %v2048 = vmul.f32 %v1007, %v1840
  %v2049 = vmul.f32 %v1008, %v1840
  %v2050 = vmul.f32 %v1009, %v1840
  %v2051 = vmul.f32 %v1010, %v1840
  %v2052 = vmul.f32 %v1011, %v1840
  %v2053 = vmul.f32 %v1012, %v1840
  %v2054 = vmul.f32 %v1013, %v1840
  %v2055 = vmul.f32 %v1014, %v1840
  %v2056 = vmul.f32 %v1015, %v1840
  %v2057 = vmul.f32 %v1016, %v1840
  %v2058 = vmul.f32 %v1017, %v1840
  %v2059 = vmul.f32 %v1018, %v1840
  %v2060 = vmul.f32 %v1019, %v1840
  %v2061 = vmul.f32 %v1020, %v1840
  %v2062 = vmul.f32 %v1021, %v1840
  %v2063 = vmul.f32 %v1022, %v1840
  %v2064 = vmul.f32 %v1023, %v1840
  %v2065 = vmul.f32 %v1024, %v1840
  %v2066 = vmul.f32 %v1025, %v1840
  %v2067 = vmul.f32 %v1026, %v1840
  %v2068 = vmul.f32 %v1027, %v1840
  %v2069 = vmul.f32 %v1028, %v1840
  %v2070 = vmul.f32 %v1029, %v1840
  %v2071 = vmul.f32 %v1030, %v1840
  %v2072 = vmul.f32 %v1031, %v1840
  %v2073 = vmul.f32 %v1032, %v1840
  %v2074 = vmul.f32 %v1033, %v1840
  %v2075 = vmul.f32 %v1034, %v1840
  %v2076 = vmul.f32 %v1035, %v1840
  %v2077 = vmul.f32 %v1036, %v1840
  %v2078 = vmul.f32 %v1037, %v1840
  %v2079 = vmul.f32 %v1038, %v1840
  %v2080 = vmul.f32 %v1039, %v1840
  %v2081 = vmul.f32 %v1040, %v1840
  %v2082 = vmul.f32 %v1041, %v1840
  %v2083 = vmul.f32 %v1042, %v1840
  %v2084 = vmul.f32 %v1043, %v1840
  %v2085 = vmul.f32 %v1044, %v1840
  %v2086 = vmul.f32 %v1045, %v1840
  %v2087 = vmul.f32 %v1046, %v1840
  %v2088 = vmul.f32 %v1047, %v1840
  %v2089 = vmul.f32 %v1048, %v1840
  %v2090 = vmul.f32 %v1049, %v1840
  %v2091 = vmul.f32 %v1050, %v1840
  %v2092 = vmul.f32 %v1051, %v1840
  %v2093 = vmul.f32 %v1052, %v1840
  %v2094 = vmul.f32 %v1053, %v1840
  %v2095 = vmul.f32 %v1054, %v1840
  %v2096 = vmul.f32 %v1055, %v1840
  %v2097 = vld [vmem:[%s1] sm:$0x1]
  %v2099 = vperm.slane %v2097, 0
  %v2101 = vmul.f32 %v1841, %v2099
  %v2102 = vmul.f32 %v1842, %v2099
  %v2103 = vmul.f32 %v1843, %v2099
  %v2104 = vmul.f32 %v1844, %v2099
  %v2105 = vmul.f32 %v1845, %v2099
  %v2106 = vmul.f32 %v1846, %v2099
  %v2107 = vmul.f32 %v1847, %v2099
  %v2108 = vmul.f32 %v1848, %v2099
  %v2109 = vmul.f32 %v1849, %v2099
  %v2110 = vmul.f32 %v1850, %v2099
  %v2111 = vmul.f32 %v1851, %v2099
  %v2112 = vmul.f32 %v1852, %v2099
  %v2113 = vmul.f32 %v1853, %v2099
  %v2114 = vmul.f32 %v1854, %v2099
  %v2115 = vmul.f32 %v1855, %v2099
  %v2116 = vmul.f32 %v1856, %v2099
  %v2117 = vmul.f32 %v1857, %v2099
  %v2118 = vmul.f32 %v1858, %v2099
  %v2119 = vmul.f32 %v1859, %v2099
  %v2120 = vmul.f32 %v1860, %v2099
  %v2121 = vmul.f32 %v1861, %v2099
  %v2122 = vmul.f32 %v1862, %v2099
  %v2123 = vmul.f32 %v1863, %v2099
  %v2124 = vmul.f32 %v1864, %v2099
  %v2125 = vmul.f32 %v1865, %v2099
  %v2126 = vmul.f32 %v1866, %v2099
  %v2127 = vmul.f32 %v1867, %v2099
  %v2128 = vmul.f32 %v1868, %v2099
  %v2129 = vmul.f32 %v1869, %v2099
  %v2130 = vmul.f32 %v1870, %v2099
  %v2131 = vmul.f32 %v1871, %v2099
  %v2132 = vmul.f32 %v1872, %v2099
  %v2133 = vmul.f32 %v1873, %v2099
  %v2134 = vmul.f32 %v1874, %v2099
  %v2135 = vmul.f32 %v1875, %v2099
  %v2136 = vmul.f32 %v1876, %v2099
  %v2137 = vmul.f32 %v1877, %v2099
  %v2138 = vmul.f32 %v1878, %v2099
  %v2139 = vmul.f32 %v1879, %v2099
  %v2140 = vmul.f32 %v1880, %v2099
  %v2141 = vmul.f32 %v1881, %v2099
  %v2142 = vmul.f32 %v1882, %v2099
  %v2143 = vmul.f32 %v1883, %v2099
  %v2144 = vmul.f32 %v1884, %v2099
  %v2145 = vmul.f32 %v1885, %v2099
  %v2146 = vmul.f32 %v1886, %v2099
  %v2147 = vmul.f32 %v1887, %v2099
  %v2148 = vmul.f32 %v1888, %v2099
  %v2149 = vmul.f32 %v1889, %v2099
  %v2150 = vmul.f32 %v1890, %v2099
  %v2151 = vmul.f32 %v1891, %v2099
  %v2152 = vmul.f32 %v1892, %v2099
  %v2153 = vmul.f32 %v1893, %v2099
  %v2154 = vmul.f32 %v1894, %v2099
  %v2155 = vmul.f32 %v1895, %v2099
  %v2156 = vmul.f32 %v1896, %v2099
  %v2157 = vmul.f32 %v1897, %v2099
  %v2158 = vmul.f32 %v1898, %v2099
  %v2159 = vmul.f32 %v1899, %v2099
  %v2160 = vmul.f32 %v1900, %v2099
  %v2161 = vmul.f32 %v1901, %v2099
  %v2162 = vmul.f32 %v1902, %v2099
  %v2163 = vmul.f32 %v1903, %v2099
  %v2164 = vmul.f32 %v1904, %v2099
  %v2165 = vmul.f32 %v1905, %v2099
  %v2166 = vmul.f32 %v1906, %v2099
  %v2167 = vmul.f32 %v1907, %v2099
  %v2168 = vmul.f32 %v1908, %v2099
  %v2169 = vmul.f32 %v1909, %v2099
  %v2170 = vmul.f32 %v1910, %v2099
  %v2171 = vmul.f32 %v1911, %v2099
  %v2172 = vmul.f32 %v1912, %v2099
  %v2173 = vmul.f32 %v1913, %v2099
  %v2174 = vmul.f32 %v1914, %v2099
  %v2175 = vmul.f32 %v1915, %v2099
  %v2176 = vmul.f32 %v1916, %v2099
  %v2177 = vmul.f32 %v1917, %v2099
  %v2178 = vmul.f32 %v1918, %v2099
  %v2179 = vmul.f32 %v1919, %v2099
  %v2180 = vmul.f32 %v1920, %v2099
  %v2181 = vmul.f32 %v1921, %v2099
  %v2182 = vmul.f32 %v1922, %v2099
  %v2183 = vmul.f32 %v1923, %v2099
  %v2184 = vmul.f32 %v1924, %v2099
  %v2185 = vmul.f32 %v1925, %v2099
  %v2186 = vmul.f32 %v1926, %v2099
  %v2187 = vmul.f32 %v1927, %v2099
  %v2188 = vmul.f32 %v1928, %v2099
  %v2189 = vmul.f32 %v1929, %v2099
  %v2190 = vmul.f32 %v1930, %v2099
  %v2191 = vmul.f32 %v1931, %v2099
  %v2192 = vmul.f32 %v1932, %v2099
  %v2193 = vmul.f32 %v1933, %v2099
  %v2194 = vmul.f32 %v1934, %v2099
  %v2195 = vmul.f32 %v1935, %v2099
  %v2196 = vmul.f32 %v1936, %v2099
  %v2197 = vmul.f32 %v1937, %v2099
  %v2198 = vmul.f32 %v1938, %v2099
  %v2199 = vmul.f32 %v1939, %v2099
  %v2200 = vmul.f32 %v1940, %v2099
  %v2201 = vmul.f32 %v1941, %v2099
  %v2202 = vmul.f32 %v1942, %v2099
  %v2203 = vmul.f32 %v1943, %v2099
  %v2204 = vmul.f32 %v1944, %v2099
  %v2205 = vmul.f32 %v1945, %v2099
  %v2206 = vmul.f32 %v1946, %v2099
  %v2207 = vmul.f32 %v1947, %v2099
  %v2208 = vmul.f32 %v1948, %v2099
  %v2209 = vmul.f32 %v1949, %v2099
  %v2210 = vmul.f32 %v1950, %v2099
  %v2211 = vmul.f32 %v1951, %v2099
  %v2212 = vmul.f32 %v1952, %v2099
  %v2213 = vmul.f32 %v1953, %v2099
  %v2214 = vmul.f32 %v1954, %v2099
  %v2215 = vmul.f32 %v1955, %v2099
  %v2216 = vmul.f32 %v1956, %v2099
  %v2217 = vmul.f32 %v1957, %v2099
  %v2218 = vmul.f32 %v1958, %v2099
  %v2219 = vmul.f32 %v1959, %v2099
  %v2220 = vmul.f32 %v1960, %v2099
  %v2221 = vmul.f32 %v1961, %v2099
  %v2222 = vmul.f32 %v1962, %v2099
  %v2223 = vmul.f32 %v1963, %v2099
  %v2224 = vmul.f32 %v1964, %v2099
  %v2225 = vmul.f32 %v1965, %v2099
  %v2226 = vmul.f32 %v1966, %v2099
  %v2227 = vmul.f32 %v1967, %v2099
  %v2228 = vmul.f32 %v1968, %v2099
  %v2229 = vmul.f32 %v1969, %v2099
  %v2230 = vmul.f32 %v1970, %v2099
  %v2231 = vmul.f32 %v1971, %v2099
  %v2232 = vmul.f32 %v1972, %v2099
  %v2233 = vmul.f32 %v1973, %v2099
  %v2234 = vmul.f32 %v1974, %v2099
  %v2235 = vmul.f32 %v1975, %v2099
  %v2236 = vmul.f32 %v1976, %v2099
  %v2237 = vmul.f32 %v1977, %v2099
  %v2238 = vmul.f32 %v1978, %v2099
  %v2239 = vmul.f32 %v1979, %v2099
  %v2240 = vmul.f32 %v1980, %v2099
  %v2241 = vmul.f32 %v1981, %v2099
  %v2242 = vmul.f32 %v1982, %v2099
  %v2243 = vmul.f32 %v1983, %v2099
  %v2244 = vmul.f32 %v1984, %v2099
  %v2245 = vmul.f32 %v1985, %v2099
  %v2246 = vmul.f32 %v1986, %v2099
  %v2247 = vmul.f32 %v1987, %v2099
  %v2248 = vmul.f32 %v1988, %v2099
  %v2249 = vmul.f32 %v1989, %v2099
  %v2250 = vmul.f32 %v1990, %v2099
  %v2251 = vmul.f32 %v1991, %v2099
  %v2252 = vmul.f32 %v1992, %v2099
  %v2253 = vmul.f32 %v1993, %v2099
  %v2254 = vmul.f32 %v1994, %v2099
  %v2255 = vmul.f32 %v1995, %v2099
  %v2256 = vmul.f32 %v1996, %v2099
  %v2257 = vmul.f32 %v1997, %v2099
  %v2258 = vmul.f32 %v1998, %v2099
  %v2259 = vmul.f32 %v1999, %v2099
  %v2260 = vmul.f32 %v2000, %v2099
  %v2261 = vmul.f32 %v2001, %v2099
  %v2262 = vmul.f32 %v2002, %v2099
  %v2263 = vmul.f32 %v2003, %v2099
  %v2264 = vmul.f32 %v2004, %v2099
  %v2265 = vmul.f32 %v2005, %v2099
  %v2266 = vmul.f32 %v2006, %v2099
  %v2267 = vmul.f32 %v2007, %v2099
  %v2268 = vmul.f32 %v2008, %v2099
  %v2269 = vmul.f32 %v2009, %v2099
  %v2270 = vmul.f32 %v2010, %v2099
  %v2271 = vmul.f32 %v2011, %v2099
  %v2272 = vmul.f32 %v2012, %v2099
  %v2273 = vmul.f32 %v2013, %v2099
  %v2274 = vmul.f32 %v2014, %v2099
  %v2275 = vmul.f32 %v2015, %v2099
  %v2276 = vmul.f32 %v2016, %v2099
  %v2277 = vmul.f32 %v2017, %v2099
  %v2278 = vmul.f32 %v2018, %v2099
  %v2279 = vmul.f32 %v2019, %v2099
  %v2280 = vmul.f32 %v2020, %v2099
  %v2281 = vmul.f32 %v2021, %v2099
  %v2282 = vmul.f32 %v2022, %v2099
  %v2283 = vmul.f32 %v2023, %v2099
  %v2284 = vmul.f32 %v2024, %v2099
  %v2285 = vmul.f32 %v2025, %v2099
  %v2286 = vmul.f32 %v2026, %v2099
  %v2287 = vmul.f32 %v2027, %v2099
  %v2288 = vmul.f32 %v2028, %v2099
  %v2289 = vmul.f32 %v2029, %v2099
  %v2290 = vmul.f32 %v2030, %v2099
  %v2291 = vmul.f32 %v2031, %v2099
  %v2292 = vmul.f32 %v2032, %v2099
  %v2293 = vmul.f32 %v2033, %v2099
  %v2294 = vmul.f32 %v2034, %v2099
  %v2295 = vmul.f32 %v2035, %v2099
  %v2296 = vmul.f32 %v2036, %v2099
  %v2297 = vmul.f32 %v2037, %v2099
  %v2298 = vmul.f32 %v2038, %v2099
  %v2299 = vmul.f32 %v2039, %v2099
  %v2300 = vmul.f32 %v2040, %v2099
  %v2301 = vmul.f32 %v2041, %v2099
  %v2302 = vmul.f32 %v2042, %v2099
  %v2303 = vmul.f32 %v2043, %v2099
  %v2304 = vmul.f32 %v2044, %v2099
  %v2305 = vmul.f32 %v2045, %v2099
  %v2306 = vmul.f32 %v2046, %v2099
  %v2307 = vmul.f32 %v2047, %v2099
  %v2308 = vmul.f32 %v2048, %v2099
  %v2309 = vmul.f32 %v2049, %v2099
  %v2310 = vmul.f32 %v2050, %v2099
  %v2311 = vmul.f32 %v2051, %v2099
  %v2312 = vmul.f32 %v2052, %v2099
  %v2313 = vmul.f32 %v2053, %v2099
  %v2314 = vmul.f32 %v2054, %v2099
  %v2315 = vmul.f32 %v2055, %v2099
  %v2316 = vmul.f32 %v2056, %v2099
  %v2317 = vmul.f32 %v2057, %v2099
  %v2318 = vmul.f32 %v2058, %v2099
  %v2319 = vmul.f32 %v2059, %v2099
  %v2320 = vmul.f32 %v2060, %v2099
  %v2321 = vmul.f32 %v2061, %v2099
  %v2322 = vmul.f32 %v2062, %v2099
  %v2323 = vmul.f32 %v2063, %v2099
  %v2324 = vmul.f32 %v2064, %v2099
  %v2325 = vmul.f32 %v2065, %v2099
  %v2326 = vmul.f32 %v2066, %v2099
  %v2327 = vmul.f32 %v2067, %v2099
  %v2328 = vmul.f32 %v2068, %v2099
  %v2329 = vmul.f32 %v2069, %v2099
  %v2330 = vmul.f32 %v2070, %v2099
  %v2331 = vmul.f32 %v2071, %v2099
  %v2332 = vmul.f32 %v2072, %v2099
  %v2333 = vmul.f32 %v2073, %v2099
  %v2334 = vmul.f32 %v2074, %v2099
  %v2335 = vmul.f32 %v2075, %v2099
  %v2336 = vmul.f32 %v2076, %v2099
  %v2337 = vmul.f32 %v2077, %v2099
  %v2338 = vmul.f32 %v2078, %v2099
  %v2339 = vmul.f32 %v2079, %v2099
  %v2340 = vmul.f32 %v2080, %v2099
  %v2341 = vmul.f32 %v2081, %v2099
  %v2342 = vmul.f32 %v2082, %v2099
  %v2343 = vmul.f32 %v2083, %v2099
  %v2344 = vmul.f32 %v2084, %v2099
  %v2345 = vmul.f32 %v2085, %v2099
  %v2346 = vmul.f32 %v2086, %v2099
  %v2347 = vmul.f32 %v2087, %v2099
  %v2348 = vmul.f32 %v2088, %v2099
  %v2349 = vmul.f32 %v2089, %v2099
  %v2350 = vmul.f32 %v2090, %v2099
  %v2351 = vmul.f32 %v2091, %v2099
  %v2352 = vmul.f32 %v2092, %v2099
  %v2353 = vmul.f32 %v2093, %v2099
  %v2354 = vmul.f32 %v2094, %v2099
  %v2355 = vmul.f32 %v2095, %v2099
  %v2356 = vmul.f32 %v2096, %v2099
  %v2357 = vld [vmem:[%s2] sm:$0x1]
  %v2359 = vperm.slane %v2357, 0
  %v2361 = vadd.f32 %v2101, %v2359
  %v2362 = vadd.f32 %v2102, %v2359
  %v2363 = vadd.f32 %v2103, %v2359
  %v2364 = vadd.f32 %v2104, %v2359
  %v2365 = vadd.f32 %v2105, %v2359
  %v2366 = vadd.f32 %v2106, %v2359
  %v2367 = vadd.f32 %v2107, %v2359
  %v2368 = vadd.f32 %v2108, %v2359
  %v2369 = vadd.f32 %v2109, %v2359
  %v2370 = vadd.f32 %v2110, %v2359
  %v2371 = vadd.f32 %v2111, %v2359
  %v2372 = vadd.f32 %v2112, %v2359
  %v2373 = vadd.f32 %v2113, %v2359
  %v2374 = vadd.f32 %v2114, %v2359
  %v2375 = vadd.f32 %v2115, %v2359
  %v2376 = vadd.f32 %v2116, %v2359
  %v2377 = vadd.f32 %v2117, %v2359
  %v2378 = vadd.f32 %v2118, %v2359
  %v2379 = vadd.f32 %v2119, %v2359
  %v2380 = vadd.f32 %v2120, %v2359
  %v2381 = vadd.f32 %v2121, %v2359
  %v2382 = vadd.f32 %v2122, %v2359
  %v2383 = vadd.f32 %v2123, %v2359
  %v2384 = vadd.f32 %v2124, %v2359
  %v2385 = vadd.f32 %v2125, %v2359
  %v2386 = vadd.f32 %v2126, %v2359
  %v2387 = vadd.f32 %v2127, %v2359
  %v2388 = vadd.f32 %v2128, %v2359
  %v2389 = vadd.f32 %v2129, %v2359
  %v2390 = vadd.f32 %v2130, %v2359
  %v2391 = vadd.f32 %v2131, %v2359
  %v2392 = vadd.f32 %v2132, %v2359
  %v2393 = vadd.f32 %v2133, %v2359
  %v2394 = vadd.f32 %v2134, %v2359
  %v2395 = vadd.f32 %v2135, %v2359
  %v2396 = vadd.f32 %v2136, %v2359
  %v2397 = vadd.f32 %v2137, %v2359
  %v2398 = vadd.f32 %v2138, %v2359
  %v2399 = vadd.f32 %v2139, %v2359
  %v2400 = vadd.f32 %v2140, %v2359
  %v2401 = vadd.f32 %v2141, %v2359
  %v2402 = vadd.f32 %v2142, %v2359
  %v2403 = vadd.f32 %v2143, %v2359
  %v2404 = vadd.f32 %v2144, %v2359
  %v2405 = vadd.f32 %v2145, %v2359
  %v2406 = vadd.f32 %v2146, %v2359
  %v2407 = vadd.f32 %v2147, %v2359
  %v2408 = vadd.f32 %v2148, %v2359
  %v2409 = vadd.f32 %v2149, %v2359
  %v2410 = vadd.f32 %v2150, %v2359
  %v2411 = vadd.f32 %v2151, %v2359
  %v2412 = vadd.f32 %v2152, %v2359
  %v2413 = vadd.f32 %v2153, %v2359
  %v2414 = vadd.f32 %v2154, %v2359
  %v2415 = vadd.f32 %v2155, %v2359
  %v2416 = vadd.f32 %v2156, %v2359
  %v2417 = vadd.f32 %v2157, %v2359
  %v2418 = vadd.f32 %v2158, %v2359
  %v2419 = vadd.f32 %v2159, %v2359
  %v2420 = vadd.f32 %v2160, %v2359
  %v2421 = vadd.f32 %v2161, %v2359
  %v2422 = vadd.f32 %v2162, %v2359
  %v2423 = vadd.f32 %v2163, %v2359
  %v2424 = vadd.f32 %v2164, %v2359
  %v2425 = vadd.f32 %v2165, %v2359
  %v2426 = vadd.f32 %v2166, %v2359
  %v2427 = vadd.f32 %v2167, %v2359
  %v2428 = vadd.f32 %v2168, %v2359
  %v2429 = vadd.f32 %v2169, %v2359
  %v2430 = vadd.f32 %v2170, %v2359
  %v2431 = vadd.f32 %v2171, %v2359
  %v2432 = vadd.f32 %v2172, %v2359
  %v2433 = vadd.f32 %v2173, %v2359
  %v2434 = vadd.f32 %v2174, %v2359
  %v2435 = vadd.f32 %v2175, %v2359
  %v2436 = vadd.f32 %v2176, %v2359
  %v2437 = vadd.f32 %v2177, %v2359
  %v2438 = vadd.f32 %v2178, %v2359
  %v2439 = vadd.f32 %v2179, %v2359
  %v2440 = vadd.f32 %v2180, %v2359
  %v2441 = vadd.f32 %v2181, %v2359
  %v2442 = vadd.f32 %v2182, %v2359
  %v2443 = vadd.f32 %v2183, %v2359
  %v2444 = vadd.f32 %v2184, %v2359
  %v2445 = vadd.f32 %v2185, %v2359
  %v2446 = vadd.f32 %v2186, %v2359
  %v2447 = vadd.f32 %v2187, %v2359
  %v2448 = vadd.f32 %v2188, %v2359
  %v2449 = vadd.f32 %v2189, %v2359
  %v2450 = vadd.f32 %v2190, %v2359
  %v2451 = vadd.f32 %v2191, %v2359
  %v2452 = vadd.f32 %v2192, %v2359
  %v2453 = vadd.f32 %v2193, %v2359
  %v2454 = vadd.f32 %v2194, %v2359
  %v2455 = vadd.f32 %v2195, %v2359
  %v2456 = vadd.f32 %v2196, %v2359
  %v2457 = vadd.f32 %v2197, %v2359
  %v2458 = vadd.f32 %v2198, %v2359
  %v2459 = vadd.f32 %v2199, %v2359
  %v2460 = vadd.f32 %v2200, %v2359
  %v2461 = vadd.f32 %v2201, %v2359
  %v2462 = vadd.f32 %v2202, %v2359
  %v2463 = vadd.f32 %v2203, %v2359
  %v2464 = vadd.f32 %v2204, %v2359
  %v2465 = vadd.f32 %v2205, %v2359
  %v2466 = vadd.f32 %v2206, %v2359
  %v2467 = vadd.f32 %v2207, %v2359
  %v2468 = vadd.f32 %v2208, %v2359
  %v2469 = vadd.f32 %v2209, %v2359
  %v2470 = vadd.f32 %v2210, %v2359
  %v2471 = vadd.f32 %v2211, %v2359
  %v2472 = vadd.f32 %v2212, %v2359
  %v2473 = vadd.f32 %v2213, %v2359
  %v2474 = vadd.f32 %v2214, %v2359
  %v2475 = vadd.f32 %v2215, %v2359
  %v2476 = vadd.f32 %v2216, %v2359
  %v2477 = vadd.f32 %v2217, %v2359
  %v2478 = vadd.f32 %v2218, %v2359
  %v2479 = vadd.f32 %v2219, %v2359
  %v2480 = vadd.f32 %v2220, %v2359
  %v2481 = vadd.f32 %v2221, %v2359
  %v2482 = vadd.f32 %v2222, %v2359
  %v2483 = vadd.f32 %v2223, %v2359
  %v2484 = vadd.f32 %v2224, %v2359
  %v2485 = vadd.f32 %v2225, %v2359
  %v2486 = vadd.f32 %v2226, %v2359
  %v2487 = vadd.f32 %v2227, %v2359
  %v2488 = vadd.f32 %v2228, %v2359
  %v2489 = vadd.f32 %v2229, %v2359
  %v2490 = vadd.f32 %v2230, %v2359
  %v2491 = vadd.f32 %v2231, %v2359
  %v2492 = vadd.f32 %v2232, %v2359
  %v2493 = vadd.f32 %v2233, %v2359
  %v2494 = vadd.f32 %v2234, %v2359
  %v2495 = vadd.f32 %v2235, %v2359
  %v2496 = vadd.f32 %v2236, %v2359
  %v2497 = vadd.f32 %v2237, %v2359
  %v2498 = vadd.f32 %v2238, %v2359
  %v2499 = vadd.f32 %v2239, %v2359
  %v2500 = vadd.f32 %v2240, %v2359
  %v2501 = vadd.f32 %v2241, %v2359
  %v2502 = vadd.f32 %v2242, %v2359
  %v2503 = vadd.f32 %v2243, %v2359
  %v2504 = vadd.f32 %v2244, %v2359
  %v2505 = vadd.f32 %v2245, %v2359
  %v2506 = vadd.f32 %v2246, %v2359
  %v2507 = vadd.f32 %v2247, %v2359
  %v2508 = vadd.f32 %v2248, %v2359
  %v2509 = vadd.f32 %v2249, %v2359
  %v2510 = vadd.f32 %v2250, %v2359
  %v2511 = vadd.f32 %v2251, %v2359
  %v2512 = vadd.f32 %v2252, %v2359
  %v2513 = vadd.f32 %v2253, %v2359
  %v2514 = vadd.f32 %v2254, %v2359
  %v2515 = vadd.f32 %v2255, %v2359
  %v2516 = vadd.f32 %v2256, %v2359
  %v2517 = vadd.f32 %v2257, %v2359
  %v2518 = vadd.f32 %v2258, %v2359
  %v2519 = vadd.f32 %v2259, %v2359
  %v2520 = vadd.f32 %v2260, %v2359
  %v2521 = vadd.f32 %v2261, %v2359
  %v2522 = vadd.f32 %v2262, %v2359
  %v2523 = vadd.f32 %v2263, %v2359
  %v2524 = vadd.f32 %v2264, %v2359
  %v2525 = vadd.f32 %v2265, %v2359
  %v2526 = vadd.f32 %v2266, %v2359
  %v2527 = vadd.f32 %v2267, %v2359
  %v2528 = vadd.f32 %v2268, %v2359
  %v2529 = vadd.f32 %v2269, %v2359
  %v2530 = vadd.f32 %v2270, %v2359
  %v2531 = vadd.f32 %v2271, %v2359
  %v2532 = vadd.f32 %v2272, %v2359
  %v2533 = vadd.f32 %v2273, %v2359
  %v2534 = vadd.f32 %v2274, %v2359
  %v2535 = vadd.f32 %v2275, %v2359
  %v2536 = vadd.f32 %v2276, %v2359
  %v2537 = vadd.f32 %v2277, %v2359
  %v2538 = vadd.f32 %v2278, %v2359
  %v2539 = vadd.f32 %v2279, %v2359
  %v2540 = vadd.f32 %v2280, %v2359
  %v2541 = vadd.f32 %v2281, %v2359
  %v2542 = vadd.f32 %v2282, %v2359
  %v2543 = vadd.f32 %v2283, %v2359
  %v2544 = vadd.f32 %v2284, %v2359
  %v2545 = vadd.f32 %v2285, %v2359
  %v2546 = vadd.f32 %v2286, %v2359
  %v2547 = vadd.f32 %v2287, %v2359
  %v2548 = vadd.f32 %v2288, %v2359
  %v2549 = vadd.f32 %v2289, %v2359
  %v2550 = vadd.f32 %v2290, %v2359
  %v2551 = vadd.f32 %v2291, %v2359
  %v2552 = vadd.f32 %v2292, %v2359
  %v2553 = vadd.f32 %v2293, %v2359
  %v2554 = vadd.f32 %v2294, %v2359
  %v2555 = vadd.f32 %v2295, %v2359
  %v2556 = vadd.f32 %v2296, %v2359
  %v2557 = vadd.f32 %v2297, %v2359
  %v2558 = vadd.f32 %v2298, %v2359
  %v2559 = vadd.f32 %v2299, %v2359
  %v2560 = vadd.f32 %v2300, %v2359
  %v2561 = vadd.f32 %v2301, %v2359
  %v2562 = vadd.f32 %v2302, %v2359
  %v2563 = vadd.f32 %v2303, %v2359
  %v2564 = vadd.f32 %v2304, %v2359
  %v2565 = vadd.f32 %v2305, %v2359
  %v2566 = vadd.f32 %v2306, %v2359
  %v2567 = vadd.f32 %v2307, %v2359
  %v2568 = vadd.f32 %v2308, %v2359
  %v2569 = vadd.f32 %v2309, %v2359
  %v2570 = vadd.f32 %v2310, %v2359
  %v2571 = vadd.f32 %v2311, %v2359
  %v2572 = vadd.f32 %v2312, %v2359
  %v2573 = vadd.f32 %v2313, %v2359
  %v2574 = vadd.f32 %v2314, %v2359
  %v2575 = vadd.f32 %v2315, %v2359
  %v2576 = vadd.f32 %v2316, %v2359
  %v2577 = vadd.f32 %v2317, %v2359
  %v2578 = vadd.f32 %v2318, %v2359
  %v2579 = vadd.f32 %v2319, %v2359
  %v2580 = vadd.f32 %v2320, %v2359
  %v2581 = vadd.f32 %v2321, %v2359
  %v2582 = vadd.f32 %v2322, %v2359
  %v2583 = vadd.f32 %v2323, %v2359
  %v2584 = vadd.f32 %v2324, %v2359
  %v2585 = vadd.f32 %v2325, %v2359
  %v2586 = vadd.f32 %v2326, %v2359
  %v2587 = vadd.f32 %v2327, %v2359
  %v2588 = vadd.f32 %v2328, %v2359
  %v2589 = vadd.f32 %v2329, %v2359
  %v2590 = vadd.f32 %v2330, %v2359
  %v2591 = vadd.f32 %v2331, %v2359
  %v2592 = vadd.f32 %v2332, %v2359
  %v2593 = vadd.f32 %v2333, %v2359
  %v2594 = vadd.f32 %v2334, %v2359
  %v2595 = vadd.f32 %v2335, %v2359
  %v2596 = vadd.f32 %v2336, %v2359
  %v2597 = vadd.f32 %v2337, %v2359
  %v2598 = vadd.f32 %v2338, %v2359
  %v2599 = vadd.f32 %v2339, %v2359
  %v2600 = vadd.f32 %v2340, %v2359
  %v2601 = vadd.f32 %v2341, %v2359
  %v2602 = vadd.f32 %v2342, %v2359
  %v2603 = vadd.f32 %v2343, %v2359
  %v2604 = vadd.f32 %v2344, %v2359
  %v2605 = vadd.f32 %v2345, %v2359
  %v2606 = vadd.f32 %v2346, %v2359
  %v2607 = vadd.f32 %v2347, %v2359
  %v2608 = vadd.f32 %v2348, %v2359
  %v2609 = vadd.f32 %v2349, %v2359
  %v2610 = vadd.f32 %v2350, %v2359
  %v2611 = vadd.f32 %v2351, %v2359
  %v2612 = vadd.f32 %v2352, %v2359
  %v2613 = vadd.f32 %v2353, %v2359
  %v2614 = vadd.f32 %v2354, %v2359
  %v2615 = vadd.f32 %v2355, %v2359
  %v2616 = vadd.f32 %v2356, %v2359
  %v2617 = vmax.f32 %v2361, 0.0
  %v2618 = vmax.f32 %v2362, 0.0
  %v2619 = vmax.f32 %v2363, 0.0
  %v2620 = vmax.f32 %v2364, 0.0
  %v2621 = vmax.f32 %v2365, 0.0
  %v2622 = vmax.f32 %v2366, 0.0
  %v2623 = vmax.f32 %v2367, 0.0
  %v2624 = vmax.f32 %v2368, 0.0
  %v2625 = vmax.f32 %v2369, 0.0
  %v2626 = vmax.f32 %v2370, 0.0
  %v2627 = vmax.f32 %v2371, 0.0
  %v2628 = vmax.f32 %v2372, 0.0
  %v2629 = vmax.f32 %v2373, 0.0
  %v2630 = vmax.f32 %v2374, 0.0
  %v2631 = vmax.f32 %v2375, 0.0
  %v2632 = vmax.f32 %v2376, 0.0
  %v2633 = vmax.f32 %v2377, 0.0
  %v2634 = vmax.f32 %v2378, 0.0
  %v2635 = vmax.f32 %v2379, 0.0
  %v2636 = vmax.f32 %v2380, 0.0
  %v2637 = vmax.f32 %v2381, 0.0
  %v2638 = vmax.f32 %v2382, 0.0
  %v2639 = vmax.f32 %v2383, 0.0
  %v2640 = vmax.f32 %v2384, 0.0
  %v2641 = vmax.f32 %v2385, 0.0
  %v2642 = vmax.f32 %v2386, 0.0
  %v2643 = vmax.f32 %v2387, 0.0
  %v2644 = vmax.f32 %v2388, 0.0
  %v2645 = vmax.f32 %v2389, 0.0
  %v2646 = vmax.f32 %v2390, 0.0
  %v2647 = vmax.f32 %v2391, 0.0
  %v2648 = vmax.f32 %v2392, 0.0
  %v2649 = vmax.f32 %v2393, 0.0
  %v2650 = vmax.f32 %v2394, 0.0
  %v2651 = vmax.f32 %v2395, 0.0
  %v2652 = vmax.f32 %v2396, 0.0
  %v2653 = vmax.f32 %v2397, 0.0
  %v2654 = vmax.f32 %v2398, 0.0
  %v2655 = vmax.f32 %v2399, 0.0
  %v2656 = vmax.f32 %v2400, 0.0
  %v2657 = vmax.f32 %v2401, 0.0
  %v2658 = vmax.f32 %v2402, 0.0
  %v2659 = vmax.f32 %v2403, 0.0
  %v2660 = vmax.f32 %v2404, 0.0
  %v2661 = vmax.f32 %v2405, 0.0
  %v2662 = vmax.f32 %v2406, 0.0
  %v2663 = vmax.f32 %v2407, 0.0
  %v2664 = vmax.f32 %v2408, 0.0
  %v2665 = vmax.f32 %v2409, 0.0
  %v2666 = vmax.f32 %v2410, 0.0
  %v2667 = vmax.f32 %v2411, 0.0
  %v2668 = vmax.f32 %v2412, 0.0
  %v2669 = vmax.f32 %v2413, 0.0
  %v2670 = vmax.f32 %v2414, 0.0
  %v2671 = vmax.f32 %v2415, 0.0
  %v2672 = vmax.f32 %v2416, 0.0
  %v2673 = vmax.f32 %v2417, 0.0
  %v2674 = vmax.f32 %v2418, 0.0
  %v2675 = vmax.f32 %v2419, 0.0
  %v2676 = vmax.f32 %v2420, 0.0
  %v2677 = vmax.f32 %v2421, 0.0
  %v2678 = vmax.f32 %v2422, 0.0
  %v2679 = vmax.f32 %v2423, 0.0
  %v2680 = vmax.f32 %v2424, 0.0
  %v2681 = vmax.f32 %v2425, 0.0
  %v2682 = vmax.f32 %v2426, 0.0
  %v2683 = vmax.f32 %v2427, 0.0
  %v2684 = vmax.f32 %v2428, 0.0
  %v2685 = vmax.f32 %v2429, 0.0
  %v2686 = vmax.f32 %v2430, 0.0
  %v2687 = vmax.f32 %v2431, 0.0
  %v2688 = vmax.f32 %v2432, 0.0
  %v2689 = vmax.f32 %v2433, 0.0
  %v2690 = vmax.f32 %v2434, 0.0
  %v2691 = vmax.f32 %v2435, 0.0
  %v2692 = vmax.f32 %v2436, 0.0
  %v2693 = vmax.f32 %v2437, 0.0
  %v2694 = vmax.f32 %v2438, 0.0
  %v2695 = vmax.f32 %v2439, 0.0
  %v2696 = vmax.f32 %v2440, 0.0
  %v2697 = vmax.f32 %v2441, 0.0
  %v2698 = vmax.f32 %v2442, 0.0
  %v2699 = vmax.f32 %v2443, 0.0
  %v2700 = vmax.f32 %v2444, 0.0
  %v2701 = vmax.f32 %v2445, 0.0
  %v2702 = vmax.f32 %v2446, 0.0
  %v2703 = vmax.f32 %v2447, 0.0
  %v2704 = vmax.f32 %v2448, 0.0
  %v2705 = vmax.f32 %v2449, 0.0
  %v2706 = vmax.f32 %v2450, 0.0
  %v2707 = vmax.f32 %v2451, 0.0
  %v2708 = vmax.f32 %v2452, 0.0
  %v2709 = vmax.f32 %v2453, 0.0
  %v2710 = vmax.f32 %v2454, 0.0
  %v2711 = vmax.f32 %v2455, 0.0
  %v2712 = vmax.f32 %v2456, 0.0
  %v2713 = vmax.f32 %v2457, 0.0
  %v2714 = vmax.f32 %v2458, 0.0
  %v2715 = vmax.f32 %v2459, 0.0
  %v2716 = vmax.f32 %v2460, 0.0
  %v2717 = vmax.f32 %v2461, 0.0
  %v2718 = vmax.f32 %v2462, 0.0
  %v2719 = vmax.f32 %v2463, 0.0
  %v2720 = vmax.f32 %v2464, 0.0
  %v2721 = vmax.f32 %v2465, 0.0
  %v2722 = vmax.f32 %v2466, 0.0
  %v2723 = vmax.f32 %v2467, 0.0
  %v2724 = vmax.f32 %v2468, 0.0
  %v2725 = vmax.f32 %v2469, 0.0
  %v2726 = vmax.f32 %v2470, 0.0
  %v2727 = vmax.f32 %v2471, 0.0
  %v2728 = vmax.f32 %v2472, 0.0
  %v2729 = vmax.f32 %v2473, 0.0
  %v2730 = vmax.f32 %v2474, 0.0
  %v2731 = vmax.f32 %v2475, 0.0
  %v2732 = vmax.f32 %v2476, 0.0
  %v2733 = vmax.f32 %v2477, 0.0
  %v2734 = vmax.f32 %v2478, 0.0
  %v2735 = vmax.f32 %v2479, 0.0
  %v2736 = vmax.f32 %v2480, 0.0
  %v2737 = vmax.f32 %v2481, 0.0
  %v2738 = vmax.f32 %v2482, 0.0
  %v2739 = vmax.f32 %v2483, 0.0
  %v2740 = vmax.f32 %v2484, 0.0
  %v2741 = vmax.f32 %v2485, 0.0
  %v2742 = vmax.f32 %v2486, 0.0
  %v2743 = vmax.f32 %v2487, 0.0
  %v2744 = vmax.f32 %v2488, 0.0
  %v2745 = vmax.f32 %v2489, 0.0
  %v2746 = vmax.f32 %v2490, 0.0
  %v2747 = vmax.f32 %v2491, 0.0
  %v2748 = vmax.f32 %v2492, 0.0
  %v2749 = vmax.f32 %v2493, 0.0
  %v2750 = vmax.f32 %v2494, 0.0
  %v2751 = vmax.f32 %v2495, 0.0
  %v2752 = vmax.f32 %v2496, 0.0
  %v2753 = vmax.f32 %v2497, 0.0
  %v2754 = vmax.f32 %v2498, 0.0
  %v2755 = vmax.f32 %v2499, 0.0
  %v2756 = vmax.f32 %v2500, 0.0
  %v2757 = vmax.f32 %v2501, 0.0
  %v2758 = vmax.f32 %v2502, 0.0
  %v2759 = vmax.f32 %v2503, 0.0
  %v2760 = vmax.f32 %v2504, 0.0
  %v2761 = vmax.f32 %v2505, 0.0
  %v2762 = vmax.f32 %v2506, 0.0
  %v2763 = vmax.f32 %v2507, 0.0
  %v2764 = vmax.f32 %v2508, 0.0
  %v2765 = vmax.f32 %v2509, 0.0
  %v2766 = vmax.f32 %v2510, 0.0
  %v2767 = vmax.f32 %v2511, 0.0
  %v2768 = vmax.f32 %v2512, 0.0
  %v2769 = vmax.f32 %v2513, 0.0
  %v2770 = vmax.f32 %v2514, 0.0
  %v2771 = vmax.f32 %v2515, 0.0
  %v2772 = vmax.f32 %v2516, 0.0
  %v2773 = vmax.f32 %v2517, 0.0
  %v2774 = vmax.f32 %v2518, 0.0
  %v2775 = vmax.f32 %v2519, 0.0
  %v2776 = vmax.f32 %v2520, 0.0
  %v2777 = vmax.f32 %v2521, 0.0
  %v2778 = vmax.f32 %v2522, 0.0
  %v2779 = vmax.f32 %v2523, 0.0
  %v2780 = vmax.f32 %v2524, 0.0
  %v2781 = vmax.f32 %v2525, 0.0
  %v2782 = vmax.f32 %v2526, 0.0
  %v2783 = vmax.f32 %v2527, 0.0
  %v2784 = vmax.f32 %v2528, 0.0
  %v2785 = vmax.f32 %v2529, 0.0
  %v2786 = vmax.f32 %v2530, 0.0
  %v2787 = vmax.f32 %v2531, 0.0
  %v2788 = vmax.f32 %v2532, 0.0
  %v2789 = vmax.f32 %v2533, 0.0
  %v2790 = vmax.f32 %v2534, 0.0
  %v2791 = vmax.f32 %v2535, 0.0
  %v2792 = vmax.f32 %v2536, 0.0
  %v2793 = vmax.f32 %v2537, 0.0
  %v2794 = vmax.f32 %v2538, 0.0
  %v2795 = vmax.f32 %v2539, 0.0
  %v2796 = vmax.f32 %v2540, 0.0
  %v2797 = vmax.f32 %v2541, 0.0
  %v2798 = vmax.f32 %v2542, 0.0
  %v2799 = vmax.f32 %v2543, 0.0
  %v2800 = vmax.f32 %v2544, 0.0
  %v2801 = vmax.f32 %v2545, 0.0
  %v2802 = vmax.f32 %v2546, 0.0
  %v2803 = vmax.f32 %v2547, 0.0
  %v2804 = vmax.f32 %v2548, 0.0
  %v2805 = vmax.f32 %v2549, 0.0
  %v2806 = vmax.f32 %v2550, 0.0
  %v2807 = vmax.f32 %v2551, 0.0
  %v2808 = vmax.f32 %v2552, 0.0
  %v2809 = vmax.f32 %v2553, 0.0
  %v2810 = vmax.f32 %v2554, 0.0
  %v2811 = vmax.f32 %v2555, 0.0
  %v2812 = vmax.f32 %v2556, 0.0
  %v2813 = vmax.f32 %v2557, 0.0
  %v2814 = vmax.f32 %v2558, 0.0
  %v2815 = vmax.f32 %v2559, 0.0
  %v2816 = vmax.f32 %v2560, 0.0
  %v2817 = vmax.f32 %v2561, 0.0
  %v2818 = vmax.f32 %v2562, 0.0
  %v2819 = vmax.f32 %v2563, 0.0
  %v2820 = vmax.f32 %v2564, 0.0
  %v2821 = vmax.f32 %v2565, 0.0
  %v2822 = vmax.f32 %v2566, 0.0
  %v2823 = vmax.f32 %v2567, 0.0
  %v2824 = vmax.f32 %v2568, 0.0
  %v2825 = vmax.f32 %v2569, 0.0
  %v2826 = vmax.f32 %v2570, 0.0
  %v2827 = vmax.f32 %v2571, 0.0
  %v2828 = vmax.f32 %v2572, 0.0
  %v2829 = vmax.f32 %v2573, 0.0
  %v2830 = vmax.f32 %v2574, 0.0
  %v2831 = vmax.f32 %v2575, 0.0
  %v2832 = vmax.f32 %v2576, 0.0
  %v2833 = vmax.f32 %v2577, 0.0
  %v2834 = vmax.f32 %v2578, 0.0
  %v2835 = vmax.f32 %v2579, 0.0
  %v2836 = vmax.f32 %v2580, 0.0
  %v2837 = vmax.f32 %v2581, 0.0
  %v2838 = vmax.f32 %v2582, 0.0
  %v2839 = vmax.f32 %v2583, 0.0
  %v2840 = vmax.f32 %v2584, 0.0
  %v2841 = vmax.f32 %v2585, 0.0
  %v2842 = vmax.f32 %v2586, 0.0
  %v2843 = vmax.f32 %v2587, 0.0
  %v2844 = vmax.f32 %v2588, 0.0
  %v2845 = vmax.f32 %v2589, 0.0
  %v2846 = vmax.f32 %v2590, 0.0
  %v2847 = vmax.f32 %v2591, 0.0
  %v2848 = vmax.f32 %v2592, 0.0
  %v2849 = vmax.f32 %v2593, 0.0
  %v2850 = vmax.f32 %v2594, 0.0
  %v2851 = vmax.f32 %v2595, 0.0
  %v2852 = vmax.f32 %v2596, 0.0
  %v2853 = vmax.f32 %v2597, 0.0
  %v2854 = vmax.f32 %v2598, 0.0
  %v2855 = vmax.f32 %v2599, 0.0
  %v2856 = vmax.f32 %v2600, 0.0
  %v2857 = vmax.f32 %v2601, 0.0
  %v2858 = vmax.f32 %v2602, 0.0
  %v2859 = vmax.f32 %v2603, 0.0
  %v2860 = vmax.f32 %v2604, 0.0
  %v2861 = vmax.f32 %v2605, 0.0
  %v2862 = vmax.f32 %v2606, 0.0
  %v2863 = vmax.f32 %v2607, 0.0
  %v2864 = vmax.f32 %v2608, 0.0
  %v2865 = vmax.f32 %v2609, 0.0
  %v2866 = vmax.f32 %v2610, 0.0
  %v2867 = vmax.f32 %v2611, 0.0
  %v2868 = vmax.f32 %v2612, 0.0
  %v2869 = vmax.f32 %v2613, 0.0
  %v2870 = vmax.f32 %v2614, 0.0
  %v2871 = vmax.f32 %v2615, 0.0
  %v2872 = vmax.f32 %v2616, 0.0
  %v2873 = vpack.c.bf16 %v2618, %v2617
  %v2874 = vpack.c.bf16 %v2620, %v2619
  %v2875 = vpack.c.bf16 %v2622, %v2621
  %v2876 = vpack.c.bf16 %v2624, %v2623
  %v2877 = vpack.c.bf16 %v2626, %v2625
  %v2878 = vpack.c.bf16 %v2628, %v2627
  %v2879 = vpack.c.bf16 %v2630, %v2629
  %v2880 = vpack.c.bf16 %v2632, %v2631
  %v2881 = vpack.c.bf16 %v2634, %v2633
  %v2882 = vpack.c.bf16 %v2636, %v2635
  %v2883 = vpack.c.bf16 %v2638, %v2637
  %v2884 = vpack.c.bf16 %v2640, %v2639
  %v2885 = vpack.c.bf16 %v2642, %v2641
  %v2886 = vpack.c.bf16 %v2644, %v2643
  %v2887 = vpack.c.bf16 %v2646, %v2645
  %v2888 = vpack.c.bf16 %v2648, %v2647
  %v2889 = vpack.c.bf16 %v2650, %v2649
  %v2890 = vpack.c.bf16 %v2652, %v2651
  %v2891 = vpack.c.bf16 %v2654, %v2653
  %v2892 = vpack.c.bf16 %v2656, %v2655
  %v2893 = vpack.c.bf16 %v2658, %v2657
  %v2894 = vpack.c.bf16 %v2660, %v2659
  %v2895 = vpack.c.bf16 %v2662, %v2661
  %v2896 = vpack.c.bf16 %v2664, %v2663
  %v2897 = vpack.c.bf16 %v2666, %v2665
  %v2898 = vpack.c.bf16 %v2668, %v2667
  %v2899 = vpack.c.bf16 %v2670, %v2669
  %v2900 = vpack.c.bf16 %v2672, %v2671
  %v2901 = vpack.c.bf16 %v2674, %v2673
  %v2902 = vpack.c.bf16 %v2676, %v2675
  %v2903 = vpack.c.bf16 %v2678, %v2677
  %v2904 = vpack.c.bf16 %v2680, %v2679
  %v2905 = vpack.c.bf16 %v2682, %v2681
  %v2906 = vpack.c.bf16 %v2684, %v2683
  %v2907 = vpack.c.bf16 %v2686, %v2685
  %v2908 = vpack.c.bf16 %v2688, %v2687
  %v2909 = vpack.c.bf16 %v2690, %v2689
  %v2910 = vpack.c.bf16 %v2692, %v2691
  %v2911 = vpack.c.bf16 %v2694, %v2693
  %v2912 = vpack.c.bf16 %v2696, %v2695
  %v2913 = vpack.c.bf16 %v2698, %v2697
  %v2914 = vpack.c.bf16 %v2700, %v2699
  %v2915 = vpack.c.bf16 %v2702, %v2701
  %v2916 = vpack.c.bf16 %v2704, %v2703
  %v2917 = vpack.c.bf16 %v2706, %v2705
  %v2918 = vpack.c.bf16 %v2708, %v2707
  %v2919 = vpack.c.bf16 %v2710, %v2709
  %v2920 = vpack.c.bf16 %v2712, %v2711
  %v2921 = vpack.c.bf16 %v2714, %v2713
  %v2922 = vpack.c.bf16 %v2716, %v2715
  %v2923 = vpack.c.bf16 %v2718, %v2717
  %v2924 = vpack.c.bf16 %v2720, %v2719
  %v2925 = vpack.c.bf16 %v2722, %v2721
  %v2926 = vpack.c.bf16 %v2724, %v2723
  %v2927 = vpack.c.bf16 %v2726, %v2725
  %v2928 = vpack.c.bf16 %v2728, %v2727
  %v2929 = vpack.c.bf16 %v2730, %v2729
  %v2930 = vpack.c.bf16 %v2732, %v2731
  %v2931 = vpack.c.bf16 %v2734, %v2733
  %v2932 = vpack.c.bf16 %v2736, %v2735
  %v2933 = vpack.c.bf16 %v2738, %v2737
  %v2934 = vpack.c.bf16 %v2740, %v2739
  %v2935 = vpack.c.bf16 %v2742, %v2741
  %v2936 = vpack.c.bf16 %v2744, %v2743
  %v2937 = vpack.c.bf16 %v2746, %v2745
  %v2938 = vpack.c.bf16 %v2748, %v2747
  %v2939 = vpack.c.bf16 %v2750, %v2749
  %v2940 = vpack.c.bf16 %v2752, %v2751
  %v2941 = vpack.c.bf16 %v2754, %v2753
  %v2942 = vpack.c.bf16 %v2756, %v2755
  %v2943 = vpack.c.bf16 %v2758, %v2757
  %v2944 = vpack.c.bf16 %v2760, %v2759
  %v2945 = vpack.c.bf16 %v2762, %v2761
  %v2946 = vpack.c.bf16 %v2764, %v2763
  %v2947 = vpack.c.bf16 %v2766, %v2765
  %v2948 = vpack.c.bf16 %v2768, %v2767
  %v2949 = vpack.c.bf16 %v2770, %v2769
  %v2950 = vpack.c.bf16 %v2772, %v2771
  %v2951 = vpack.c.bf16 %v2774, %v2773
  %v2952 = vpack.c.bf16 %v2776, %v2775
  %v2953 = vpack.c.bf16 %v2778, %v2777
  %v2954 = vpack.c.bf16 %v2780, %v2779
  %v2955 = vpack.c.bf16 %v2782, %v2781
  %v2956 = vpack.c.bf16 %v2784, %v2783
  %v2957 = vpack.c.bf16 %v2786, %v2785
  %v2958 = vpack.c.bf16 %v2788, %v2787
  %v2959 = vpack.c.bf16 %v2790, %v2789
  %v2960 = vpack.c.bf16 %v2792, %v2791
  %v2961 = vpack.c.bf16 %v2794, %v2793
  %v2962 = vpack.c.bf16 %v2796, %v2795
  %v2963 = vpack.c.bf16 %v2798, %v2797
  %v2964 = vpack.c.bf16 %v2800, %v2799
  %v2965 = vpack.c.bf16 %v2802, %v2801
  %v2966 = vpack.c.bf16 %v2804, %v2803
  %v2967 = vpack.c.bf16 %v2806, %v2805
  %v2968 = vpack.c.bf16 %v2808, %v2807
  %v2969 = vpack.c.bf16 %v2810, %v2809
  %v2970 = vpack.c.bf16 %v2812, %v2811
  %v2971 = vpack.c.bf16 %v2814, %v2813
  %v2972 = vpack.c.bf16 %v2816, %v2815
  %v2973 = vpack.c.bf16 %v2818, %v2817
  %v2974 = vpack.c.bf16 %v2820, %v2819
  %v2975 = vpack.c.bf16 %v2822, %v2821
  %v2976 = vpack.c.bf16 %v2824, %v2823
  %v2977 = vpack.c.bf16 %v2826, %v2825
  %v2978 = vpack.c.bf16 %v2828, %v2827
  %v2979 = vpack.c.bf16 %v2830, %v2829
  %v2980 = vpack.c.bf16 %v2832, %v2831
  %v2981 = vpack.c.bf16 %v2834, %v2833
  %v2982 = vpack.c.bf16 %v2836, %v2835
  %v2983 = vpack.c.bf16 %v2838, %v2837
  %v2984 = vpack.c.bf16 %v2840, %v2839
  %v2985 = vpack.c.bf16 %v2842, %v2841
  %v2986 = vpack.c.bf16 %v2844, %v2843
  %v2987 = vpack.c.bf16 %v2846, %v2845
  %v2988 = vpack.c.bf16 %v2848, %v2847
  %v2989 = vpack.c.bf16 %v2850, %v2849
  %v2990 = vpack.c.bf16 %v2852, %v2851
  %v2991 = vpack.c.bf16 %v2854, %v2853
  %v2992 = vpack.c.bf16 %v2856, %v2855
  %v2993 = vpack.c.bf16 %v2858, %v2857
  %v2994 = vpack.c.bf16 %v2860, %v2859
  %v2995 = vpack.c.bf16 %v2862, %v2861
  %v2996 = vpack.c.bf16 %v2864, %v2863
  %v2997 = vpack.c.bf16 %v2866, %v2865
  %v2998 = vpack.c.bf16 %v2868, %v2867
  %v2999 = vpack.c.bf16 %v2870, %v2869
  %v3000 = vpack.c.bf16 %v2872, %v2871
  %v3001 = vld [vmem:[%s3] sm:$0xf]
  %v3003 = vsel %vm274, %v2873, 0
  %v3006 = vsel %vm274, %v2874, 0
  %v3009 = vsel %vm274, %v2875, 0
  %v3012 = vsel %vm274, %v2876, 0
  %v3015 = vsel %vm274, %v2877, 0
  %v3018 = vsel %vm274, %v2878, 0
  %v3021 = vsel %vm274, %v2879, 0
  %v3024 = vsel %vm274, %v2880, 0
  %v3027 = vsel %vm274, %v2881, 0
  %v3030 = vsel %vm274, %v2882, 0
  %v3033 = vsel %vm274, %v2883, 0
  %v3036 = vsel %vm274, %v2884, 0
  %v3039 = vsel %vm274, %v2885, 0
  %v3042 = vsel %vm274, %v2886, 0
  %v3045 = vsel %vm274, %v2887, 0
  %v3048 = vsel %vm274, %v2888, 0
  %v3051 = vsel %vm274, %v2889, 0
  %v3054 = vsel %vm274, %v2890, 0
  %v3057 = vsel %vm274, %v2891, 0
  %v3060 = vsel %vm274, %v2892, 0
  %v3063 = vsel %vm274, %v2893, 0
  %v3066 = vsel %vm274, %v2894, 0
  %v3069 = vsel %vm274, %v2895, 0
  %v3072 = vsel %vm274, %v2896, 0
  %v3075 = vsel %vm274, %v2897, 0
  %v3078 = vsel %vm274, %v2898, 0
  %v3081 = vsel %vm274, %v2899, 0
  %v3084 = vsel %vm274, %v2900, 0
  %v3087 = vsel %vm274, %v2901, 0
  %v3090 = vsel %vm274, %v2902, 0
  %v3093 = vsel %vm274, %v2903, 0
  %v3096 = vsel %vm274, %v2904, 0
  %v3099 = vsel %vm274, %v2905, 0
  %v3102 = vsel %vm274, %v2906, 0
  %v3105 = vsel %vm274, %v2907, 0
  %v3108 = vsel %vm274, %v2908, 0
  %v3111 = vsel %vm274, %v2909, 0
  %v3114 = vsel %vm274, %v2910, 0
  %v3117 = vsel %vm274, %v2911, 0
  %v3120 = vsel %vm274, %v2912, 0
  %v3123 = vsel %vm274, %v2913, 0
  %v3126 = vsel %vm274, %v2914, 0
  %v3129 = vsel %vm274, %v2915, 0
  %v3132 = vsel %vm274, %v2916, 0
  %v3135 = vsel %vm274, %v2917, 0
  %v3138 = vsel %vm274, %v2918, 0
  %v3141 = vsel %vm274, %v2919, 0
  %v3144 = vsel %vm274, %v2920, 0
  %v3147 = vsel %vm274, %v2921, 0
  %v3150 = vsel %vm274, %v2922, 0
  %v3153 = vsel %vm274, %v2923, 0
  %v3156 = vsel %vm274, %v2924, 0
  %v3159 = vsel %vm274, %v2925, 0
  %v3162 = vsel %vm274, %v2926, 0
  %v3165 = vsel %vm274, %v2927, 0
  %v3168 = vsel %vm274, %v2928, 0
  %v3171 = vsel %vm274, %v2929, 0
  %v3174 = vsel %vm274, %v2930, 0
  %v3177 = vsel %vm274, %v2931, 0
  %v3180 = vsel %vm274, %v2932, 0
  %v3183 = vsel %vm274, %v2933, 0
  %v3186 = vsel %vm274, %v2934, 0
  %v3189 = vsel %vm274, %v2935, 0
  %v3192 = vsel %vm274, %v2936, 0
  %v3195 = vsel %vm274, %v2937, 0
  %v3198 = vsel %vm274, %v2938, 0
  %v3201 = vsel %vm274, %v2939, 0
  %v3204 = vsel %vm274, %v2940, 0
  %v3207 = vsel %vm274, %v2941, 0
  %v3210 = vsel %vm274, %v2942, 0
  %v3213 = vsel %vm274, %v2943, 0
  %v3216 = vsel %vm274, %v2944, 0
  %v3219 = vsel %vm274, %v2945, 0
  %v3222 = vsel %vm274, %v2946, 0
  %v3225 = vsel %vm274, %v2947, 0
  %v3228 = vsel %vm274, %v2948, 0
  %v3231 = vsel %vm274, %v2949, 0
  %v3234 = vsel %vm274, %v2950, 0
  %v3237 = vsel %vm274, %v2951, 0
  %v3240 = vsel %vm274, %v2952, 0
  %v3243 = vsel %vm274, %v2953, 0
  %v3246 = vsel %vm274, %v2954, 0
  %v3249 = vsel %vm274, %v2955, 0
  %v3252 = vsel %vm274, %v2956, 0
  %v3255 = vsel %vm274, %v2957, 0
  %v3258 = vsel %vm274, %v2958, 0
  %v3261 = vsel %vm274, %v2959, 0
  %v3264 = vsel %vm274, %v2960, 0
  %v3267 = vsel %vm274, %v2961, 0
  %v3270 = vsel %vm274, %v2962, 0
  %v3273 = vsel %vm274, %v2963, 0
  %v3276 = vsel %vm274, %v2964, 0
  %v3279 = vsel %vm274, %v2965, 0
  %v3282 = vsel %vm274, %v2966, 0
  %v3285 = vsel %vm274, %v2967, 0
  %v3288 = vsel %vm274, %v2968, 0
  %v3291 = vsel %vm274, %v2969, 0
  %v3294 = vsel %vm274, %v2970, 0
  %v3297 = vsel %vm274, %v2971, 0
  %v3300 = vsel %vm274, %v2972, 0
  %v3303 = vsel %vm274, %v2973, 0
  %v3306 = vsel %vm274, %v2974, 0
  %v3309 = vsel %vm274, %v2975, 0
  %v3312 = vsel %vm274, %v2976, 0
  %v3315 = vsel %vm274, %v2977, 0
  %v3318 = vsel %vm274, %v2978, 0
  %v3321 = vsel %vm274, %v2979, 0
  %v3324 = vsel %vm274, %v2980, 0
  %v3327 = vsel %vm274, %v2981, 0
  %v3330 = vsel %vm274, %v2982, 0
  %v3333 = vsel %vm274, %v2983, 0
  %v3336 = vsel %vm274, %v2984, 0
  %v3339 = vsel %vm274, %v2985, 0
  %v3342 = vsel %vm274, %v2986, 0
  %v3345 = vsel %vm274, %v2987, 0
  %v3348 = vsel %vm274, %v2988, 0
  %v3351 = vsel %vm274, %v2989, 0
  %v3354 = vsel %vm274, %v2990, 0
  %v3357 = vsel %vm274, %v2991, 0
  %v3360 = vsel %vm274, %v2992, 0
  %v3363 = vsel %vm274, %v2993, 0
  %v3366 = vsel %vm274, %v2994, 0
  %v3369 = vsel %vm274, %v2995, 0
  %v3372 = vsel %vm274, %v2996, 0
  %v3375 = vsel %vm274, %v2997, 0
  %v3378 = vsel %vm274, %v2998, 0
  %v3381 = vsel %vm274, %v2999, 0
  %v3384 = vsel %vm274, %v3000, 0
  %vm3386 = vcmask 1043456
  %v3388 = vsel %vm3386, %v3001, 0
  %3390 = vmatpush.bf16.msra.mxu0 0
  %3391 = vmatpush.bf16.msra.mxu0 0
  %3392 = vmatpush.bf16.msra.mxu0 0
  %3393 = vmatpush.bf16.msra.mxu0 0
  %3394 = vmatpush.bf16.msra.mxu0 0
  %3395 = vmatpush.bf16.msra.mxu0 0
  %3396 = vmatpush.bf16.msra.mxu0 0
  %3397 = vmatpush.bf16.msra.mxu0 %v3388
  %3398 = vmatmul.bf16.gmra.mxu0 %v3003
  %v3399 = vpop.f32.mrf.mxu0
  %v3400 = vadd.f32 0.0, %v3399
  %v3401 = vpop.f32.mrf.mxu0
  %v3402 = vadd.f32 0.0, %v3401
  %3403 = vmatmul.bf16.gmra.mxu0 %v3006
  %v3404 = vpop.f32.mrf.mxu0
  %v3405 = vadd.f32 0.0, %v3404
  %v3406 = vpop.f32.mrf.mxu0
  %v3407 = vadd.f32 0.0, %v3406
  %3408 = vmatmul.bf16.gmra.mxu0 %v3009
  %v3409 = vpop.f32.mrf.mxu0
  %v3410 = vadd.f32 0.0, %v3409
  %v3411 = vpop.f32.mrf.mxu0
  %v3412 = vadd.f32 0.0, %v3411
  %3413 = vmatmul.bf16.gmra.mxu0 %v3012
  %v3414 = vpop.f32.mrf.mxu0
  %v3415 = vadd.f32 0.0, %v3414
  %v3416 = vpop.f32.mrf.mxu0
  %v3417 = vadd.f32 0.0, %v3416
  %3418 = vmatmul.bf16.gmra.mxu0 %v3015
  %v3419 = vpop.f32.mrf.mxu0
  %v3420 = vadd.f32 0.0, %v3419
  %v3421 = vpop.f32.mrf.mxu0
  %v3422 = vadd.f32 0.0, %v3421
  %3423 = vmatmul.bf16.gmra.mxu0 %v3018
  %v3424 = vpop.f32.mrf.mxu0
  %v3425 = vadd.f32 0.0, %v3424
  %v3426 = vpop.f32.mrf.mxu0
  %v3427 = vadd.f32 0.0, %v3426
  %3428 = vmatmul.bf16.gmra.mxu0 %v3021
  %v3429 = vpop.f32.mrf.mxu0
  %v3430 = vadd.f32 0.0, %v3429
  %v3431 = vpop.f32.mrf.mxu0
  %v3432 = vadd.f32 0.0, %v3431
  %3433 = vmatmul.bf16.gmra.mxu0 %v3024
  %v3434 = vpop.f32.mrf.mxu0
  %v3435 = vadd.f32 0.0, %v3434
  %v3436 = vpop.f32.mrf.mxu0
  %v3437 = vadd.f32 0.0, %v3436
  %3438 = vmatmul.bf16.gmra.mxu0 %v3027
  %v3439 = vpop.f32.mrf.mxu0
  %v3440 = vadd.f32 0.0, %v3439
  %v3441 = vpop.f32.mrf.mxu0
  %v3442 = vadd.f32 0.0, %v3441
  %3443 = vmatmul.bf16.gmra.mxu0 %v3030
  %v3444 = vpop.f32.mrf.mxu0
  %v3445 = vadd.f32 0.0, %v3444
  %v3446 = vpop.f32.mrf.mxu0
  %v3447 = vadd.f32 0.0, %v3446
  %3448 = vmatmul.bf16.gmra.mxu0 %v3033
  %v3449 = vpop.f32.mrf.mxu0
  %v3450 = vadd.f32 0.0, %v3449
  %v3451 = vpop.f32.mrf.mxu0
  %v3452 = vadd.f32 0.0, %v3451
  %3453 = vmatmul.bf16.gmra.mxu0 %v3036
  %v3454 = vpop.f32.mrf.mxu0
  %v3455 = vadd.f32 0.0, %v3454
  %v3456 = vpop.f32.mrf.mxu0
  %v3457 = vadd.f32 0.0, %v3456
  %3458 = vmatmul.bf16.gmra.mxu0 %v3039
  %v3459 = vpop.f32.mrf.mxu0
  %v3460 = vadd.f32 0.0, %v3459
  %v3461 = vpop.f32.mrf.mxu0
  %v3462 = vadd.f32 0.0, %v3461
  %3463 = vmatmul.bf16.gmra.mxu0 %v3042
  %v3464 = vpop.f32.mrf.mxu0
  %v3465 = vadd.f32 0.0, %v3464
  %v3466 = vpop.f32.mrf.mxu0
  %v3467 = vadd.f32 0.0, %v3466
  %3468 = vmatmul.bf16.gmra.mxu0 %v3045
  %v3469 = vpop.f32.mrf.mxu0
  %v3470 = vadd.f32 0.0, %v3469
  %v3471 = vpop.f32.mrf.mxu0
  %v3472 = vadd.f32 0.0, %v3471
  %3473 = vmatmul.bf16.gmra.mxu0 %v3048
  %v3474 = vpop.f32.mrf.mxu0
  %v3475 = vadd.f32 0.0, %v3474
  %v3476 = vpop.f32.mrf.mxu0
  %v3477 = vadd.f32 0.0, %v3476
  %3478 = vmatmul.bf16.gmra.mxu0 %v3051
  %v3479 = vpop.f32.mrf.mxu0
  %v3480 = vadd.f32 0.0, %v3479
  %v3481 = vpop.f32.mrf.mxu0
  %v3482 = vadd.f32 0.0, %v3481
  %3483 = vmatmul.bf16.gmra.mxu0 %v3054
  %v3484 = vpop.f32.mrf.mxu0
  %v3485 = vadd.f32 0.0, %v3484
  %v3486 = vpop.f32.mrf.mxu0
  %v3487 = vadd.f32 0.0, %v3486
  %3488 = vmatmul.bf16.gmra.mxu0 %v3057
  %v3489 = vpop.f32.mrf.mxu0
  %v3490 = vadd.f32 0.0, %v3489
  %v3491 = vpop.f32.mrf.mxu0
  %v3492 = vadd.f32 0.0, %v3491
  %3493 = vmatmul.bf16.gmra.mxu0 %v3060
  %v3494 = vpop.f32.mrf.mxu0
  %v3495 = vadd.f32 0.0, %v3494
  %v3496 = vpop.f32.mrf.mxu0
  %v3497 = vadd.f32 0.0, %v3496
  %3498 = vmatmul.bf16.gmra.mxu0 %v3063
  %v3499 = vpop.f32.mrf.mxu0
  %v3500 = vadd.f32 0.0, %v3499
  %v3501 = vpop.f32.mrf.mxu0
  %v3502 = vadd.f32 0.0, %v3501
  %3503 = vmatmul.bf16.gmra.mxu0 %v3066
  %v3504 = vpop.f32.mrf.mxu0
  %v3505 = vadd.f32 0.0, %v3504
  %v3506 = vpop.f32.mrf.mxu0
  %v3507 = vadd.f32 0.0, %v3506
  %3508 = vmatmul.bf16.gmra.mxu0 %v3069
  %v3509 = vpop.f32.mrf.mxu0
  %v3510 = vadd.f32 0.0, %v3509
  %v3511 = vpop.f32.mrf.mxu0
  %v3512 = vadd.f32 0.0, %v3511
  %3513 = vmatmul.bf16.gmra.mxu0 %v3072
  %v3514 = vpop.f32.mrf.mxu0
  %v3515 = vadd.f32 0.0, %v3514
  %v3516 = vpop.f32.mrf.mxu0
  %v3517 = vadd.f32 0.0, %v3516
  %3518 = vmatmul.bf16.gmra.mxu0 %v3075
  %v3519 = vpop.f32.mrf.mxu0
  %v3520 = vadd.f32 0.0, %v3519
  %v3521 = vpop.f32.mrf.mxu0
  %v3522 = vadd.f32 0.0, %v3521
  %3523 = vmatmul.bf16.gmra.mxu0 %v3078
  %v3524 = vpop.f32.mrf.mxu0
  %v3525 = vadd.f32 0.0, %v3524
  %v3526 = vpop.f32.mrf.mxu0
  %v3527 = vadd.f32 0.0, %v3526
  %3528 = vmatmul.bf16.gmra.mxu0 %v3081
  %v3529 = vpop.f32.mrf.mxu0
  %v3530 = vadd.f32 0.0, %v3529
  %v3531 = vpop.f32.mrf.mxu0
  %v3532 = vadd.f32 0.0, %v3531
  %3533 = vmatmul.bf16.gmra.mxu0 %v3084
  %v3534 = vpop.f32.mrf.mxu0
  %v3535 = vadd.f32 0.0, %v3534
  %v3536 = vpop.f32.mrf.mxu0
  %v3537 = vadd.f32 0.0, %v3536
  %3538 = vmatmul.bf16.gmra.mxu0 %v3087
  %v3539 = vpop.f32.mrf.mxu0
  %v3540 = vadd.f32 0.0, %v3539
  %v3541 = vpop.f32.mrf.mxu0
  %v3542 = vadd.f32 0.0, %v3541
  %3543 = vmatmul.bf16.gmra.mxu0 %v3090
  %v3544 = vpop.f32.mrf.mxu0
  %v3545 = vadd.f32 0.0, %v3544
  %v3546 = vpop.f32.mrf.mxu0
  %v3547 = vadd.f32 0.0, %v3546
  %3548 = vmatmul.bf16.gmra.mxu0 %v3093
  %v3549 = vpop.f32.mrf.mxu0
  %v3550 = vadd.f32 0.0, %v3549
  %v3551 = vpop.f32.mrf.mxu0
  %v3552 = vadd.f32 0.0, %v3551
  %3553 = vmatmul.bf16.gmra.mxu0 %v3096
  %v3554 = vpop.f32.mrf.mxu0
  %v3555 = vadd.f32 0.0, %v3554
  %v3556 = vpop.f32.mrf.mxu0
  %v3557 = vadd.f32 0.0, %v3556
  %3558 = vmatmul.bf16.gmra.mxu0 %v3099
  %v3559 = vpop.f32.mrf.mxu0
  %v3560 = vadd.f32 0.0, %v3559
  %v3561 = vpop.f32.mrf.mxu0
  %v3562 = vadd.f32 0.0, %v3561
  %3563 = vmatmul.bf16.gmra.mxu0 %v3102
  %v3564 = vpop.f32.mrf.mxu0
  %v3565 = vadd.f32 0.0, %v3564
  %v3566 = vpop.f32.mrf.mxu0
  %v3567 = vadd.f32 0.0, %v3566
  %3568 = vmatmul.bf16.gmra.mxu0 %v3105
  %v3569 = vpop.f32.mrf.mxu0
  %v3570 = vadd.f32 0.0, %v3569
  %v3571 = vpop.f32.mrf.mxu0
  %v3572 = vadd.f32 0.0, %v3571
  %3573 = vmatmul.bf16.gmra.mxu0 %v3108
  %v3574 = vpop.f32.mrf.mxu0
  %v3575 = vadd.f32 0.0, %v3574
  %v3576 = vpop.f32.mrf.mxu0
  %v3577 = vadd.f32 0.0, %v3576
  %3578 = vmatmul.bf16.gmra.mxu0 %v3111
  %v3579 = vpop.f32.mrf.mxu0
  %v3580 = vadd.f32 0.0, %v3579
  %v3581 = vpop.f32.mrf.mxu0
  %v3582 = vadd.f32 0.0, %v3581
  %3583 = vmatmul.bf16.gmra.mxu0 %v3114
  %v3584 = vpop.f32.mrf.mxu0
  %v3585 = vadd.f32 0.0, %v3584
  %v3586 = vpop.f32.mrf.mxu0
  %v3587 = vadd.f32 0.0, %v3586
  %3588 = vmatmul.bf16.gmra.mxu0 %v3117
  %v3589 = vpop.f32.mrf.mxu0
  %v3590 = vadd.f32 0.0, %v3589
  %v3591 = vpop.f32.mrf.mxu0
  %v3592 = vadd.f32 0.0, %v3591
  %3593 = vmatmul.bf16.gmra.mxu0 %v3120
  %v3594 = vpop.f32.mrf.mxu0
  %v3595 = vadd.f32 0.0, %v3594
  %v3596 = vpop.f32.mrf.mxu0
  %v3597 = vadd.f32 0.0, %v3596
  %3598 = vmatmul.bf16.gmra.mxu0 %v3123
  %v3599 = vpop.f32.mrf.mxu0
  %v3600 = vadd.f32 0.0, %v3599
  %v3601 = vpop.f32.mrf.mxu0
  %v3602 = vadd.f32 0.0, %v3601
  %3603 = vmatmul.bf16.gmra.mxu0 %v3126
  %v3604 = vpop.f32.mrf.mxu0
  %v3605 = vadd.f32 0.0, %v3604
  %v3606 = vpop.f32.mrf.mxu0
  %v3607 = vadd.f32 0.0, %v3606
  %3608 = vmatmul.bf16.gmra.mxu0 %v3129
  %v3609 = vpop.f32.mrf.mxu0
  %v3610 = vadd.f32 0.0, %v3609
  %v3611 = vpop.f32.mrf.mxu0
  %v3612 = vadd.f32 0.0, %v3611
  %3613 = vmatmul.bf16.gmra.mxu0 %v3132
  %v3614 = vpop.f32.mrf.mxu0
  %v3615 = vadd.f32 0.0, %v3614
  %v3616 = vpop.f32.mrf.mxu0
  %v3617 = vadd.f32 0.0, %v3616
  %3618 = vmatmul.bf16.gmra.mxu0 %v3135
  %v3619 = vpop.f32.mrf.mxu0
  %v3620 = vadd.f32 0.0, %v3619
  %v3621 = vpop.f32.mrf.mxu0
  %v3622 = vadd.f32 0.0, %v3621
  %3623 = vmatmul.bf16.gmra.mxu0 %v3138
  %v3624 = vpop.f32.mrf.mxu0
  %v3625 = vadd.f32 0.0, %v3624
  %v3626 = vpop.f32.mrf.mxu0
  %v3627 = vadd.f32 0.0, %v3626
  %3628 = vmatmul.bf16.gmra.mxu0 %v3141
  %v3629 = vpop.f32.mrf.mxu0
  %v3630 = vadd.f32 0.0, %v3629
  %v3631 = vpop.f32.mrf.mxu0
  %v3632 = vadd.f32 0.0, %v3631
  %3633 = vmatmul.bf16.gmra.mxu0 %v3144
  %v3634 = vpop.f32.mrf.mxu0
  %v3635 = vadd.f32 0.0, %v3634
  %v3636 = vpop.f32.mrf.mxu0
  %v3637 = vadd.f32 0.0, %v3636
  %3638 = vmatmul.bf16.gmra.mxu0 %v3147
  %v3639 = vpop.f32.mrf.mxu0
  %v3640 = vadd.f32 0.0, %v3639
  %v3641 = vpop.f32.mrf.mxu0
  %v3642 = vadd.f32 0.0, %v3641
  %3643 = vmatmul.bf16.gmra.mxu0 %v3150
  %v3644 = vpop.f32.mrf.mxu0
  %v3645 = vadd.f32 0.0, %v3644
  %v3646 = vpop.f32.mrf.mxu0
  %v3647 = vadd.f32 0.0, %v3646
  %3648 = vmatmul.bf16.gmra.mxu0 %v3153
  %v3649 = vpop.f32.mrf.mxu0
  %v3650 = vadd.f32 0.0, %v3649
  %v3651 = vpop.f32.mrf.mxu0
  %v3652 = vadd.f32 0.0, %v3651
  %3653 = vmatmul.bf16.gmra.mxu0 %v3156
  %v3654 = vpop.f32.mrf.mxu0
  %v3655 = vadd.f32 0.0, %v3654
  %v3656 = vpop.f32.mrf.mxu0
  %v3657 = vadd.f32 0.0, %v3656
  %3658 = vmatmul.bf16.gmra.mxu0 %v3159
  %v3659 = vpop.f32.mrf.mxu0
  %v3660 = vadd.f32 0.0, %v3659
  %v3661 = vpop.f32.mrf.mxu0
  %v3662 = vadd.f32 0.0, %v3661
  %3663 = vmatmul.bf16.gmra.mxu0 %v3162
  %v3664 = vpop.f32.mrf.mxu0
  %v3665 = vadd.f32 0.0, %v3664
  %v3666 = vpop.f32.mrf.mxu0
  %v3667 = vadd.f32 0.0, %v3666
  %3668 = vmatmul.bf16.gmra.mxu0 %v3165
  %v3669 = vpop.f32.mrf.mxu0
  %v3670 = vadd.f32 0.0, %v3669
  %v3671 = vpop.f32.mrf.mxu0
  %v3672 = vadd.f32 0.0, %v3671
  %3673 = vmatmul.bf16.gmra.mxu0 %v3168
  %v3674 = vpop.f32.mrf.mxu0
  %v3675 = vadd.f32 0.0, %v3674
  %v3676 = vpop.f32.mrf.mxu0
  %v3677 = vadd.f32 0.0, %v3676
  %3678 = vmatmul.bf16.gmra.mxu0 %v3171
  %v3679 = vpop.f32.mrf.mxu0
  %v3680 = vadd.f32 0.0, %v3679
  %v3681 = vpop.f32.mrf.mxu0
  %v3682 = vadd.f32 0.0, %v3681
  %3683 = vmatmul.bf16.gmra.mxu0 %v3174
  %v3684 = vpop.f32.mrf.mxu0
  %v3685 = vadd.f32 0.0, %v3684
  %v3686 = vpop.f32.mrf.mxu0
  %v3687 = vadd.f32 0.0, %v3686
  %3688 = vmatmul.bf16.gmra.mxu0 %v3177
  %v3689 = vpop.f32.mrf.mxu0
  %v3690 = vadd.f32 0.0, %v3689
  %v3691 = vpop.f32.mrf.mxu0
  %v3692 = vadd.f32 0.0, %v3691
  %3693 = vmatmul.bf16.gmra.mxu0 %v3180
  %v3694 = vpop.f32.mrf.mxu0
  %v3695 = vadd.f32 0.0, %v3694
  %v3696 = vpop.f32.mrf.mxu0
  %v3697 = vadd.f32 0.0, %v3696
  %3698 = vmatmul.bf16.gmra.mxu0 %v3183
  %v3699 = vpop.f32.mrf.mxu0
  %v3700 = vadd.f32 0.0, %v3699
  %v3701 = vpop.f32.mrf.mxu0
  %v3702 = vadd.f32 0.0, %v3701
  %3703 = vmatmul.bf16.gmra.mxu0 %v3186
  %v3704 = vpop.f32.mrf.mxu0
  %v3705 = vadd.f32 0.0, %v3704
  %v3706 = vpop.f32.mrf.mxu0
  %v3707 = vadd.f32 0.0, %v3706
  %3708 = vmatmul.bf16.gmra.mxu0 %v3189
  %v3709 = vpop.f32.mrf.mxu0
  %v3710 = vadd.f32 0.0, %v3709
  %v3711 = vpop.f32.mrf.mxu0
  %v3712 = vadd.f32 0.0, %v3711
  %3713 = vmatmul.bf16.gmra.mxu0 %v3192
  %v3714 = vpop.f32.mrf.mxu0
  %v3715 = vadd.f32 0.0, %v3714
  %v3716 = vpop.f32.mrf.mxu0
  %v3717 = vadd.f32 0.0, %v3716
  %3718 = vmatmul.bf16.gmra.mxu0 %v3195
  %v3719 = vpop.f32.mrf.mxu0
  %v3720 = vadd.f32 0.0, %v3719
  %v3721 = vpop.f32.mrf.mxu0
  %v3722 = vadd.f32 0.0, %v3721
  %3723 = vmatmul.bf16.gmra.mxu0 %v3198
  %v3724 = vpop.f32.mrf.mxu0
  %v3725 = vadd.f32 0.0, %v3724
  %v3726 = vpop.f32.mrf.mxu0
  %v3727 = vadd.f32 0.0, %v3726
  %3728 = vmatmul.bf16.gmra.mxu0 %v3201
  %v3729 = vpop.f32.mrf.mxu0
  %v3730 = vadd.f32 0.0, %v3729
  %v3731 = vpop.f32.mrf.mxu0
  %v3732 = vadd.f32 0.0, %v3731
  %3733 = vmatmul.bf16.gmra.mxu0 %v3204
  %v3734 = vpop.f32.mrf.mxu0
  %v3735 = vadd.f32 0.0, %v3734
  %v3736 = vpop.f32.mrf.mxu0
  %v3737 = vadd.f32 0.0, %v3736
  %3738 = vmatmul.bf16.gmra.mxu0 %v3207
  %v3739 = vpop.f32.mrf.mxu0
  %v3740 = vadd.f32 0.0, %v3739
  %v3741 = vpop.f32.mrf.mxu0
  %v3742 = vadd.f32 0.0, %v3741
  %3743 = vmatmul.bf16.gmra.mxu0 %v3210
  %v3744 = vpop.f32.mrf.mxu0
  %v3745 = vadd.f32 0.0, %v3744
  %v3746 = vpop.f32.mrf.mxu0
  %v3747 = vadd.f32 0.0, %v3746
  %3748 = vmatmul.bf16.gmra.mxu0 %v3213
  %v3749 = vpop.f32.mrf.mxu0
  %v3750 = vadd.f32 0.0, %v3749
  %v3751 = vpop.f32.mrf.mxu0
  %v3752 = vadd.f32 0.0, %v3751
  %3753 = vmatmul.bf16.gmra.mxu0 %v3216
  %v3754 = vpop.f32.mrf.mxu0
  %v3755 = vadd.f32 0.0, %v3754
  %v3756 = vpop.f32.mrf.mxu0
  %v3757 = vadd.f32 0.0, %v3756
  %3758 = vmatmul.bf16.gmra.mxu0 %v3219
  %v3759 = vpop.f32.mrf.mxu0
  %v3760 = vadd.f32 0.0, %v3759
  %v3761 = vpop.f32.mrf.mxu0
  %v3762 = vadd.f32 0.0, %v3761
  %3763 = vmatmul.bf16.gmra.mxu0 %v3222
  %v3764 = vpop.f32.mrf.mxu0
  %v3765 = vadd.f32 0.0, %v3764
  %v3766 = vpop.f32.mrf.mxu0
  %v3767 = vadd.f32 0.0, %v3766
  %3768 = vmatmul.bf16.gmra.mxu0 %v3225
  %v3769 = vpop.f32.mrf.mxu0
  %v3770 = vadd.f32 0.0, %v3769
  %v3771 = vpop.f32.mrf.mxu0
  %v3772 = vadd.f32 0.0, %v3771
  %3773 = vmatmul.bf16.gmra.mxu0 %v3228
  %v3774 = vpop.f32.mrf.mxu0
  %v3775 = vadd.f32 0.0, %v3774
  %v3776 = vpop.f32.mrf.mxu0
  %v3777 = vadd.f32 0.0, %v3776
  %3778 = vmatmul.bf16.gmra.mxu0 %v3231
  %v3779 = vpop.f32.mrf.mxu0
  %v3780 = vadd.f32 0.0, %v3779
  %v3781 = vpop.f32.mrf.mxu0
  %v3782 = vadd.f32 0.0, %v3781
  %3783 = vmatmul.bf16.gmra.mxu0 %v3234
  %v3784 = vpop.f32.mrf.mxu0
  %v3785 = vadd.f32 0.0, %v3784
  %v3786 = vpop.f32.mrf.mxu0
  %v3787 = vadd.f32 0.0, %v3786
  %3788 = vmatmul.bf16.gmra.mxu0 %v3237
  %v3789 = vpop.f32.mrf.mxu0
  %v3790 = vadd.f32 0.0, %v3789
  %v3791 = vpop.f32.mrf.mxu0
  %v3792 = vadd.f32 0.0, %v3791
  %3793 = vmatmul.bf16.gmra.mxu0 %v3240
  %v3794 = vpop.f32.mrf.mxu0
  %v3795 = vadd.f32 0.0, %v3794
  %v3796 = vpop.f32.mrf.mxu0
  %v3797 = vadd.f32 0.0, %v3796
  %3798 = vmatmul.bf16.gmra.mxu0 %v3243
  %v3799 = vpop.f32.mrf.mxu0
  %v3800 = vadd.f32 0.0, %v3799
  %v3801 = vpop.f32.mrf.mxu0
  %v3802 = vadd.f32 0.0, %v3801
  %3803 = vmatmul.bf16.gmra.mxu0 %v3246
  %v3804 = vpop.f32.mrf.mxu0
  %v3805 = vadd.f32 0.0, %v3804
  %v3806 = vpop.f32.mrf.mxu0
  %v3807 = vadd.f32 0.0, %v3806
  %3808 = vmatmul.bf16.gmra.mxu0 %v3249
  %v3809 = vpop.f32.mrf.mxu0
  %v3810 = vadd.f32 0.0, %v3809
  %v3811 = vpop.f32.mrf.mxu0
  %v3812 = vadd.f32 0.0, %v3811
  %3813 = vmatmul.bf16.gmra.mxu0 %v3252
  %v3814 = vpop.f32.mrf.mxu0
  %v3815 = vadd.f32 0.0, %v3814
  %v3816 = vpop.f32.mrf.mxu0
  %v3817 = vadd.f32 0.0, %v3816
  %3818 = vmatmul.bf16.gmra.mxu0 %v3255
  %v3819 = vpop.f32.mrf.mxu0
  %v3820 = vadd.f32 0.0, %v3819
  %v3821 = vpop.f32.mrf.mxu0
  %v3822 = vadd.f32 0.0, %v3821
  %3823 = vmatmul.bf16.gmra.mxu0 %v3258
  %v3824 = vpop.f32.mrf.mxu0
  %v3825 = vadd.f32 0.0, %v3824
  %v3826 = vpop.f32.mrf.mxu0
  %v3827 = vadd.f32 0.0, %v3826
  %3828 = vmatmul.bf16.gmra.mxu0 %v3261
  %v3829 = vpop.f32.mrf.mxu0
  %v3830 = vadd.f32 0.0, %v3829
  %v3831 = vpop.f32.mrf.mxu0
  %v3832 = vadd.f32 0.0, %v3831
  %3833 = vmatmul.bf16.gmra.mxu0 %v3264
  %v3834 = vpop.f32.mrf.mxu0
  %v3835 = vadd.f32 0.0, %v3834
  %v3836 = vpop.f32.mrf.mxu0
  %v3837 = vadd.f32 0.0, %v3836
  %3838 = vmatmul.bf16.gmra.mxu0 %v3267
  %v3839 = vpop.f32.mrf.mxu0
  %v3840 = vadd.f32 0.0, %v3839
  %v3841 = vpop.f32.mrf.mxu0
  %v3842 = vadd.f32 0.0, %v3841
  %3843 = vmatmul.bf16.gmra.mxu0 %v3270
  %v3844 = vpop.f32.mrf.mxu0
  %v3845 = vadd.f32 0.0, %v3844
  %v3846 = vpop.f32.mrf.mxu0
  %v3847 = vadd.f32 0.0, %v3846
  %3848 = vmatmul.bf16.gmra.mxu0 %v3273
  %v3849 = vpop.f32.mrf.mxu0
  %v3850 = vadd.f32 0.0, %v3849
  %v3851 = vpop.f32.mrf.mxu0
  %v3852 = vadd.f32 0.0, %v3851
  %3853 = vmatmul.bf16.gmra.mxu0 %v3276
  %v3854 = vpop.f32.mrf.mxu0
  %v3855 = vadd.f32 0.0, %v3854
  %v3856 = vpop.f32.mrf.mxu0
  %v3857 = vadd.f32 0.0, %v3856
  %3858 = vmatmul.bf16.gmra.mxu0 %v3279
  %v3859 = vpop.f32.mrf.mxu0
  %v3860 = vadd.f32 0.0, %v3859
  %v3861 = vpop.f32.mrf.mxu0
  %v3862 = vadd.f32 0.0, %v3861
  %3863 = vmatmul.bf16.gmra.mxu0 %v3282
  %v3864 = vpop.f32.mrf.mxu0
  %v3865 = vadd.f32 0.0, %v3864
  %v3866 = vpop.f32.mrf.mxu0
  %v3867 = vadd.f32 0.0, %v3866
  %3868 = vmatmul.bf16.gmra.mxu0 %v3285
  %v3869 = vpop.f32.mrf.mxu0
  %v3870 = vadd.f32 0.0, %v3869
  %v3871 = vpop.f32.mrf.mxu0
  %v3872 = vadd.f32 0.0, %v3871
  %3873 = vmatmul.bf16.gmra.mxu0 %v3288
  %v3874 = vpop.f32.mrf.mxu0
  %v3875 = vadd.f32 0.0, %v3874
  %v3876 = vpop.f32.mrf.mxu0
  %v3877 = vadd.f32 0.0, %v3876
  %3878 = vmatmul.bf16.gmra.mxu0 %v3291
  %v3879 = vpop.f32.mrf.mxu0
  %v3880 = vadd.f32 0.0, %v3879
  %v3881 = vpop.f32.mrf.mxu0
  %v3882 = vadd.f32 0.0, %v3881
  %3883 = vmatmul.bf16.gmra.mxu0 %v3294
  %v3884 = vpop.f32.mrf.mxu0
  %v3885 = vadd.f32 0.0, %v3884
  %v3886 = vpop.f32.mrf.mxu0
  %v3887 = vadd.f32 0.0, %v3886
  %3888 = vmatmul.bf16.gmra.mxu0 %v3297
  %v3889 = vpop.f32.mrf.mxu0
  %v3890 = vadd.f32 0.0, %v3889
  %v3891 = vpop.f32.mrf.mxu0
  %v3892 = vadd.f32 0.0, %v3891
  %3893 = vmatmul.bf16.gmra.mxu0 %v3300
  %v3894 = vpop.f32.mrf.mxu0
  %v3895 = vadd.f32 0.0, %v3894
  %v3896 = vpop.f32.mrf.mxu0
  %v3897 = vadd.f32 0.0, %v3896
  %3898 = vmatmul.bf16.gmra.mxu0 %v3303
  %v3899 = vpop.f32.mrf.mxu0
  %v3900 = vadd.f32 0.0, %v3899
  %v3901 = vpop.f32.mrf.mxu0
  %v3902 = vadd.f32 0.0, %v3901
  %3903 = vmatmul.bf16.gmra.mxu0 %v3306
  %v3904 = vpop.f32.mrf.mxu0
  %v3905 = vadd.f32 0.0, %v3904
  %v3906 = vpop.f32.mrf.mxu0
  %v3907 = vadd.f32 0.0, %v3906
  %3908 = vmatmul.bf16.gmra.mxu0 %v3309
  %v3909 = vpop.f32.mrf.mxu0
  %v3910 = vadd.f32 0.0, %v3909
  %v3911 = vpop.f32.mrf.mxu0
  %v3912 = vadd.f32 0.0, %v3911
  %3913 = vmatmul.bf16.gmra.mxu0 %v3312
  %v3914 = vpop.f32.mrf.mxu0
  %v3915 = vadd.f32 0.0, %v3914
  %v3916 = vpop.f32.mrf.mxu0
  %v3917 = vadd.f32 0.0, %v3916
  %3918 = vmatmul.bf16.gmra.mxu0 %v3315
  %v3919 = vpop.f32.mrf.mxu0
  %v3920 = vadd.f32 0.0, %v3919
  %v3921 = vpop.f32.mrf.mxu0
  %v3922 = vadd.f32 0.0, %v3921
  %3923 = vmatmul.bf16.gmra.mxu0 %v3318
  %v3924 = vpop.f32.mrf.mxu0
  %v3925 = vadd.f32 0.0, %v3924
  %v3926 = vpop.f32.mrf.mxu0
  %v3927 = vadd.f32 0.0, %v3926
  %3928 = vmatmul.bf16.gmra.mxu0 %v3321
  %v3929 = vpop.f32.mrf.mxu0
  %v3930 = vadd.f32 0.0, %v3929
  %v3931 = vpop.f32.mrf.mxu0
  %v3932 = vadd.f32 0.0, %v3931
  %3933 = vmatmul.bf16.gmra.mxu0 %v3324
  %v3934 = vpop.f32.mrf.mxu0
  %v3935 = vadd.f32 0.0, %v3934
  %v3936 = vpop.f32.mrf.mxu0
  %v3937 = vadd.f32 0.0, %v3936
  %3938 = vmatmul.bf16.gmra.mxu0 %v3327
  %v3939 = vpop.f32.mrf.mxu0
  %v3940 = vadd.f32 0.0, %v3939
  %v3941 = vpop.f32.mrf.mxu0
  %v3942 = vadd.f32 0.0, %v3941
  %3943 = vmatmul.bf16.gmra.mxu0 %v3330
  %v3944 = vpop.f32.mrf.mxu0
  %v3945 = vadd.f32 0.0, %v3944
  %v3946 = vpop.f32.mrf.mxu0
  %v3947 = vadd.f32 0.0, %v3946
  %3948 = vmatmul.bf16.gmra.mxu0 %v3333
  %v3949 = vpop.f32.mrf.mxu0
  %v3950 = vadd.f32 0.0, %v3949
  %v3951 = vpop.f32.mrf.mxu0
  %v3952 = vadd.f32 0.0, %v3951
  %3953 = vmatmul.bf16.gmra.mxu0 %v3336
  %v3954 = vpop.f32.mrf.mxu0
  %v3955 = vadd.f32 0.0, %v3954
  %v3956 = vpop.f32.mrf.mxu0
  %v3957 = vadd.f32 0.0, %v3956
  %3958 = vmatmul.bf16.gmra.mxu0 %v3339
  %v3959 = vpop.f32.mrf.mxu0
  %v3960 = vadd.f32 0.0, %v3959
  %v3961 = vpop.f32.mrf.mxu0
  %v3962 = vadd.f32 0.0, %v3961
  %3963 = vmatmul.bf16.gmra.mxu0 %v3342
  %v3964 = vpop.f32.mrf.mxu0
  %v3965 = vadd.f32 0.0, %v3964
  %v3966 = vpop.f32.mrf.mxu0
  %v3967 = vadd.f32 0.0, %v3966
  %3968 = vmatmul.bf16.gmra.mxu0 %v3345
  %v3969 = vpop.f32.mrf.mxu0
  %v3970 = vadd.f32 0.0, %v3969
  %v3971 = vpop.f32.mrf.mxu0
  %v3972 = vadd.f32 0.0, %v3971
  %3973 = vmatmul.bf16.gmra.mxu0 %v3348
  %v3974 = vpop.f32.mrf.mxu0
  %v3975 = vadd.f32 0.0, %v3974
  %v3976 = vpop.f32.mrf.mxu0
  %v3977 = vadd.f32 0.0, %v3976
  %3978 = vmatmul.bf16.gmra.mxu0 %v3351
  %v3979 = vpop.f32.mrf.mxu0
  %v3980 = vadd.f32 0.0, %v3979
  %v3981 = vpop.f32.mrf.mxu0
  %v3982 = vadd.f32 0.0, %v3981
  %3983 = vmatmul.bf16.gmra.mxu0 %v3354
  %v3984 = vpop.f32.mrf.mxu0
  %v3985 = vadd.f32 0.0, %v3984
  %v3986 = vpop.f32.mrf.mxu0
  %v3987 = vadd.f32 0.0, %v3986
  %3988 = vmatmul.bf16.gmra.mxu0 %v3357
  %v3989 = vpop.f32.mrf.mxu0
  %v3990 = vadd.f32 0.0, %v3989
  %v3991 = vpop.f32.mrf.mxu0
  %v3992 = vadd.f32 0.0, %v3991
  %3993 = vmatmul.bf16.gmra.mxu0 %v3360
  %v3994 = vpop.f32.mrf.mxu0
  %v3995 = vadd.f32 0.0, %v3994
  %v3996 = vpop.f32.mrf.mxu0
  %v3997 = vadd.f32 0.0, %v3996
  %3998 = vmatmul.bf16.gmra.mxu0 %v3363
  %v3999 = vpop.f32.mrf.mxu0
  %v4000 = vadd.f32 0.0, %v3999
  %v4001 = vpop.f32.mrf.mxu0
  %v4002 = vadd.f32 0.0, %v4001
  %4003 = vmatmul.bf16.gmra.mxu0 %v3366
  %v4004 = vpop.f32.mrf.mxu0
  %v4005 = vadd.f32 0.0, %v4004
  %v4006 = vpop.f32.mrf.mxu0
  %v4007 = vadd.f32 0.0, %v4006
  %4008 = vmatmul.bf16.gmra.mxu0 %v3369
  %v4009 = vpop.f32.mrf.mxu0
  %v4010 = vadd.f32 0.0, %v4009
  %v4011 = vpop.f32.mrf.mxu0
  %v4012 = vadd.f32 0.0, %v4011
  %4013 = vmatmul.bf16.gmra.mxu0 %v3372
  %v4014 = vpop.f32.mrf.mxu0
  %v4015 = vadd.f32 0.0, %v4014
  %v4016 = vpop.f32.mrf.mxu0
  %v4017 = vadd.f32 0.0, %v4016
  %4018 = vmatmul.bf16.gmra.mxu0 %v3375
  %v4019 = vpop.f32.mrf.mxu0
  %v4020 = vadd.f32 0.0, %v4019
  %v4021 = vpop.f32.mrf.mxu0
  %v4022 = vadd.f32 0.0, %v4021
  %4023 = vmatmul.bf16.gmra.mxu0 %v3378
  %v4024 = vpop.f32.mrf.mxu0
  %v4025 = vadd.f32 0.0, %v4024
  %v4026 = vpop.f32.mrf.mxu0
  %v4027 = vadd.f32 0.0, %v4026
  %4028 = vmatmul.bf16.gmra.mxu0 %v3381
  %v4029 = vpop.f32.mrf.mxu0
  %v4030 = vadd.f32 0.0, %v4029
  %v4031 = vpop.f32.mrf.mxu0
  %v4032 = vadd.f32 0.0, %v4031
  %4033 = vmatmul.bf16.gmra.mxu0 %v3384
  %v4034 = vpop.f32.mrf.mxu0
  %v4035 = vadd.f32 0.0, %v4034
  %v4036 = vpop.f32.mrf.mxu0
  %v4037 = vadd.f32 0.0, %v4036
  %4038 = vdwg.mxu0
  %vm4039 = vcmask 130048
  %4040 = vst.msk [vmem:[%s4] sm:$0xff] %vm4039, %v3400
  %4041 = vst.msk [vmem:[%s4 + $0x8] sm:$0xff] %vm4039, %v3402
  %4042 = vst.msk [vmem:[%s4 + $0x10] sm:$0xff] %vm4039, %v3405
  %4043 = vst.msk [vmem:[%s4 + $0x18] sm:$0xff] %vm4039, %v3407
  %4044 = vst.msk [vmem:[%s4 + $0x20] sm:$0xff] %vm4039, %v3410
  %4045 = vst.msk [vmem:[%s4 + $0x28] sm:$0xff] %vm4039, %v3412
  %4046 = vst.msk [vmem:[%s4 + $0x30] sm:$0xff] %vm4039, %v3415
  %4047 = vst.msk [vmem:[%s4 + $0x38] sm:$0xff] %vm4039, %v3417
  %4048 = vst.msk [vmem:[%s4 + $0x40] sm:$0xff] %vm4039, %v3420
  %4049 = vst.msk [vmem:[%s4 + $0x48] sm:$0xff] %vm4039, %v3422
  %4050 = vst.msk [vmem:[%s4 + $0x50] sm:$0xff] %vm4039, %v3425
  %4051 = vst.msk [vmem:[%s4 + $0x58] sm:$0xff] %vm4039, %v3427
  %4052 = vst.msk [vmem:[%s4 + $0x60] sm:$0xff] %vm4039, %v3430
  %4053 = vst.msk [vmem:[%s4 + $0x68] sm:$0xff] %vm4039, %v3432
  %4054 = vst.msk [vmem:[%s4 + $0x70] sm:$0xff] %vm4039, %v3435
  %4055 = vst.msk [vmem:[%s4 + $0x78] sm:$0xff] %vm4039, %v3437
  %4056 = vst.msk [vmem:[%s4 + $0x80] sm:$0xff] %vm4039, %v3440
  %4057 = vst.msk [vmem:[%s4 + $0x88] sm:$0xff] %vm4039, %v3442
  %4058 = vst.msk [vmem:[%s4 + $0x90] sm:$0xff] %vm4039, %v3445
  %4059 = vst.msk [vmem:[%s4 + $0x98] sm:$0xff] %vm4039, %v3447
  %4060 = vst.msk [vmem:[%s4 + $0xa0] sm:$0xff] %vm4039, %v3450
  %4061 = vst.msk [vmem:[%s4 + $0xa8] sm:$0xff] %vm4039, %v3452
  %4062 = vst.msk [vmem:[%s4 + $0xb0] sm:$0xff] %vm4039, %v3455
  %4063 = vst.msk [vmem:[%s4 + $0xb8] sm:$0xff] %vm4039, %v3457
  %4064 = vst.msk [vmem:[%s4 + $0xc0] sm:$0xff] %vm4039, %v3460
  %4065 = vst.msk [vmem:[%s4 + $0xc8] sm:$0xff] %vm4039, %v3462
  %4066 = vst.msk [vmem:[%s4 + $0xd0] sm:$0xff] %vm4039, %v3465
  %4067 = vst.msk [vmem:[%s4 + $0xd8] sm:$0xff] %vm4039, %v3467
  %4068 = vst.msk [vmem:[%s4 + $0xe0] sm:$0xff] %vm4039, %v3470
  %4069 = vst.msk [vmem:[%s4 + $0xe8] sm:$0xff] %vm4039, %v3472
  %4070 = vst.msk [vmem:[%s4 + $0xf0] sm:$0xff] %vm4039, %v3475
  %4071 = vst.msk [vmem:[%s4 + $0xf8] sm:$0xff] %vm4039, %v3477
  %4072 = vst.msk [vmem:[%s4 + $0x100] sm:$0xff] %vm4039, %v3480
  %4073 = vst.msk [vmem:[%s4 + $0x108] sm:$0xff] %vm4039, %v3482
  %4074 = vst.msk [vmem:[%s4 + $0x110] sm:$0xff] %vm4039, %v3485
  %4075 = vst.msk [vmem:[%s4 + $0x118] sm:$0xff] %vm4039, %v3487
  %4076 = vst.msk [vmem:[%s4 + $0x120] sm:$0xff] %vm4039, %v3490
  %4077 = vst.msk [vmem:[%s4 + $0x128] sm:$0xff] %vm4039, %v3492
  %4078 = vst.msk [vmem:[%s4 + $0x130] sm:$0xff] %vm4039, %v3495
  %4079 = vst.msk [vmem:[%s4 + $0x138] sm:$0xff] %vm4039, %v3497
  %4080 = vst.msk [vmem:[%s4 + $0x140] sm:$0xff] %vm4039, %v3500
  %4081 = vst.msk [vmem:[%s4 + $0x148] sm:$0xff] %vm4039, %v3502
  %4082 = vst.msk [vmem:[%s4 + $0x150] sm:$0xff] %vm4039, %v3505
  %4083 = vst.msk [vmem:[%s4 + $0x158] sm:$0xff] %vm4039, %v3507
  %4084 = vst.msk [vmem:[%s4 + $0x160] sm:$0xff] %vm4039, %v3510
  %4085 = vst.msk [vmem:[%s4 + $0x168] sm:$0xff] %vm4039, %v3512
  %4086 = vst.msk [vmem:[%s4 + $0x170] sm:$0xff] %vm4039, %v3515
  %4087 = vst.msk [vmem:[%s4 + $0x178] sm:$0xff] %vm4039, %v3517
  %4088 = vst.msk [vmem:[%s4 + $0x180] sm:$0xff] %vm4039, %v3520
  %4089 = vst.msk [vmem:[%s4 + $0x188] sm:$0xff] %vm4039, %v3522
  %4090 = vst.msk [vmem:[%s4 + $0x190] sm:$0xff] %vm4039, %v3525
  %4091 = vst.msk [vmem:[%s4 + $0x198] sm:$0xff] %vm4039, %v3527
  %4092 = vst.msk [vmem:[%s4 + $0x1a0] sm:$0xff] %vm4039, %v3530
  %4093 = vst.msk [vmem:[%s4 + $0x1a8] sm:$0xff] %vm4039, %v3532
  %4094 = vst.msk [vmem:[%s4 + $0x1b0] sm:$0xff] %vm4039, %v3535
  %4095 = vst.msk [vmem:[%s4 + $0x1b8] sm:$0xff] %vm4039, %v3537
  %4096 = vst.msk [vmem:[%s4 + $0x1c0] sm:$0xff] %vm4039, %v3540
  %4097 = vst.msk [vmem:[%s4 + $0x1c8] sm:$0xff] %vm4039, %v3542
  %4098 = vst.msk [vmem:[%s4 + $0x1d0] sm:$0xff] %vm4039, %v3545
  %4099 = vst.msk [vmem:[%s4 + $0x1d8] sm:$0xff] %vm4039, %v3547
  %4100 = vst.msk [vmem:[%s4 + $0x1e0] sm:$0xff] %vm4039, %v3550
  %4101 = vst.msk [vmem:[%s4 + $0x1e8] sm:$0xff] %vm4039, %v3552
  %4102 = vst.msk [vmem:[%s4 + $0x1f0] sm:$0xff] %vm4039, %v3555
  %4103 = vst.msk [vmem:[%s4 + $0x1f8] sm:$0xff] %vm4039, %v3557
  %4104 = vst.msk [vmem:[%s4 + $0x200] sm:$0xff] %vm4039, %v3560
  %4105 = vst.msk [vmem:[%s4 + $0x208] sm:$0xff] %vm4039, %v3562
  %4106 = vst.msk [vmem:[%s4 + $0x210] sm:$0xff] %vm4039, %v3565
  %4107 = vst.msk [vmem:[%s4 + $0x218] sm:$0xff] %vm4039, %v3567
  %4108 = vst.msk [vmem:[%s4 + $0x220] sm:$0xff] %vm4039, %v3570
  %4109 = vst.msk [vmem:[%s4 + $0x228] sm:$0xff] %vm4039, %v3572
  %4110 = vst.msk [vmem:[%s4 + $0x230] sm:$0xff] %vm4039, %v3575
  %4111 = vst.msk [vmem:[%s4 + $0x238] sm:$0xff] %vm4039, %v3577
  %4112 = vst.msk [vmem:[%s4 + $0x240] sm:$0xff] %vm4039, %v3580
  %4113 = vst.msk [vmem:[%s4 + $0x248] sm:$0xff] %vm4039, %v3582
  %4114 = vst.msk [vmem:[%s4 + $0x250] sm:$0xff] %vm4039, %v3585
  %4115 = vst.msk [vmem:[%s4 + $0x258] sm:$0xff] %vm4039, %v3587
  %4116 = vst.msk [vmem:[%s4 + $0x260] sm:$0xff] %vm4039, %v3590
  %4117 = vst.msk [vmem:[%s4 + $0x268] sm:$0xff] %vm4039, %v3592
  %4118 = vst.msk [vmem:[%s4 + $0x270] sm:$0xff] %vm4039, %v3595
  %4119 = vst.msk [vmem:[%s4 + $0x278] sm:$0xff] %vm4039, %v3597
  %4120 = vst.msk [vmem:[%s4 + $0x280] sm:$0xff] %vm4039, %v3600
  %4121 = vst.msk [vmem:[%s4 + $0x288] sm:$0xff] %vm4039, %v3602
  %4122 = vst.msk [vmem:[%s4 + $0x290] sm:$0xff] %vm4039, %v3605
  %4123 = vst.msk [vmem:[%s4 + $0x298] sm:$0xff] %vm4039, %v3607
  %4124 = vst.msk [vmem:[%s4 + $0x2a0] sm:$0xff] %vm4039, %v3610
  %4125 = vst.msk [vmem:[%s4 + $0x2a8] sm:$0xff] %vm4039, %v3612
  %4126 = vst.msk [vmem:[%s4 + $0x2b0] sm:$0xff] %vm4039, %v3615
  %4127 = vst.msk [vmem:[%s4 + $0x2b8] sm:$0xff] %vm4039, %v3617
  %4128 = vst.msk [vmem:[%s4 + $0x2c0] sm:$0xff] %vm4039, %v3620
  %4129 = vst.msk [vmem:[%s4 + $0x2c8] sm:$0xff] %vm4039, %v3622
  %4130 = vst.msk [vmem:[%s4 + $0x2d0] sm:$0xff] %vm4039, %v3625
  %4131 = vst.msk [vmem:[%s4 + $0x2d8] sm:$0xff] %vm4039, %v3627
  %4132 = vst.msk [vmem:[%s4 + $0x2e0] sm:$0xff] %vm4039, %v3630
  %4133 = vst.msk [vmem:[%s4 + $0x2e8] sm:$0xff] %vm4039, %v3632
  %4134 = vst.msk [vmem:[%s4 + $0x2f0] sm:$0xff] %vm4039, %v3635
  %4135 = vst.msk [vmem:[%s4 + $0x2f8] sm:$0xff] %vm4039, %v3637
  %4136 = vst.msk [vmem:[%s4 + $0x300] sm:$0xff] %vm4039, %v3640
  %4137 = vst.msk [vmem:[%s4 + $0x308] sm:$0xff] %vm4039, %v3642
  %4138 = vst.msk [vmem:[%s4 + $0x310] sm:$0xff] %vm4039, %v3645
  %4139 = vst.msk [vmem:[%s4 + $0x318] sm:$0xff] %vm4039, %v3647
  %4140 = vst.msk [vmem:[%s4 + $0x320] sm:$0xff] %vm4039, %v3650
  %4141 = vst.msk [vmem:[%s4 + $0x328] sm:$0xff] %vm4039, %v3652
  %4142 = vst.msk [vmem:[%s4 + $0x330] sm:$0xff] %vm4039, %v3655
  %4143 = vst.msk [vmem:[%s4 + $0x338] sm:$0xff] %vm4039, %v3657
  %4144 = vst.msk [vmem:[%s4 + $0x340] sm:$0xff] %vm4039, %v3660
  %4145 = vst.msk [vmem:[%s4 + $0x348] sm:$0xff] %vm4039, %v3662
  %4146 = vst.msk [vmem:[%s4 + $0x350] sm:$0xff] %vm4039, %v3665
  %4147 = vst.msk [vmem:[%s4 + $0x358] sm:$0xff] %vm4039, %v3667
  %4148 = vst.msk [vmem:[%s4 + $0x360] sm:$0xff] %vm4039, %v3670
  %4149 = vst.msk [vmem:[%s4 + $0x368] sm:$0xff] %vm4039, %v3672
  %4150 = vst.msk [vmem:[%s4 + $0x370] sm:$0xff] %vm4039, %v3675
  %4151 = vst.msk [vmem:[%s4 + $0x378] sm:$0xff] %vm4039, %v3677
  %4152 = vst.msk [vmem:[%s4 + $0x380] sm:$0xff] %vm4039, %v3680
  %4153 = vst.msk [vmem:[%s4 + $0x388] sm:$0xff] %vm4039, %v3682
  %4154 = vst.msk [vmem:[%s4 + $0x390] sm:$0xff] %vm4039, %v3685
  %4155 = vst.msk [vmem:[%s4 + $0x398] sm:$0xff] %vm4039, %v3687
  %4156 = vst.msk [vmem:[%s4 + $0x3a0] sm:$0xff] %vm4039, %v3690
  %4157 = vst.msk [vmem:[%s4 + $0x3a8] sm:$0xff] %vm4039, %v3692
  %4158 = vst.msk [vmem:[%s4 + $0x3b0] sm:$0xff] %vm4039, %v3695
  %4159 = vst.msk [vmem:[%s4 + $0x3b8] sm:$0xff] %vm4039, %v3697
  %4160 = vst.msk [vmem:[%s4 + $0x3c0] sm:$0xff] %vm4039, %v3700
  %4161 = vst.msk [vmem:[%s4 + $0x3c8] sm:$0xff] %vm4039, %v3702
  %4162 = vst.msk [vmem:[%s4 + $0x3d0] sm:$0xff] %vm4039, %v3705
  %4163 = vst.msk [vmem:[%s4 + $0x3d8] sm:$0xff] %vm4039, %v3707
  %4164 = vst.msk [vmem:[%s4 + $0x3e0] sm:$0xff] %vm4039, %v3710
  %4165 = vst.msk [vmem:[%s4 + $0x3e8] sm:$0xff] %vm4039, %v3712
  %4166 = vst.msk [vmem:[%s4 + $0x3f0] sm:$0xff] %vm4039, %v3715
  %4167 = vst.msk [vmem:[%s4 + $0x3f8] sm:$0xff] %vm4039, %v3717
  %4168 = vst.msk [vmem:[%s4 + $0x400] sm:$0xff] %vm4039, %v3720
  %4169 = vst.msk [vmem:[%s4 + $0x408] sm:$0xff] %vm4039, %v3722
  %4170 = vst.msk [vmem:[%s4 + $0x410] sm:$0xff] %vm4039, %v3725
  %4171 = vst.msk [vmem:[%s4 + $0x418] sm:$0xff] %vm4039, %v3727
  %4172 = vst.msk [vmem:[%s4 + $0x420] sm:$0xff] %vm4039, %v3730
  %4173 = vst.msk [vmem:[%s4 + $0x428] sm:$0xff] %vm4039, %v3732
  %4174 = vst.msk [vmem:[%s4 + $0x430] sm:$0xff] %vm4039, %v3735
  %4175 = vst.msk [vmem:[%s4 + $0x438] sm:$0xff] %vm4039, %v3737
  %4176 = vst.msk [vmem:[%s4 + $0x440] sm:$0xff] %vm4039, %v3740
  %4177 = vst.msk [vmem:[%s4 + $0x448] sm:$0xff] %vm4039, %v3742
  %4178 = vst.msk [vmem:[%s4 + $0x450] sm:$0xff] %vm4039, %v3745
  %4179 = vst.msk [vmem:[%s4 + $0x458] sm:$0xff] %vm4039, %v3747
  %4180 = vst.msk [vmem:[%s4 + $0x460] sm:$0xff] %vm4039, %v3750
  %4181 = vst.msk [vmem:[%s4 + $0x468] sm:$0xff] %vm4039, %v3752
  %4182 = vst.msk [vmem:[%s4 + $0x470] sm:$0xff] %vm4039, %v3755
  %4183 = vst.msk [vmem:[%s4 + $0x478] sm:$0xff] %vm4039, %v3757
  %4184 = vst.msk [vmem:[%s4 + $0x480] sm:$0xff] %vm4039, %v3760
  %4185 = vst.msk [vmem:[%s4 + $0x488] sm:$0xff] %vm4039, %v3762
  %4186 = vst.msk [vmem:[%s4 + $0x490] sm:$0xff] %vm4039, %v3765
  %4187 = vst.msk [vmem:[%s4 + $0x498] sm:$0xff] %vm4039, %v3767
  %4188 = vst.msk [vmem:[%s4 + $0x4a0] sm:$0xff] %vm4039, %v3770
  %4189 = vst.msk [vmem:[%s4 + $0x4a8] sm:$0xff] %vm4039, %v3772
  %4190 = vst.msk [vmem:[%s4 + $0x4b0] sm:$0xff] %vm4039, %v3775
  %4191 = vst.msk [vmem:[%s4 + $0x4b8] sm:$0xff] %vm4039, %v3777
  %4192 = vst.msk [vmem:[%s4 + $0x4c0] sm:$0xff] %vm4039, %v3780
  %4193 = vst.msk [vmem:[%s4 + $0x4c8] sm:$0xff] %vm4039, %v3782
  %4194 = vst.msk [vmem:[%s4 + $0x4d0] sm:$0xff] %vm4039, %v3785
  %4195 = vst.msk [vmem:[%s4 + $0x4d8] sm:$0xff] %vm4039, %v3787
  %4196 = vst.msk [vmem:[%s4 + $0x4e0] sm:$0xff] %vm4039, %v3790
  %4197 = vst.msk [vmem:[%s4 + $0x4e8] sm:$0xff] %vm4039, %v3792
  %4198 = vst.msk [vmem:[%s4 + $0x4f0] sm:$0xff] %vm4039, %v3795
  %4199 = vst.msk [vmem:[%s4 + $0x4f8] sm:$0xff] %vm4039, %v3797
  %4200 = vst.msk [vmem:[%s4 + $0x500] sm:$0xff] %vm4039, %v3800
  %4201 = vst.msk [vmem:[%s4 + $0x508] sm:$0xff] %vm4039, %v3802
  %4202 = vst.msk [vmem:[%s4 + $0x510] sm:$0xff] %vm4039, %v3805
  %4203 = vst.msk [vmem:[%s4 + $0x518] sm:$0xff] %vm4039, %v3807
  %4204 = vst.msk [vmem:[%s4 + $0x520] sm:$0xff] %vm4039, %v3810
  %4205 = vst.msk [vmem:[%s4 + $0x528] sm:$0xff] %vm4039, %v3812
  %4206 = vst.msk [vmem:[%s4 + $0x530] sm:$0xff] %vm4039, %v3815
  %4207 = vst.msk [vmem:[%s4 + $0x538] sm:$0xff] %vm4039, %v3817
  %4208 = vst.msk [vmem:[%s4 + $0x540] sm:$0xff] %vm4039, %v3820
  %4209 = vst.msk [vmem:[%s4 + $0x548] sm:$0xff] %vm4039, %v3822
  %4210 = vst.msk [vmem:[%s4 + $0x550] sm:$0xff] %vm4039, %v3825
  %4211 = vst.msk [vmem:[%s4 + $0x558] sm:$0xff] %vm4039, %v3827
  %4212 = vst.msk [vmem:[%s4 + $0x560] sm:$0xff] %vm4039, %v3830
  %4213 = vst.msk [vmem:[%s4 + $0x568] sm:$0xff] %vm4039, %v3832
  %4214 = vst.msk [vmem:[%s4 + $0x570] sm:$0xff] %vm4039, %v3835
  %4215 = vst.msk [vmem:[%s4 + $0x578] sm:$0xff] %vm4039, %v3837
  %4216 = vst.msk [vmem:[%s4 + $0x580] sm:$0xff] %vm4039, %v3840
  %4217 = vst.msk [vmem:[%s4 + $0x588] sm:$0xff] %vm4039, %v3842
  %4218 = vst.msk [vmem:[%s4 + $0x590] sm:$0xff] %vm4039, %v3845
  %4219 = vst.msk [vmem:[%s4 + $0x598] sm:$0xff] %vm4039, %v3847
  %4220 = vst.msk [vmem:[%s4 + $0x5a0] sm:$0xff] %vm4039, %v3850
  %4221 = vst.msk [vmem:[%s4 + $0x5a8] sm:$0xff] %vm4039, %v3852
  %4222 = vst.msk [vmem:[%s4 + $0x5b0] sm:$0xff] %vm4039, %v3855
  %4223 = vst.msk [vmem:[%s4 + $0x5b8] sm:$0xff] %vm4039, %v3857
  %4224 = vst.msk [vmem:[%s4 + $0x5c0] sm:$0xff] %vm4039, %v3860
  %4225 = vst.msk [vmem:[%s4 + $0x5c8] sm:$0xff] %vm4039, %v3862
  %4226 = vst.msk [vmem:[%s4 + $0x5d0] sm:$0xff] %vm4039, %v3865
  %4227 = vst.msk [vmem:[%s4 + $0x5d8] sm:$0xff] %vm4039, %v3867
  %4228 = vst.msk [vmem:[%s4 + $0x5e0] sm:$0xff] %vm4039, %v3870
  %4229 = vst.msk [vmem:[%s4 + $0x5e8] sm:$0xff] %vm4039, %v3872
  %4230 = vst.msk [vmem:[%s4 + $0x5f0] sm:$0xff] %vm4039, %v3875
  %4231 = vst.msk [vmem:[%s4 + $0x5f8] sm:$0xff] %vm4039, %v3877
  %4232 = vst.msk [vmem:[%s4 + $0x600] sm:$0xff] %vm4039, %v3880
  %4233 = vst.msk [vmem:[%s4 + $0x608] sm:$0xff] %vm4039, %v3882
  %4234 = vst.msk [vmem:[%s4 + $0x610] sm:$0xff] %vm4039, %v3885
  %4235 = vst.msk [vmem:[%s4 + $0x618] sm:$0xff] %vm4039, %v3887
  %4236 = vst.msk [vmem:[%s4 + $0x620] sm:$0xff] %vm4039, %v3890
  %4237 = vst.msk [vmem:[%s4 + $0x628] sm:$0xff] %vm4039, %v3892
  %4238 = vst.msk [vmem:[%s4 + $0x630] sm:$0xff] %vm4039, %v3895
  %4239 = vst.msk [vmem:[%s4 + $0x638] sm:$0xff] %vm4039, %v3897
  %4240 = vst.msk [vmem:[%s4 + $0x640] sm:$0xff] %vm4039, %v3900
  %4241 = vst.msk [vmem:[%s4 + $0x648] sm:$0xff] %vm4039, %v3902
  %4242 = vst.msk [vmem:[%s4 + $0x650] sm:$0xff] %vm4039, %v3905
  %4243 = vst.msk [vmem:[%s4 + $0x658] sm:$0xff] %vm4039, %v3907
  %4244 = vst.msk [vmem:[%s4 + $0x660] sm:$0xff] %vm4039, %v3910
  %4245 = vst.msk [vmem:[%s4 + $0x668] sm:$0xff] %vm4039, %v3912
  %4246 = vst.msk [vmem:[%s4 + $0x670] sm:$0xff] %vm4039, %v3915
  %4247 = vst.msk [vmem:[%s4 + $0x678] sm:$0xff] %vm4039, %v3917
  %4248 = vst.msk [vmem:[%s4 + $0x680] sm:$0xff] %vm4039, %v3920
  %4249 = vst.msk [vmem:[%s4 + $0x688] sm:$0xff] %vm4039, %v3922
  %4250 = vst.msk [vmem:[%s4 + $0x690] sm:$0xff] %vm4039, %v3925
  %4251 = vst.msk [vmem:[%s4 + $0x698] sm:$0xff] %vm4039, %v3927
  %4252 = vst.msk [vmem:[%s4 + $0x6a0] sm:$0xff] %vm4039, %v3930
  %4253 = vst.msk [vmem:[%s4 + $0x6a8] sm:$0xff] %vm4039, %v3932
  %4254 = vst.msk [vmem:[%s4 + $0x6b0] sm:$0xff] %vm4039, %v3935
  %4255 = vst.msk [vmem:[%s4 + $0x6b8] sm:$0xff] %vm4039, %v3937
  %4256 = vst.msk [vmem:[%s4 + $0x6c0] sm:$0xff] %vm4039, %v3940
  %4257 = vst.msk [vmem:[%s4 + $0x6c8] sm:$0xff] %vm4039, %v3942
  %4258 = vst.msk [vmem:[%s4 + $0x6d0] sm:$0xff] %vm4039, %v3945
  %4259 = vst.msk [vmem:[%s4 + $0x6d8] sm:$0xff] %vm4039, %v3947
  %4260 = vst.msk [vmem:[%s4 + $0x6e0] sm:$0xff] %vm4039, %v3950
  %4261 = vst.msk [vmem:[%s4 + $0x6e8] sm:$0xff] %vm4039, %v3952
  %4262 = vst.msk [vmem:[%s4 + $0x6f0] sm:$0xff] %vm4039, %v3955
  %4263 = vst.msk [vmem:[%s4 + $0x6f8] sm:$0xff] %vm4039, %v3957
  %4264 = vst.msk [vmem:[%s4 + $0x700] sm:$0xff] %vm4039, %v3960
  %4265 = vst.msk [vmem:[%s4 + $0x708] sm:$0xff] %vm4039, %v3962
  %4266 = vst.msk [vmem:[%s4 + $0x710] sm:$0xff] %vm4039, %v3965
  %4267 = vst.msk [vmem:[%s4 + $0x718] sm:$0xff] %vm4039, %v3967
  %4268 = vst.msk [vmem:[%s4 + $0x720] sm:$0xff] %vm4039, %v3970
  %4269 = vst.msk [vmem:[%s4 + $0x728] sm:$0xff] %vm4039, %v3972
  %4270 = vst.msk [vmem:[%s4 + $0x730] sm:$0xff] %vm4039, %v3975
  %4271 = vst.msk [vmem:[%s4 + $0x738] sm:$0xff] %vm4039, %v3977
  %4272 = vst.msk [vmem:[%s4 + $0x740] sm:$0xff] %vm4039, %v3980
  %4273 = vst.msk [vmem:[%s4 + $0x748] sm:$0xff] %vm4039, %v3982
  %4274 = vst.msk [vmem:[%s4 + $0x750] sm:$0xff] %vm4039, %v3985
  %4275 = vst.msk [vmem:[%s4 + $0x758] sm:$0xff] %vm4039, %v3987
  %4276 = vst.msk [vmem:[%s4 + $0x760] sm:$0xff] %vm4039, %v3990
  %4277 = vst.msk [vmem:[%s4 + $0x768] sm:$0xff] %vm4039, %v3992
  %4278 = vst.msk [vmem:[%s4 + $0x770] sm:$0xff] %vm4039, %v3995
  %4279 = vst.msk [vmem:[%s4 + $0x778] sm:$0xff] %vm4039, %v3997
  %4280 = vst.msk [vmem:[%s4 + $0x780] sm:$0xff] %vm4039, %v4000
  %4281 = vst.msk [vmem:[%s4 + $0x788] sm:$0xff] %vm4039, %v4002
  %4282 = vst.msk [vmem:[%s4 + $0x790] sm:$0xff] %vm4039, %v4005
  %4283 = vst.msk [vmem:[%s4 + $0x798] sm:$0xff] %vm4039, %v4007
  %4284 = vst.msk [vmem:[%s4 + $0x7a0] sm:$0xff] %vm4039, %v4010
  %4285 = vst.msk [vmem:[%s4 + $0x7a8] sm:$0xff] %vm4039, %v4012
  %4286 = vst.msk [vmem:[%s4 + $0x7b0] sm:$0xff] %vm4039, %v4015
  %4287 = vst.msk [vmem:[%s4 + $0x7b8] sm:$0xff] %vm4039, %v4017
  %4288 = vst.msk [vmem:[%s4 + $0x7c0] sm:$0xff] %vm4039, %v4020
  %4289 = vst.msk [vmem:[%s4 + $0x7c8] sm:$0xff] %vm4039, %v4022
  %4290 = vst.msk [vmem:[%s4 + $0x7d0] sm:$0xff] %vm4039, %v4025
  %4291 = vst.msk [vmem:[%s4 + $0x7d8] sm:$0xff] %vm4039, %v4027
  %4292 = vst.msk [vmem:[%s4 + $0x7e0] sm:$0xff] %vm4039, %v4030
  %4293 = vst.msk [vmem:[%s4 + $0x7e8] sm:$0xff] %vm4039, %v4032
  %4294 = vst.msk [vmem:[%s4 + $0x7f0] sm:$0xff] %vm4039, %v4035
  %4295 = vst.msk [vmem:[%s4 + $0x7f8] sm:$0xff] %vm4039, %v4037
  // Predicated region
  $region18: #{generator_forward.10} parent=0 // pred_check
    _
  $region19: #{generator_forward.10} parent=0 // pred_check_branch
    %4297 = sbr.rel (0) target = $region21
  $region20: #{generator_forward.10} parent=0 // pred_region
    _
  $region21: #{generator_forward.10} parent=0 // pred_fallthru
    _
  // Predicated region
  $region22: #{generator_forward.10} parent=0 // pred_check
    _
  $region23: #{generator_forward.10} parent=0 // pred_check_branch
    %4299 = sbr.rel (0) target = $region25
  $region24: #{generator_forward.10} parent=0 // pred_region
    _
  $region25: #{generator_forward.10} parent=0 // pred_fallthru
    _

</llo_original>
